<compile_context>
chip_gen: v7x
topology: tpu7x:2x2x1
jax: 0.10.0
libtpu: 0.0.40
codegen_flags: <defaults>
</compile_context>

<pallas_src>
import functools
import math

import numpy as np
import jax
import jax.numpy as jnp
from jax import lax
from jax.experimental import pallas as pl
from jax.experimental.pallas import tpu as pltpu

# ---------------- normflows defaults for the spline flow ----------------
NUM_BINS = 8
TAIL_BOUND = 3.0
MIN_BIN_WIDTH = 1e-3
MIN_BIN_HEIGHT = 1e-3
MIN_DERIVATIVE = 1e-3
LOG_2PI = math.log(2.0 * math.pi)


# ======================= in-kernel helper functions =======================
def _softplus(v):
    return jnp.maximum(v, 0.0) + jnp.log(1.0 + jnp.exp(-jnp.abs(v)))


def _softmax_lastdim(v):
    m = jnp.max(v, axis=-1, keepdims=True)
    e = jnp.exp(v - m)
    return e * pl.reciprocal(jnp.sum(e, axis=-1, keepdims=True), approx=True)


def _rq_spline_inverse_1d(x, uw, uh, ud, consts):
    """Inverse unconstrained rational-quadratic spline (linear tails) for ONE feature.

    x  : (N, 1)    values to invert
    uw : (N, NB)   unnormalized widths
    uh : (N, NB)   unnormalized heights
    ud : (N, NB-1) unnormalized interior derivatives
    consts : hoisted constant tensors (built once per kernel invocation).
    Returns (outputs (N,1), logabsdet (N,1)) exactly as nflows'
    rational_quadratic_spline(..., inverse=True) does (i.e. already negated).
    """
    m_incl, lane_nb, lane_nm1, last_nb = consts
    nb = NUM_BINS
    left = bottom = -TAIL_BOUND
    right = top = TAIL_BOUND

    inside = jnp.logical_and(x >= left, x <= right)
    xc = jnp.clip(x, left, right)

    widths = MIN_BIN_WIDTH + (1.0 - MIN_BIN_WIDTH * nb) * _softmax_lastdim(uw)
    heights = MIN_BIN_HEIGHT + (1.0 - MIN_BIN_HEIGHT * nb) * _softmax_lastdim(uh)

    # inclusive prefix sums -> right bin edges, via one tiny (NB x NB) matmul each
    cw_r = (right - left) * jnp.dot(widths, m_incl, preferred_element_type=jnp.float32) + left
    ch_r = (top - bottom) * jnp.dot(heights, m_incl, preferred_element_type=jnp.float32) + bottom
    cw_r = jnp.where(last_nb, right, cw_r)
    ch_r = jnp.where(last_nb, top, ch_r)

    # searchsorted over height right-edges (last edge gets +1e-6 as in nflows)
    edges = jnp.where(last_nb, ch_r + 1e-6, ch_r)
    bin_idx = jnp.sum((xc >= edges).astype(jnp.int32), axis=1, keepdims=True)   # (N, 1)

    onehot = bin_idx == lane_nb                # selected bin (right edge)
    onehot_prev = (bin_idx - 1) == lane_nb     # previous bin (gives left edge)
    first = bin_idx == 0

    def gather(a, oh):                         # (N, nb) -> (N, 1)
        return jnp.sum(jnp.where(oh, a, 0.0), axis=1, keepdims=True)

    in_cw_hi = gather(cw_r, onehot)
    in_cw_lo = jnp.where(first, left, gather(cw_r, onehot_prev))
    in_ch_hi = gather(ch_r, onehot)
    in_ch_lo = jnp.where(first, bottom, gather(ch_r, onehot_prev))
    in_binw = in_cw_hi - in_cw_lo
    in_binh = in_ch_hi - in_ch_lo
    in_delta = in_binh * pl.reciprocal(in_binw, approx=True)

    # derivatives: interior = min_deriv + softplus(ud); boundary derivative == 1.0
    d_inner = MIN_DERIVATIVE + _softplus(ud)   # (N, nb-1)

    def gather_inner(idx):                     # (N, 1) int -> (N, 1)
        return jnp.sum(jnp.where(idx == lane_nm1, d_inner, 0.0), axis=1, keepdims=True)

    d_k = jnp.where(first, 1.0, gather_inner(bin_idx - 1))
    d_kp1 = jnp.where(bin_idx == nb - 1, 1.0, gather_inner(bin_idx))

    dy = xc - in_ch_lo
    s = d_k + d_kp1 - 2.0 * in_delta
    a = dy * s + in_binh * (in_delta - d_k)
    b = in_binh * d_k - dy * s
    c = -in_delta * dy
    disc = jnp.maximum(b * b - 4.0 * a * c, 0.0)     # clamp: fp rounding near bin edges
    root = (2.0 * c) * pl.reciprocal(-b - jnp.sqrt(disc), approx=True)

    out_in = root * in_binw + in_cw_lo
    tomt = root * (1.0 - root)
    denom = in_delta + s * tomt
    dnum = (in_delta * in_delta) * (
        d_kp1 * root * root + 2.0 * in_delta * tomt + d_k * (1.0 - root) * (1.0 - root))
    lad_in = 2.0 * jnp.log(denom) - jnp.log(dnum)    # already negated (inverse)

    out = jnp.where(inside, out_in, x)               # identity (linear) tails
    lad = jnp.where(inside, lad_in, 0.0)
    return out, lad


def _made_forward(h_in, k, d, w0_ref, b0_ref, wb_ref, bb_ref, wf_ref, bf_ref, n_blocks):
    """MADE with masked-linear residual blocks; masks pre-applied to (bf16) weights.

    Only the pm-wide output head of feature `d` is computed (autoregressive
    inverse fixes one feature per pass, so the other heads would be wasted work).
    """
    h = jnp.dot(h_in.astype(jnp.bfloat16), w0_ref[k],
                preferred_element_type=jnp.float32) + b0_ref[k]
    for blk in range(n_blocks):
        t = jnp.maximum(h, 0.0).astype(jnp.bfloat16)
        t = jnp.dot(t, wb_ref[k, 2 * blk],
                    preferred_element_type=jnp.float32) + bb_ref[k, 2 * blk]
        t = jnp.maximum(t, 0.0).astype(jnp.bfloat16)
        t = jnp.dot(t, wb_ref[k, 2 * blk + 1],
                    preferred_element_type=jnp.float32) + bb_ref[k, 2 * blk + 1]
        h = h + t
    return jnp.dot(h.astype(jnp.bfloat16), wf_ref[k, d],
                   preferred_element_type=jnp.float32) + bf_ref[k, d]


# =============================== the kernel ===============================
def _nflow_sample_kernel(ctx_ref, eps_ref, loc_t_ref, lsc_t_ref,
                         w0_ref, b0_ref, wb_ref, bb_ref, wf_ref, bf_ref,
                         lu_m_ref, lu_b_ref, lu_ld_ref,
                         z_ref, logq_ref, *,
                         num_flows, n_blocks, latent, hidden):
    D = latent
    nb = NUM_BINS
    pm = 3 * nb - 1
    inv_sqrt_h = 1.0 / math.sqrt(hidden)
    tb = eps_ref.shape[0]

    # ---- hoisted constants (built once per grid step; JAX does not CSE iotas) ----
    row_b = lax.broadcasted_iota(jnp.int32, (nb, nb), 0)
    col_b = lax.broadcasted_iota(jnp.int32, (nb, nb), 1)
    m_incl = (row_b <= col_b).astype(jnp.float32)             # inclusive-scan matrix
    lane_nb = lax.broadcasted_iota(jnp.int32, (tb, nb), 1)
    lane_nm1 = lax.broadcasted_iota(jnp.int32, (tb, nb - 1), 1)
    last_nb = lane_nb == nb - 1
    spline_consts = (m_incl, lane_nb, lane_nm1, last_nb)
    col_d = lax.broadcasted_iota(jnp.int32, (tb, D), 1)
    feat_mask = [col_d == d for d in range(D)]

    ctx = ctx_ref[...]      # (N, C)  one-hot / soft class context
    eps = eps_ref[...]      # (N, D)  standard-normal noise

    # ---- ClassCondDiagGaussian base: z0 = loc(y) + exp(log_scale(y)) * eps ----
    loc = jnp.dot(ctx, loc_t_ref[...], preferred_element_type=jnp.float32)        # (N, D)
    log_scale = jnp.dot(ctx, lsc_t_ref[...], preferred_element_type=jnp.float32)  # (N, D)
    z = loc + jnp.exp(log_scale) * eps
    log_q = (-0.5 * D * LOG_2PI
             - jnp.sum(log_scale + 0.5 * eps * eps, axis=1, keepdims=True))        # (N, 1)

    for k in range(num_flows):
        # ---- AutoregressiveRationalQuadraticSpline.forward (MADE-RQS inverse) ----
        # Feature d's spline params depend only on features < d, so pass d fixes
        # exactly feature d: D MADE passes, D spline inversions total (O(D)).
        spline_in = z
        outputs = jnp.zeros_like(z)
        lad_sum = jnp.zeros_like(log_q)
        for d in range(D):
            p = _made_forward(outputs, k, d, w0_ref, b0_ref, wb_ref, bb_ref,
                              wf_ref, bf_ref, n_blocks)          # (N, pm)
            # normflows divides widths/heights by sqrt(hidden_features)
            uw = p[:, :nb] * inv_sqrt_h
            uh = p[:, nb:2 * nb] * inv_sqrt_h
            ud = p[:, 2 * nb:]
            o_d, lad_d = _rq_spline_inverse_1d(spline_in[:, d:d + 1], uw, uh, ud,
                                               spline_consts)
            outputs = jnp.where(feat_mask[d], o_d, outputs)
            lad_sum = lad_sum + lad_d
        z = outputs
        log_q = log_q - lad_sum

        # ---- LULinearPermute.forward: (z - bias) @ (LU)^-T, inverse-permuted cols ----
        z = jnp.dot((z - lu_b_ref[k]).astype(jnp.bfloat16), lu_m_ref[k],
                    preferred_element_type=jnp.float32)
        log_q = log_q - lu_ld_ref[k]

    z_ref[...] = z
    logq_ref[...] = log_q


# ============================ parameter setup =============================
def init_nflow_params(key, *, action_dim, obs_dim, num_flows, hidden_units,
                      latent_size, hidden_layers):
    assert action_dim == latent_size, "flow latent size must match action_dim"
    D, H, C, K = latent_size, hidden_units, obs_dim, num_flows
    pm = 3 * NUM_BINS - 1
    nlin = 2 * hidden_layers  # 2 masked linears per residual block

    # MADE autoregressive masks (degree based, as in nflows/normflows)
    in_deg = np.arange(1, D + 1)
    hid_deg = np.arange(H) % max(1, D - 1) + min(1, D - 1)
    out_deg = np.repeat(in_deg, pm)
    m_init = (hid_deg[:, None] >= in_deg[None, :]).astype(np.float32)   # (H, D)
    m_blk = (hid_deg[:, None] >= hid_deg[None, :]).astype(np.float32)   # (H, H)
    m_fin = (out_deg[:, None] > hid_deg[None, :]).astype(np.float32)    # (D*pm, H)

    ks = jax.random.split(key, 14)

    def rnd(k, shape, scale):
        return (scale * jax.random.normal(k, shape)).astype(jnp.float32)

    # Synthetic deterministic weights (normflows' init_identity would zero the
    # final layer; we use small randoms so the spline is non-trivial).
    w0 = rnd(ks[0], (K, H, D), 1.0 / math.sqrt(D)) * jnp.asarray(m_init)[None]
    b0 = rnd(ks[1], (K, H), 0.1)
    wb = rnd(ks[2], (K, nlin, H, H), 1.0 / math.sqrt(H)) * jnp.asarray(m_blk)[None, None]
    bb = rnd(ks[3], (K, nlin, H), 0.1)
    wf = rnd(ks[4], (K, D * pm, H), 0.05) * jnp.asarray(m_fin)[None]
    bf = rnd(ks[5], (K, D * pm), 0.05)

    # LULinearPermute: W = L @ U (unit lower, upper with softplus(diag)+eps), bias, perm
    lu_eps = 1e-3
    low = rnd(ks[6], (K, D, D), 0.2)
    up = rnd(ks[7], (K, D, D), 0.2)
    ucd = rnd(ks[8], (K, D), 0.2)
    lu_bias = rnd(ks[9], (K, D), 0.1)
    L = low * jnp.tril(jnp.ones((D, D)), -1) + jnp.eye(D)
    diag = jax.nn.softplus(ucd) + lu_eps
    U = up * jnp.triu(jnp.ones((D, D)), 1) + jnp.eye(D)[None] * diag[:, None, :]
    W = jnp.einsum("kij,kjl->kil", L, U)
    Winv = jnp.linalg.inv(W)
    perm_keys = jax.random.split(ks[10], K)
    perms = jnp.stack([jax.random.permutation(perm_keys[k], D) for k in range(K)])
    inv_perms = jnp.argsort(perms, axis=1)
    # flow-forward applies linear.inverse then permutation.inverse:
    #   z_new = ((z - b) @ Winv^T)[:, inv_perm]  =  (z - b) @ Winv^T[:, inv_perm]
    lu_m = jnp.stack([Winv[k].T[:, inv_perms[k]] for k in range(K)])
    lu_ld = (-jnp.sum(jnp.log(diag), axis=1)).astype(jnp.float32)   # forward log_det

    # ClassCondDiagGaussian params: loc / log_scale of shape (action_dim, num_classes)
    loc = rnd(ks[11], (D, C), 0.5)
    lsc = rnd(ks[12], (D, C), 0.2)

    # Per-feature final-layer heads: (K, D, H, pm) / (K, D, pm) so each MADE pass
    # only computes the pm spline params of the single feature it fixes.
    wf_heads = wf.reshape(K, D, pm, H).transpose(0, 1, 3, 2)
    bf_heads = bf.reshape(K, D, pm)

    return {
        "loc_t": jnp.transpose(loc), "lsc_t": jnp.transpose(lsc),         # (C, D) f32
        "w0_t": jnp.transpose(w0, (0, 2, 1)).astype(jnp.bfloat16),        # (K, D, H)
        "b0": b0,                                                         # (K, H) f32
        "wb_t": jnp.transpose(wb, (0, 1, 3, 2)).astype(jnp.bfloat16),     # (K, nlin, H, H)
        "bb": bb,                                                         # (K, nlin, H) f32
        "wf_t": wf_heads.astype(jnp.bfloat16),                            # (K, D, H, pm)
        "bf": bf_heads,                                                   # (K, D, pm) f32
        "lu_m": lu_m.astype(jnp.bfloat16),                                # (K, D, D)
        "lu_bias": lu_bias, "lu_ld": lu_ld,                               # f32
    }


# ============================ forward wrapper =============================
def _round_up(x, m):
    return (x + m - 1) // m * m


def _const_spec(shape):
    zeros = (0,) * len(shape)
    return pl.BlockSpec(shape, lambda i: zeros)   # block-invariant: fetched once


def nflow_forward(params, contexts, eps, *, num_flows, hidden_layers,
                  latent_size, hidden_units, batch_tile=128):
    n, C = contexts.shape
    D = latent_size
    H = hidden_units
    K = num_flows
    nlin = 2 * hidden_layers
    pm = 3 * NUM_BINS - 1

    # batch grid: tile up to 128 rows (8-row sublane granularity), pad if needed
    tb = min(batch_tile, _round_up(n, 8))
    n_pad = _round_up(n, tb)
    if n_pad != n:
        contexts = jnp.pad(contexts, ((0, n_pad - n), (0, 0)))
        eps = jnp.pad(eps, ((0, n_pad - n), (0, 0)))

    kernel = functools.partial(
        _nflow_sample_kernel, num_flows=num_flows, n_blocks=hidden_layers,
        latent=D, hidden=H)

    z, log_q = pl.pallas_call(
        kernel,
        grid=(n_pad // tb,),
        out_shape=(jax.ShapeDtypeStruct((n_pad, D), jnp.float32),
                   jax.ShapeDtypeStruct((n_pad, 1), jnp.float32)),
        in_specs=[
            pl.BlockSpec((tb, C), lambda i: (i, 0)),        # contexts
            pl.BlockSpec((tb, D), lambda i: (i, 0)),        # eps
            _const_spec((C, D)), _const_spec((C, D)),       # loc_t, lsc_t
            _const_spec((K, D, H)), _const_spec((K, H)),    # w0_t, b0
            _const_spec((K, nlin, H, H)), _const_spec((K, nlin, H)),   # wb_t, bb
            _const_spec((K, D, H, pm)), _const_spec((K, D, pm)),       # wf_t, bf
            _const_spec((K, D, D)), _const_spec((K, D)),    # lu_m, lu_bias
            pl.BlockSpec(memory_space=pltpu.MemorySpace.SMEM),          # lu_ld (K,)
        ],
        out_specs=(pl.BlockSpec((tb, D), lambda i: (i, 0)),
                   pl.BlockSpec((tb, 1), lambda i: (i, 0))),
        compiler_params=pltpu.CompilerParams(
            dimension_semantics=("parallel",),              # v7x: shard batch over 2 TCs
            vmem_limit_bytes=32 * 1024 * 1024),
    )(contexts, eps,
      params["loc_t"], params["lsc_t"],
      params["w0_t"], params["b0"], params["wb_t"], params["bb"],
      params["wf_t"], params["bf"],
      params["lu_m"], params["lu_bias"], params["lu_ld"])
    return z[:n], log_q[:n, 0]


# ================================== main ==================================
if __name__ == "__main__":
    ACTION_DIM = 2       # == latent_size so the flow chain is shape-consistent
    OBS_DIM = 6          # num_classes of the class-conditional base Gaussian
    NUM_FLOWS = 2
    HIDDEN_UNITS = 128   # module default
    LATENT_SIZE = 2      # module default
    HIDDEN_LAYERS = 2    # module default (residual blocks in MADE)
    BATCH = 8            # len(contexts) -> number of samples

    root = jax.random.PRNGKey(0)
    k_par, k_cls, k_eps = jax.random.split(root, 3)

    params = init_nflow_params(
        k_par, action_dim=ACTION_DIM, obs_dim=OBS_DIM, num_flows=NUM_FLOWS,
        hidden_units=HIDDEN_UNITS, latent_size=LATENT_SIZE,
        hidden_layers=HIDDEN_LAYERS)

    # contexts: one-hot class rows (ClassCondDiagGaussian conditioning vector)
    classes = jax.random.randint(k_cls, (BATCH,), 0, OBS_DIM)
    contexts = jax.nn.one_hot(classes, OBS_DIM, dtype=jnp.float32)   # (BATCH, OBS_DIM)
    # base-distribution noise (torch.randn equivalent) drawn in JAX glue
    # TODO(synk): in-kernel RNG (pltpu.prng_*) could replace this host-side draw.
    eps = jax.random.normal(k_eps, (BATCH, ACTION_DIM), dtype=jnp.float32)

    z, log_q = nflow_forward(
        params, contexts, eps, num_flows=NUM_FLOWS, hidden_layers=HIDDEN_LAYERS,
        latent_size=LATENT_SIZE, hidden_units=HIDDEN_UNITS)
    jax.block_until_ready((z, log_q))

    assert z.shape == (BATCH, ACTION_DIM) and log_q.shape == (BATCH,)
    assert bool(jnp.isfinite(z).all()) and bool(jnp.isfinite(log_q).all())
    print("KERNEL_OK")
</pallas_src>

<mosaic_0001>
module attributes {stable_mosaic.version = 11 : i64} {
  func.func @_nflow_sample_kernel(%arg0: i32, %arg1: memref<8x6xf32, #tpu.memory_space<vmem>>, %arg2: memref<8x2xf32, #tpu.memory_space<vmem>>, %arg3: memref<6x2xf32, #tpu.memory_space<vmem>>, %arg4: memref<6x2xf32, #tpu.memory_space<vmem>>, %arg5: memref<2x2x128xbf16, #tpu.memory_space<vmem>>, %arg6: memref<2x128xf32, #tpu.memory_space<vmem>>, %arg7: memref<2x4x128x128xbf16, #tpu.memory_space<vmem>>, %arg8: memref<2x4x128xf32, #tpu.memory_space<vmem>>, %arg9: memref<2x2x128x23xbf16, #tpu.memory_space<vmem>>, %arg10: memref<2x2x23xf32, #tpu.memory_space<vmem>>, %arg11: memref<2x2x2xbf16, #tpu.memory_space<vmem>>, %arg12: memref<2x2xf32, #tpu.memory_space<vmem>>, %arg13: memref<2xf32, #tpu.memory_space<smem>>, %arg14: memref<8x2xf32, #tpu.memory_space<vmem>>, %arg15: memref<8x1xf32, #tpu.memory_space<vmem>>) attributes {dimension_semantics = [#tpu.dimension_semantics<parallel>], iteration_bounds = array<i64: 1>, scalar_prefetch = 0 : i64, scratch_operands = 0 : i64, tpu.core_type = #tpu.core_type<tc>, window_params = [{transform_indices = @transform_0, window_bounds = array<i64: 8, 6>}, {transform_indices = @transform_1, window_bounds = array<i64: 8, 2>}, {pipeline_mode = #tpu.pipeline_mode<synchronous>, transform_indices = @transform_2, window_bounds = array<i64: 6, 2>}, {pipeline_mode = #tpu.pipeline_mode<synchronous>, transform_indices = @transform_3, window_bounds = array<i64: 6, 2>}, {pipeline_mode = #tpu.pipeline_mode<synchronous>, transform_indices = @transform_4, window_bounds = array<i64: 2, 2, 128>}, {pipeline_mode = #tpu.pipeline_mode<synchronous>, transform_indices = @transform_5, window_bounds = array<i64: 2, 128>}, {pipeline_mode = #tpu.pipeline_mode<synchronous>, transform_indices = @transform_6, window_bounds = array<i64: 2, 4, 128, 128>}, {pipeline_mode = #tpu.pipeline_mode<synchronous>, transform_indices = @transform_7, window_bounds = array<i64: 2, 4, 128>}, {pipeline_mode = #tpu.pipeline_mode<synchronous>, transform_indices = @transform_8, window_bounds = array<i64: 2, 2, 128, 23>}, {pipeline_mode = #tpu.pipeline_mode<synchronous>, transform_indices = @transform_9, window_bounds = array<i64: 2, 2, 23>}, {pipeline_mode = #tpu.pipeline_mode<synchronous>, transform_indices = @transform_10, window_bounds = array<i64: 2, 2, 2>}, {pipeline_mode = #tpu.pipeline_mode<synchronous>, transform_indices = @transform_11, window_bounds = array<i64: 2, 2>}, {transform_indices = @transform_12, window_bounds = array<i64: 2>}, {transform_indices = @transform_13, window_bounds = array<i64: 8, 2>}, {transform_indices = @transform_14, window_bounds = array<i64: 8, 1>}]} {
    %0 = tpu.iota {dimensions = array<i32: 0>} : vector<8x8xi32>
    %1 = tpu.iota {dimensions = array<i32: 1>} : vector<8x8xi32>
    %2 = arith.cmpi sle, %0, %1 : vector<8x8xi32>
    %3 = arith.extui %2 : vector<8x8xi1> to vector<8x8xi32>
    %4 = arith.sitofp %3 : vector<8x8xi32> to vector<8x8xf32>
    %5 = tpu.iota {dimensions = array<i32: 1>} : vector<8x8xi32>
    %6 = tpu.iota {dimensions = array<i32: 1>} : vector<8x7xi32>
    %c7_i32 = arith.constant 7 : i32
    %7 = vector.broadcast %c7_i32 : i32 to vector<8x8xi32>
    %8 = arith.cmpi eq, %5, %7 : vector<8x8xi32>
    %9 = tpu.iota {dimensions = array<i32: 1>} : vector<8x2xi32>
    %c0_i32 = arith.constant 0 : i32
    %10 = vector.broadcast %c0_i32 : i32 to vector<8x2xi32>
    %11 = arith.cmpi eq, %9, %10 : vector<8x2xi32>
    %c1_i32 = arith.constant 1 : i32
    %12 = vector.broadcast %c1_i32 : i32 to vector<8x2xi32>
    %13 = arith.cmpi eq, %9, %12 : vector<8x2xi32>
    %c0 = arith.constant 0 : index
    %c0_0 = arith.constant 0 : index
    %14 = vector.load %arg1[%c0, %c0_0] : memref<8x6xf32, #tpu.memory_space<vmem>>, vector<8x6xf32>
    %c0_1 = arith.constant 0 : index
    %c0_2 = arith.constant 0 : index
    %15 = vector.load %arg2[%c0_1, %c0_2] : memref<8x2xf32, #tpu.memory_space<vmem>>, vector<8x2xf32>
    %c0_3 = arith.constant 0 : index
    %c0_4 = arith.constant 0 : index
    %16 = vector.load %arg3[%c0_3, %c0_4] : memref<6x2xf32, #tpu.memory_space<vmem>>, vector<6x2xf32>
    %cst = arith.constant dense<0.000000e+00> : vector<8x2xf32>
    %17 = tpu.matmul %14, %16, %cst {dimension_numbers = #tpu.dot_dimension_numbers<[1], [0], [0], [1], [0, 0, 1, 1], [], []>} : vector<8x6xf32>, vector<6x2xf32>, vector<8x2xf32> -> vector<8x2xf32>
    %c0_5 = arith.constant 0 : index
    %c0_6 = arith.constant 0 : index
    %18 = vector.load %arg4[%c0_5, %c0_6] : memref<6x2xf32, #tpu.memory_space<vmem>>, vector<6x2xf32>
    %cst_7 = arith.constant dense<0.000000e+00> : vector<8x2xf32>
    %19 = tpu.matmul %14, %18, %cst_7 {dimension_numbers = #tpu.dot_dimension_numbers<[1], [0], [0], [1], [0, 0, 1, 1], [], []>} : vector<8x6xf32>, vector<6x2xf32>, vector<8x2xf32> -> vector<8x2xf32>
    %20 = math.exp %19 : vector<8x2xf32>
    %21 = arith.mulf %20, %15 : vector<8x2xf32>
    %22 = arith.addf %17, %21 : vector<8x2xf32>
    %cst_8 = arith.constant 5.000000e-01 : f32
    %23 = vector.broadcast %cst_8 : f32 to vector<8x2xf32>
    %24 = arith.mulf %23, %15 : vector<8x2xf32>
    %25 = arith.mulf %24, %15 : vector<8x2xf32>
    %26 = arith.addf %19, %25 : vector<8x2xf32>
    %cst_9 = arith.constant dense<0.000000e+00> : vector<8xf32>
    %27 = vector.multi_reduction <add>, %26, %cst_9 [1] : vector<8x2xf32> to vector<8xf32>
    %28 = vector.shape_cast %27 : vector<8xf32> to vector<8x1xf32>
    %cst_10 = arith.constant -1.83787704 : f32
    %29 = vector.broadcast %cst_10 : f32 to vector<8x1xf32>
    %30 = arith.subf %29, %28 : vector<8x1xf32>
    %cst_11 = arith.constant 0.000000e+00 : f32
    %31 = vector.broadcast %cst_11 : f32 to vector<8x2xf32>
    %cst_12 = arith.constant 0.000000e+00 : f32
    %32 = vector.broadcast %cst_12 : f32 to vector<8x1xf32>
    %33 = arith.truncf %31 : vector<8x2xf32> to vector<8x2xbf16>
    %c0_13 = arith.constant 0 : index
    %c0_14 = arith.constant 0 : index
    %c0_15 = arith.constant 0 : index
    %34 = vector.load %arg5[%c0_13, %c0_14, %c0_15] : memref<2x2x128xbf16, #tpu.memory_space<vmem>>, vector<1x2x128xbf16>
    %35 = vector.shape_cast %34 : vector<1x2x128xbf16> to vector<2x128xbf16>
    %cst_16 = arith.constant dense<0.000000e+00> : vector<8x128xf32>
    %36 = tpu.matmul %33, %35, %cst_16 {dimension_numbers = #tpu.dot_dimension_numbers<[1], [0], [0], [1], [0, 0, 1, 1], [], []>} : vector<8x2xbf16>, vector<2x128xbf16>, vector<8x128xf32> -> vector<8x128xf32>
    %c0_17 = arith.constant 0 : index
    %c0_18 = arith.constant 0 : index
    %37 = vector.load %arg6[%c0_17, %c0_18] : memref<2x128xf32, #tpu.memory_space<vmem>>, vector<1x128xf32>
    %38 = vector.shape_cast %37 : vector<1x128xf32> to vector<128xf32>
    %39 = vector.shape_cast %38 : vector<128xf32> to vector<1x128xf32>
    %40 = vector.broadcast %39 : vector<1x128xf32> to vector<8x128xf32>
    %41 = arith.addf %36, %40 : vector<8x128xf32>
    %cst_19 = arith.constant 0.000000e+00 : f32
    %42 = vector.broadcast %cst_19 : f32 to vector<8x128xf32>
    %43 = arith.maximumf %41, %42 : vector<8x128xf32>
    %44 = arith.truncf %43 : vector<8x128xf32> to vector<8x128xbf16>
    %c0_20 = arith.constant 0 : index
    %c0_21 = arith.constant 0 : index
    %c0_22 = arith.constant 0 : index
    %c0_23 = arith.constant 0 : index
    %45 = vector.load %arg7[%c0_20, %c0_21, %c0_22, %c0_23] : memref<2x4x128x128xbf16, #tpu.memory_space<vmem>>, vector<1x1x128x128xbf16>
    %46 = vector.shape_cast %45 : vector<1x1x128x128xbf16> to vector<128x128xbf16>
    %cst_24 = arith.constant dense<0.000000e+00> : vector<8x128xf32>
    %47 = tpu.matmul %44, %46, %cst_24 {dimension_numbers = #tpu.dot_dimension_numbers<[1], [0], [0], [1], [0, 0, 1, 1], [], []>} : vector<8x128xbf16>, vector<128x128xbf16>, vector<8x128xf32> -> vector<8x128xf32>
    %c0_25 = arith.constant 0 : index
    %c0_26 = arith.constant 0 : index
    %c0_27 = arith.constant 0 : index
    %48 = vector.load %arg8[%c0_25, %c0_26, %c0_27] : memref<2x4x128xf32, #tpu.memory_space<vmem>>, vector<1x1x128xf32>
    %49 = vector.shape_cast %48 : vector<1x1x128xf32> to vector<128xf32>
    %50 = vector.shape_cast %49 : vector<128xf32> to vector<1x128xf32>
    %51 = vector.broadcast %50 : vector<1x128xf32> to vector<8x128xf32>
    %52 = arith.addf %47, %51 : vector<8x128xf32>
    %cst_28 = arith.constant 0.000000e+00 : f32
    %53 = vector.broadcast %cst_28 : f32 to vector<8x128xf32>
    %54 = arith.maximumf %52, %53 : vector<8x128xf32>
    %55 = arith.truncf %54 : vector<8x128xf32> to vector<8x128xbf16>
    %c0_29 = arith.constant 0 : index
    %c1 = arith.constant 1 : index
    %c0_30 = arith.constant 0 : index
    %c0_31 = arith.constant 0 : index
    %56 = vector.load %arg7[%c0_29, %c1, %c0_30, %c0_31] : memref<2x4x128x128xbf16, #tpu.memory_space<vmem>>, vector<1x1x128x128xbf16>
    %57 = vector.shape_cast %56 : vector<1x1x128x128xbf16> to vector<128x128xbf16>
    %cst_32 = arith.constant dense<0.000000e+00> : vector<8x128xf32>
    %58 = tpu.matmul %55, %57, %cst_32 {dimension_numbers = #tpu.dot_dimension_numbers<[1], [0], [0], [1], [0, 0, 1, 1], [], []>} : vector<8x128xbf16>, vector<128x128xbf16>, vector<8x128xf32> -> vector<8x128xf32>
    %c0_33 = arith.constant 0 : index
    %c1_34 = arith.constant 1 : index
    %c0_35 = arith.constant 0 : index
    %59 = vector.load %arg8[%c0_33, %c1_34, %c0_35] : memref<2x4x128xf32, #tpu.memory_space<vmem>>, vector<1x1x128xf32>
    %60 = vector.shape_cast %59 : vector<1x1x128xf32> to vector<128xf32>
    %61 = vector.shape_cast %60 : vector<128xf32> to vector<1x128xf32>
    %62 = vector.broadcast %61 : vector<1x128xf32> to vector<8x128xf32>
    %63 = arith.addf %58, %62 : vector<8x128xf32>
    %64 = arith.addf %41, %63 : vector<8x128xf32>
    %cst_36 = arith.constant 0.000000e+00 : f32
    %65 = vector.broadcast %cst_36 : f32 to vector<8x128xf32>
    %66 = arith.maximumf %64, %65 : vector<8x128xf32>
    %67 = arith.truncf %66 : vector<8x128xf32> to vector<8x128xbf16>
    %c0_37 = arith.constant 0 : index
    %c2 = arith.constant 2 : index
    %c0_38 = arith.constant 0 : index
    %c0_39 = arith.constant 0 : index
    %68 = vector.load %arg7[%c0_37, %c2, %c0_38, %c0_39] : memref<2x4x128x128xbf16, #tpu.memory_space<vmem>>, vector<1x1x128x128xbf16>
    %69 = vector.shape_cast %68 : vector<1x1x128x128xbf16> to vector<128x128xbf16>
    %cst_40 = arith.constant dense<0.000000e+00> : vector<8x128xf32>
    %70 = tpu.matmul %67, %69, %cst_40 {dimension_numbers = #tpu.dot_dimension_numbers<[1], [0], [0], [1], [0, 0, 1, 1], [], []>} : vector<8x128xbf16>, vector<128x128xbf16>, vector<8x128xf32> -> vector<8x128xf32>
    %c0_41 = arith.constant 0 : index
    %c2_42 = arith.constant 2 : index
    %c0_43 = arith.constant 0 : index
    %71 = vector.load %arg8[%c0_41, %c2_42, %c0_43] : memref<2x4x128xf32, #tpu.memory_space<vmem>>, vector<1x1x128xf32>
    %72 = vector.shape_cast %71 : vector<1x1x128xf32> to vector<128xf32>
    %73 = vector.shape_cast %72 : vector<128xf32> to vector<1x128xf32>
    %74 = vector.broadcast %73 : vector<1x128xf32> to vector<8x128xf32>
    %75 = arith.addf %70, %74 : vector<8x128xf32>
    %cst_44 = arith.constant 0.000000e+00 : f32
    %76 = vector.broadcast %cst_44 : f32 to vector<8x128xf32>
    %77 = arith.maximumf %75, %76 : vector<8x128xf32>
    %78 = arith.truncf %77 : vector<8x128xf32> to vector<8x128xbf16>
    %c0_45 = arith.constant 0 : index
    %c3 = arith.constant 3 : index
    %c0_46 = arith.constant 0 : index
    %c0_47 = arith.constant 0 : index
    %79 = vector.load %arg7[%c0_45, %c3, %c0_46, %c0_47] : memref<2x4x128x128xbf16, #tpu.memory_space<vmem>>, vector<1x1x128x128xbf16>
    %80 = vector.shape_cast %79 : vector<1x1x128x128xbf16> to vector<128x128xbf16>
    %cst_48 = arith.constant dense<0.000000e+00> : vector<8x128xf32>
    %81 = tpu.matmul %78, %80, %cst_48 {dimension_numbers = #tpu.dot_dimension_numbers<[1], [0], [0], [1], [0, 0, 1, 1], [], []>} : vector<8x128xbf16>, vector<128x128xbf16>, vector<8x128xf32> -> vector<8x128xf32>
    %c0_49 = arith.constant 0 : index
    %c3_50 = arith.constant 3 : index
    %c0_51 = arith.constant 0 : index
    %82 = vector.load %arg8[%c0_49, %c3_50, %c0_51] : memref<2x4x128xf32, #tpu.memory_space<vmem>>, vector<1x1x128xf32>
    %83 = vector.shape_cast %82 : vector<1x1x128xf32> to vector<128xf32>
    %84 = vector.shape_cast %83 : vector<128xf32> to vector<1x128xf32>
    %85 = vector.broadcast %84 : vector<1x128xf32> to vector<8x128xf32>
    %86 = arith.addf %81, %85 : vector<8x128xf32>
    %87 = arith.addf %64, %86 : vector<8x128xf32>
    %88 = arith.truncf %87 : vector<8x128xf32> to vector<8x128xbf16>
    %c0_52 = arith.constant 0 : index
    %c0_53 = arith.constant 0 : index
    %c0_54 = arith.constant 0 : index
    %c0_55 = arith.constant 0 : index
    %89 = vector.load %arg9[%c0_52, %c0_53, %c0_54, %c0_55] : memref<2x2x128x23xbf16, #tpu.memory_space<vmem>>, vector<1x1x128x23xbf16>
    %90 = vector.shape_cast %89 : vector<1x1x128x23xbf16> to vector<128x23xbf16>
    %cst_56 = arith.constant dense<0.000000e+00> : vector<8x23xf32>
    %91 = tpu.matmul %88, %90, %cst_56 {dimension_numbers = #tpu.dot_dimension_numbers<[1], [0], [0], [1], [0, 0, 1, 1], [], []>} : vector<8x128xbf16>, vector<128x23xbf16>, vector<8x23xf32> -> vector<8x23xf32>
    %c0_57 = arith.constant 0 : index
    %c0_58 = arith.constant 0 : index
    %c0_59 = arith.constant 0 : index
    %92 = vector.load %arg10[%c0_57, %c0_58, %c0_59] : memref<2x2x23xf32, #tpu.memory_space<vmem>>, vector<1x1x23xf32>
    %93 = vector.shape_cast %92 : vector<1x1x23xf32> to vector<23xf32>
    %94 = vector.shape_cast %93 : vector<23xf32> to vector<1x23xf32>
    %95 = vector.broadcast %94 : vector<1x23xf32> to vector<8x23xf32>
    %96 = arith.addf %91, %95 : vector<8x23xf32>
    %97 = vector.extract_strided_slice %96 {offsets = [0, 0], sizes = [8, 8], strides = [1, 1]} : vector<8x23xf32> to vector<8x8xf32>
    %cst_60 = arith.constant 0.0883883461 : f32
    %98 = vector.broadcast %cst_60 : f32 to vector<8x8xf32>
    %99 = arith.mulf %97, %98 : vector<8x8xf32>
    %100 = vector.extract_strided_slice %96 {offsets = [0, 8], sizes = [8, 8], strides = [1, 1]} : vector<8x23xf32> to vector<8x8xf32>
    %cst_61 = arith.constant 0.0883883461 : f32
    %101 = vector.broadcast %cst_61 : f32 to vector<8x8xf32>
    %102 = arith.mulf %100, %101 : vector<8x8xf32>
    %103 = vector.extract_strided_slice %96 {offsets = [0, 16], sizes = [8, 7], strides = [1, 1]} : vector<8x23xf32> to vector<8x7xf32>
    %104 = vector.extract_strided_slice %22 {offsets = [0, 0], sizes = [8, 1], strides = [1, 1]} : vector<8x2xf32> to vector<8x1xf32>
    %cst_62 = arith.constant -3.000000e+00 : f32
    %105 = vector.broadcast %cst_62 : f32 to vector<8x1xf32>
    %106 = arith.cmpf oge, %104, %105 : vector<8x1xf32>
    %cst_63 = arith.constant 3.000000e+00 : f32
    %107 = vector.broadcast %cst_63 : f32 to vector<8x1xf32>
    %108 = arith.cmpf ole, %104, %107 : vector<8x1xf32>
    %109 = arith.andi %106, %108 : vector<8x1xi1>
    %cst_64 = arith.constant -3.000000e+00 : f32
    %cst_65 = arith.constant 3.000000e+00 : f32
    %110 = vector.broadcast %cst_64 : f32 to vector<8x1xf32>
    %111 = arith.maximumf %110, %104 : vector<8x1xf32>
    %112 = vector.broadcast %cst_65 : f32 to vector<8x1xf32>
    %113 = arith.minimumf %112, %111 : vector<8x1xf32>
    %cst_66 = arith.constant dense<0xFF800000> : vector<8xf32>
    %114 = vector.multi_reduction <maximumf>, %99, %cst_66 [1] : vector<8x8xf32> to vector<8xf32>
    %115 = vector.shape_cast %114 : vector<8xf32> to vector<8x1xf32>
    %116 = vector.broadcast %115 : vector<8x1xf32> to vector<8x8xf32>
    %117 = arith.subf %99, %116 : vector<8x8xf32>
    %118 = math.exp %117 : vector<8x8xf32>
    %cst_67 = arith.constant dense<0.000000e+00> : vector<8xf32>
    %119 = vector.multi_reduction <add>, %118, %cst_67 [1] : vector<8x8xf32> to vector<8xf32>
    %120 = vector.shape_cast %119 : vector<8xf32> to vector<8x1xf32>
    %121 = tpu.reciprocal %120 {approx = true} : vector<8x1xf32> -> vector<8x1xf32>
    %122 = vector.broadcast %121 : vector<8x1xf32> to vector<8x8xf32>
    %123 = arith.mulf %118, %122 : vector<8x8xf32>
    %cst_68 = arith.constant 0.991999983 : f32
    %124 = vector.broadcast %cst_68 : f32 to vector<8x8xf32>
    %125 = arith.mulf %124, %123 : vector<8x8xf32>
    %cst_69 = arith.constant 1.000000e-03 : f32
    %126 = vector.broadcast %cst_69 : f32 to vector<8x8xf32>
    %127 = arith.addf %126, %125 : vector<8x8xf32>
    %cst_70 = arith.constant dense<0xFF800000> : vector<8xf32>
    %128 = vector.multi_reduction <maximumf>, %102, %cst_70 [1] : vector<8x8xf32> to vector<8xf32>
    %129 = vector.shape_cast %128 : vector<8xf32> to vector<8x1xf32>
    %130 = vector.broadcast %129 : vector<8x1xf32> to vector<8x8xf32>
    %131 = arith.subf %102, %130 : vector<8x8xf32>
    %132 = math.exp %131 : vector<8x8xf32>
    %cst_71 = arith.constant dense<0.000000e+00> : vector<8xf32>
    %133 = vector.multi_reduction <add>, %132, %cst_71 [1] : vector<8x8xf32> to vector<8xf32>
    %134 = vector.shape_cast %133 : vector<8xf32> to vector<8x1xf32>
    %135 = tpu.reciprocal %134 {approx = true} : vector<8x1xf32> -> vector<8x1xf32>
    %136 = vector.broadcast %135 : vector<8x1xf32> to vector<8x8xf32>
    %137 = arith.mulf %132, %136 : vector<8x8xf32>
    %cst_72 = arith.constant 0.991999983 : f32
    %138 = vector.broadcast %cst_72 : f32 to vector<8x8xf32>
    %139 = arith.mulf %138, %137 : vector<8x8xf32>
    %cst_73 = arith.constant 1.000000e-03 : f32
    %140 = vector.broadcast %cst_73 : f32 to vector<8x8xf32>
    %141 = arith.addf %140, %139 : vector<8x8xf32>
    %cst_74 = arith.constant dense<0.000000e+00> : vector<8x8xf32>
    %142 = tpu.matmul %127, %4, %cst_74 {dimension_numbers = #tpu.dot_dimension_numbers<[1], [0], [0], [1], [0, 0, 1, 1], [], []>} : vector<8x8xf32>, vector<8x8xf32>, vector<8x8xf32> -> vector<8x8xf32>
    %cst_75 = arith.constant 6.000000e+00 : f32
    %143 = vector.broadcast %cst_75 : f32 to vector<8x8xf32>
    %144 = arith.mulf %143, %142 : vector<8x8xf32>
    %cst_76 = arith.constant -3.000000e+00 : f32
    %145 = vector.broadcast %cst_76 : f32 to vector<8x8xf32>
    %146 = arith.addf %144, %145 : vector<8x8xf32>
    %cst_77 = arith.constant dense<0.000000e+00> : vector<8x8xf32>
    %147 = tpu.matmul %141, %4, %cst_77 {dimension_numbers = #tpu.dot_dimension_numbers<[1], [0], [0], [1], [0, 0, 1, 1], [], []>} : vector<8x8xf32>, vector<8x8xf32>, vector<8x8xf32> -> vector<8x8xf32>
    %cst_78 = arith.constant 6.000000e+00 : f32
    %148 = vector.broadcast %cst_78 : f32 to vector<8x8xf32>
    %149 = arith.mulf %148, %147 : vector<8x8xf32>
    %cst_79 = arith.constant -3.000000e+00 : f32
    %150 = vector.broadcast %cst_79 : f32 to vector<8x8xf32>
    %151 = arith.addf %149, %150 : vector<8x8xf32>
    %cst_80 = arith.constant 3.000000e+00 : f32
    %152 = vector.broadcast %cst_80 : f32 to vector<8x8xf32>
    %153 = arith.select %8, %152, %146 : vector<8x8xi1>, vector<8x8xf32>
    %cst_81 = arith.constant 3.000000e+00 : f32
    %154 = vector.broadcast %cst_81 : f32 to vector<8x8xf32>
    %155 = arith.select %8, %154, %151 : vector<8x8xi1>, vector<8x8xf32>
    %cst_82 = arith.constant 9.99999997E-7 : f32
    %156 = vector.broadcast %cst_82 : f32 to vector<8x8xf32>
    %157 = arith.addf %155, %156 : vector<8x8xf32>
    %158 = arith.select %8, %157, %155 : vector<8x8xi1>, vector<8x8xf32>
    %159 = vector.broadcast %113 : vector<8x1xf32> to vector<8x8xf32>
    %160 = arith.cmpf oge, %159, %158 : vector<8x8xf32>
    %161 = arith.extui %160 : vector<8x8xi1> to vector<8x8xi32>
    %cst_83 = arith.constant dense<0> : vector<8xi32>
    %162 = vector.multi_reduction <add>, %161, %cst_83 [1] : vector<8x8xi32> to vector<8xi32>
    %163 = vector.shape_cast %162 : vector<8xi32> to vector<8x1xi32>
    %164 = vector.broadcast %163 : vector<8x1xi32> to vector<8x8xi32>
    %165 = arith.cmpi eq, %164, %5 : vector<8x8xi32>
    %c1_i32_84 = arith.constant 1 : i32
    %166 = vector.broadcast %c1_i32_84 : i32 to vector<8x1xi32>
    %167 = arith.subi %163, %166 : vector<8x1xi32>
    %168 = vector.broadcast %167 : vector<8x1xi32> to vector<8x8xi32>
    %169 = arith.cmpi eq, %168, %5 : vector<8x8xi32>
    %c0_i32_85 = arith.constant 0 : i32
    %170 = vector.broadcast %c0_i32_85 : i32 to vector<8x1xi32>
    %171 = arith.cmpi eq, %163, %170 : vector<8x1xi32>
    %cst_86 = arith.constant 0.000000e+00 : f32
    %172 = vector.broadcast %cst_86 : f32 to vector<8x8xf32>
    %173 = arith.select %165, %153, %172 : vector<8x8xi1>, vector<8x8xf32>
    %cst_87 = arith.constant dense<0.000000e+00> : vector<8xf32>
    %174 = vector.multi_reduction <add>, %173, %cst_87 [1] : vector<8x8xf32> to vector<8xf32>
    %175 = vector.shape_cast %174 : vector<8xf32> to vector<8x1xf32>
    %cst_88 = arith.constant 0.000000e+00 : f32
    %176 = vector.broadcast %cst_88 : f32 to vector<8x8xf32>
    %177 = arith.select %169, %153, %176 : vector<8x8xi1>, vector<8x8xf32>
    %cst_89 = arith.constant dense<0.000000e+00> : vector<8xf32>
    %178 = vector.multi_reduction <add>, %177, %cst_89 [1] : vector<8x8xf32> to vector<8xf32>
    %179 = vector.shape_cast %178 : vector<8xf32> to vector<8x1xf32>
    %cst_90 = arith.constant -3.000000e+00 : f32
    %180 = vector.broadcast %cst_90 : f32 to vector<8x1xf32>
    %181 = arith.select %171, %180, %179 : vector<8x1xi1>, vector<8x1xf32>
    %cst_91 = arith.constant 0.000000e+00 : f32
    %182 = vector.broadcast %cst_91 : f32 to vector<8x8xf32>
    %183 = arith.select %165, %155, %182 : vector<8x8xi1>, vector<8x8xf32>
    %cst_92 = arith.constant dense<0.000000e+00> : vector<8xf32>
    %184 = vector.multi_reduction <add>, %183, %cst_92 [1] : vector<8x8xf32> to vector<8xf32>
    %185 = vector.shape_cast %184 : vector<8xf32> to vector<8x1xf32>
    %cst_93 = arith.constant 0.000000e+00 : f32
    %186 = vector.broadcast %cst_93 : f32 to vector<8x8xf32>
    %187 = arith.select %169, %155, %186 : vector<8x8xi1>, vector<8x8xf32>
    %cst_94 = arith.constant dense<0.000000e+00> : vector<8xf32>
    %188 = vector.multi_reduction <add>, %187, %cst_94 [1] : vector<8x8xf32> to vector<8xf32>
    %189 = vector.shape_cast %188 : vector<8xf32> to vector<8x1xf32>
    %cst_95 = arith.constant -3.000000e+00 : f32
    %190 = vector.broadcast %cst_95 : f32 to vector<8x1xf32>
    %191 = arith.select %171, %190, %189 : vector<8x1xi1>, vector<8x1xf32>
    %192 = arith.subf %175, %181 : vector<8x1xf32>
    %193 = arith.subf %185, %191 : vector<8x1xf32>
    %194 = tpu.reciprocal %192 {approx = true} : vector<8x1xf32> -> vector<8x1xf32>
    %195 = arith.mulf %193, %194 : vector<8x1xf32>
    %cst_96 = arith.constant 0.000000e+00 : f32
    %196 = vector.broadcast %cst_96 : f32 to vector<8x7xf32>
    %197 = arith.maximumf %103, %196 : vector<8x7xf32>
    %198 = math.absf %103 : vector<8x7xf32>
    %cst_97 = arith.constant 0.000000e+00 : f32
    %199 = vector.broadcast %cst_97 : f32 to vector<8x7xf32>
    %200 = arith.subf %199, %198 : vector<8x7xf32>
    %201 = math.exp %200 : vector<8x7xf32>
    %cst_98 = arith.constant 1.000000e+00 : f32
    %202 = vector.broadcast %cst_98 : f32 to vector<8x7xf32>
    %203 = arith.addf %202, %201 : vector<8x7xf32>
    %204 = math.log %203 : vector<8x7xf32>
    %205 = arith.addf %197, %204 : vector<8x7xf32>
    %cst_99 = arith.constant 1.000000e-03 : f32
    %206 = vector.broadcast %cst_99 : f32 to vector<8x7xf32>
    %207 = arith.addf %206, %205 : vector<8x7xf32>
    %c1_i32_100 = arith.constant 1 : i32
    %208 = vector.broadcast %c1_i32_100 : i32 to vector<8x1xi32>
    %209 = arith.subi %163, %208 : vector<8x1xi32>
    %210 = vector.broadcast %209 : vector<8x1xi32> to vector<8x7xi32>
    %211 = arith.cmpi eq, %210, %6 : vector<8x7xi32>
    %cst_101 = arith.constant 0.000000e+00 : f32
    %212 = vector.broadcast %cst_101 : f32 to vector<8x7xf32>
    %213 = arith.select %211, %207, %212 : vector<8x7xi1>, vector<8x7xf32>
    %cst_102 = arith.constant dense<0.000000e+00> : vector<8xf32>
    %214 = vector.multi_reduction <add>, %213, %cst_102 [1] : vector<8x7xf32> to vector<8xf32>
    %215 = vector.shape_cast %214 : vector<8xf32> to vector<8x1xf32>
    %cst_103 = arith.constant 1.000000e+00 : f32
    %216 = vector.broadcast %cst_103 : f32 to vector<8x1xf32>
    %217 = arith.select %171, %216, %215 : vector<8x1xi1>, vector<8x1xf32>
    %c7_i32_104 = arith.constant 7 : i32
    %218 = vector.broadcast %c7_i32_104 : i32 to vector<8x1xi32>
    %219 = arith.cmpi eq, %163, %218 : vector<8x1xi32>
    %220 = vector.broadcast %163 : vector<8x1xi32> to vector<8x7xi32>
    %221 = arith.cmpi eq, %220, %6 : vector<8x7xi32>
    %cst_105 = arith.constant 0.000000e+00 : f32
    %222 = vector.broadcast %cst_105 : f32 to vector<8x7xf32>
    %223 = arith.select %221, %207, %222 : vector<8x7xi1>, vector<8x7xf32>
    %cst_106 = arith.constant dense<0.000000e+00> : vector<8xf32>
    %224 = vector.multi_reduction <add>, %223, %cst_106 [1] : vector<8x7xf32> to vector<8xf32>
    %225 = vector.shape_cast %224 : vector<8xf32> to vector<8x1xf32>
    %cst_107 = arith.constant 1.000000e+00 : f32
    %226 = vector.broadcast %cst_107 : f32 to vector<8x1xf32>
    %227 = arith.select %219, %226, %225 : vector<8x1xi1>, vector<8x1xf32>
    %228 = arith.subf %113, %191 : vector<8x1xf32>
    %229 = arith.addf %217, %227 : vector<8x1xf32>
    %cst_108 = arith.constant 2.000000e+00 : f32
    %230 = vector.broadcast %cst_108 : f32 to vector<8x1xf32>
    %231 = arith.mulf %230, %195 : vector<8x1xf32>
    %232 = arith.subf %229, %231 : vector<8x1xf32>
    %233 = arith.mulf %228, %232 : vector<8x1xf32>
    %234 = arith.subf %195, %217 : vector<8x1xf32>
    %235 = arith.mulf %193, %234 : vector<8x1xf32>
    %236 = arith.addf %233, %235 : vector<8x1xf32>
    %237 = arith.mulf %193, %217 : vector<8x1xf32>
    %238 = arith.mulf %228, %232 : vector<8x1xf32>
    %239 = arith.subf %237, %238 : vector<8x1xf32>
    %cst_109 = arith.constant 0.000000e+00 : f32
    %240 = vector.broadcast %cst_109 : f32 to vector<8x1xf32>
    %241 = arith.subf %240, %195 : vector<8x1xf32>
    %242 = arith.mulf %241, %228 : vector<8x1xf32>
    %243 = arith.mulf %239, %239 : vector<8x1xf32>
    %cst_110 = arith.constant 4.000000e+00 : f32
    %244 = vector.broadcast %cst_110 : f32 to vector<8x1xf32>
    %245 = arith.mulf %244, %236 : vector<8x1xf32>
    %246 = arith.mulf %245, %242 : vector<8x1xf32>
    %247 = arith.subf %243, %246 : vector<8x1xf32>
    %cst_111 = arith.constant 0.000000e+00 : f32
    %248 = vector.broadcast %cst_111 : f32 to vector<8x1xf32>
    %249 = arith.maximumf %247, %248 : vector<8x1xf32>
    %cst_112 = arith.constant 2.000000e+00 : f32
    %250 = vector.broadcast %cst_112 : f32 to vector<8x1xf32>
    %251 = arith.mulf %250, %242 : vector<8x1xf32>
    %cst_113 = arith.constant 0.000000e+00 : f32
    %252 = vector.broadcast %cst_113 : f32 to vector<8x1xf32>
    %253 = arith.subf %252, %239 : vector<8x1xf32>
    %254 = math.sqrt %249 : vector<8x1xf32>
    %255 = arith.subf %253, %254 : vector<8x1xf32>
    %256 = tpu.reciprocal %255 {approx = true} : vector<8x1xf32> -> vector<8x1xf32>
    %257 = arith.mulf %251, %256 : vector<8x1xf32>
    %258 = arith.mulf %257, %192 : vector<8x1xf32>
    %259 = arith.addf %258, %181 : vector<8x1xf32>
    %cst_114 = arith.constant 1.000000e+00 : f32
    %260 = vector.broadcast %cst_114 : f32 to vector<8x1xf32>
    %261 = arith.subf %260, %257 : vector<8x1xf32>
    %262 = arith.mulf %257, %261 : vector<8x1xf32>
    %263 = arith.mulf %232, %262 : vector<8x1xf32>
    %264 = arith.addf %195, %263 : vector<8x1xf32>
    %265 = arith.mulf %195, %195 : vector<8x1xf32>
    %266 = arith.mulf %227, %257 : vector<8x1xf32>
    %267 = arith.mulf %266, %257 : vector<8x1xf32>
    %cst_115 = arith.constant 2.000000e+00 : f32
    %268 = vector.broadcast %cst_115 : f32 to vector<8x1xf32>
    %269 = arith.mulf %268, %195 : vector<8x1xf32>
    %270 = arith.mulf %269, %262 : vector<8x1xf32>
    %271 = arith.addf %267, %270 : vector<8x1xf32>
    %cst_116 = arith.constant 1.000000e+00 : f32
    %272 = vector.broadcast %cst_116 : f32 to vector<8x1xf32>
    %273 = arith.subf %272, %257 : vector<8x1xf32>
    %274 = arith.mulf %217, %273 : vector<8x1xf32>
    %cst_117 = arith.constant 1.000000e+00 : f32
    %275 = vector.broadcast %cst_117 : f32 to vector<8x1xf32>
    %276 = arith.subf %275, %257 : vector<8x1xf32>
    %277 = arith.mulf %274, %276 : vector<8x1xf32>
    %278 = arith.addf %271, %277 : vector<8x1xf32>
    %279 = arith.mulf %265, %278 : vector<8x1xf32>
    %280 = math.log %264 : vector<8x1xf32>
    %cst_118 = arith.constant 2.000000e+00 : f32
    %281 = vector.broadcast %cst_118 : f32 to vector<8x1xf32>
    %282 = arith.mulf %281, %280 : vector<8x1xf32>
    %283 = math.log %279 : vector<8x1xf32>
    %284 = arith.subf %282, %283 : vector<8x1xf32>
    %285 = arith.select %109, %259, %104 : vector<8x1xi1>, vector<8x1xf32>
    %cst_119 = arith.constant 0.000000e+00 : f32
    %286 = vector.broadcast %cst_119 : f32 to vector<8x1xf32>
    %287 = arith.select %109, %284, %286 : vector<8x1xi1>, vector<8x1xf32>
    %288 = vector.shape_cast %285 : vector<8x1xf32> to vector<8x1xf32>
    %289 = vector.broadcast %288 : vector<8x1xf32> to vector<8x2xf32>
    %290 = arith.select %11, %289, %31 : vector<8x2xi1>, vector<8x2xf32>
    %291 = arith.addf %32, %287 : vector<8x1xf32>
    %292 = arith.truncf %290 : vector<8x2xf32> to vector<8x2xbf16>
    %c0_120 = arith.constant 0 : index
    %c0_121 = arith.constant 0 : index
    %c0_122 = arith.constant 0 : index
    %293 = vector.load %arg5[%c0_120, %c0_121, %c0_122] : memref<2x2x128xbf16, #tpu.memory_space<vmem>>, vector<1x2x128xbf16>
    %294 = vector.shape_cast %293 : vector<1x2x128xbf16> to vector<2x128xbf16>
    %cst_123 = arith.constant dense<0.000000e+00> : vector<8x128xf32>
    %295 = tpu.matmul %292, %294, %cst_123 {dimension_numbers = #tpu.dot_dimension_numbers<[1], [0], [0], [1], [0, 0, 1, 1], [], []>} : vector<8x2xbf16>, vector<2x128xbf16>, vector<8x128xf32> -> vector<8x128xf32>
    %c0_124 = arith.constant 0 : index
    %c0_125 = arith.constant 0 : index
    %296 = vector.load %arg6[%c0_124, %c0_125] : memref<2x128xf32, #tpu.memory_space<vmem>>, vector<1x128xf32>
    %297 = vector.shape_cast %296 : vector<1x128xf32> to vector<128xf32>
    %298 = vector.shape_cast %297 : vector<128xf32> to vector<1x128xf32>
    %299 = vector.broadcast %298 : vector<1x128xf32> to vector<8x128xf32>
    %300 = arith.addf %295, %299 : vector<8x128xf32>
    %cst_126 = arith.constant 0.000000e+00 : f32
    %301 = vector.broadcast %cst_126 : f32 to vector<8x128xf32>
    %302 = arith.maximumf %300, %301 : vector<8x128xf32>
    %303 = arith.truncf %302 : vector<8x128xf32> to vector<8x128xbf16>
    %c0_127 = arith.constant 0 : index
    %c0_128 = arith.constant 0 : index
    %c0_129 = arith.constant 0 : index
    %c0_130 = arith.constant 0 : index
    %304 = vector.load %arg7[%c0_127, %c0_128, %c0_129, %c0_130] : memref<2x4x128x128xbf16, #tpu.memory_space<vmem>>, vector<1x1x128x128xbf16>
    %305 = vector.shape_cast %304 : vector<1x1x128x128xbf16> to vector<128x128xbf16>
    %cst_131 = arith.constant dense<0.000000e+00> : vector<8x128xf32>
    %306 = tpu.matmul %303, %305, %cst_131 {dimension_numbers = #tpu.dot_dimension_numbers<[1], [0], [0], [1], [0, 0, 1, 1], [], []>} : vector<8x128xbf16>, vector<128x128xbf16>, vector<8x128xf32> -> vector<8x128xf32>
    %c0_132 = arith.constant 0 : index
    %c0_133 = arith.constant 0 : index
    %c0_134 = arith.constant 0 : index
    %307 = vector.load %arg8[%c0_132, %c0_133, %c0_134] : memref<2x4x128xf32, #tpu.memory_space<vmem>>, vector<1x1x128xf32>
    %308 = vector.shape_cast %307 : vector<1x1x128xf32> to vector<128xf32>
    %309 = vector.shape_cast %308 : vector<128xf32> to vector<1x128xf32>
    %310 = vector.broadcast %309 : vector<1x128xf32> to vector<8x128xf32>
    %311 = arith.addf %306, %310 : vector<8x128xf32>
    %cst_135 = arith.constant 0.000000e+00 : f32
    %312 = vector.broadcast %cst_135 : f32 to vector<8x128xf32>
    %313 = arith.maximumf %311, %312 : vector<8x128xf32>
    %314 = arith.truncf %313 : vector<8x128xf32> to vector<8x128xbf16>
    %c0_136 = arith.constant 0 : index
    %c1_137 = arith.constant 1 : index
    %c0_138 = arith.constant 0 : index
    %c0_139 = arith.constant 0 : index
    %315 = vector.load %arg7[%c0_136, %c1_137, %c0_138, %c0_139] : memref<2x4x128x128xbf16, #tpu.memory_space<vmem>>, vector<1x1x128x128xbf16>
    %316 = vector.shape_cast %315 : vector<1x1x128x128xbf16> to vector<128x128xbf16>
    %cst_140 = arith.constant dense<0.000000e+00> : vector<8x128xf32>
    %317 = tpu.matmul %314, %316, %cst_140 {dimension_numbers = #tpu.dot_dimension_numbers<[1], [0], [0], [1], [0, 0, 1, 1], [], []>} : vector<8x128xbf16>, vector<128x128xbf16>, vector<8x128xf32> -> vector<8x128xf32>
    %c0_141 = arith.constant 0 : index
    %c1_142 = arith.constant 1 : index
    %c0_143 = arith.constant 0 : index
    %318 = vector.load %arg8[%c0_141, %c1_142, %c0_143] : memref<2x4x128xf32, #tpu.memory_space<vmem>>, vector<1x1x128xf32>
    %319 = vector.shape_cast %318 : vector<1x1x128xf32> to vector<128xf32>
    %320 = vector.shape_cast %319 : vector<128xf32> to vector<1x128xf32>
    %321 = vector.broadcast %320 : vector<1x128xf32> to vector<8x128xf32>
    %322 = arith.addf %317, %321 : vector<8x128xf32>
    %323 = arith.addf %300, %322 : vector<8x128xf32>
    %cst_144 = arith.constant 0.000000e+00 : f32
    %324 = vector.broadcast %cst_144 : f32 to vector<8x128xf32>
    %325 = arith.maximumf %323, %324 : vector<8x128xf32>
    %326 = arith.truncf %325 : vector<8x128xf32> to vector<8x128xbf16>
    %c0_145 = arith.constant 0 : index
    %c2_146 = arith.constant 2 : index
    %c0_147 = arith.constant 0 : index
    %c0_148 = arith.constant 0 : index
    %327 = vector.load %arg7[%c0_145, %c2_146, %c0_147, %c0_148] : memref<2x4x128x128xbf16, #tpu.memory_space<vmem>>, vector<1x1x128x128xbf16>
    %328 = vector.shape_cast %327 : vector<1x1x128x128xbf16> to vector<128x128xbf16>
    %cst_149 = arith.constant dense<0.000000e+00> : vector<8x128xf32>
    %329 = tpu.matmul %326, %328, %cst_149 {dimension_numbers = #tpu.dot_dimension_numbers<[1], [0], [0], [1], [0, 0, 1, 1], [], []>} : vector<8x128xbf16>, vector<128x128xbf16>, vector<8x128xf32> -> vector<8x128xf32>
    %c0_150 = arith.constant 0 : index
    %c2_151 = arith.constant 2 : index
    %c0_152 = arith.constant 0 : index
    %330 = vector.load %arg8[%c0_150, %c2_151, %c0_152] : memref<2x4x128xf32, #tpu.memory_space<vmem>>, vector<1x1x128xf32>
    %331 = vector.shape_cast %330 : vector<1x1x128xf32> to vector<128xf32>
    %332 = vector.shape_cast %331 : vector<128xf32> to vector<1x128xf32>
    %333 = vector.broadcast %332 : vector<1x128xf32> to vector<8x128xf32>
    %334 = arith.addf %329, %333 : vector<8x128xf32>
    %cst_153 = arith.constant 0.000000e+00 : f32
    %335 = vector.broadcast %cst_153 : f32 to vector<8x128xf32>
    %336 = arith.maximumf %334, %335 : vector<8x128xf32>
    %337 = arith.truncf %336 : vector<8x128xf32> to vector<8x128xbf16>
    %c0_154 = arith.constant 0 : index
    %c3_155 = arith.constant 3 : index
    %c0_156 = arith.constant 0 : index
    %c0_157 = arith.constant 0 : index
    %338 = vector.load %arg7[%c0_154, %c3_155, %c0_156, %c0_157] : memref<2x4x128x128xbf16, #tpu.memory_space<vmem>>, vector<1x1x128x128xbf16>
    %339 = vector.shape_cast %338 : vector<1x1x128x128xbf16> to vector<128x128xbf16>
    %cst_158 = arith.constant dense<0.000000e+00> : vector<8x128xf32>
    %340 = tpu.matmul %337, %339, %cst_158 {dimension_numbers = #tpu.dot_dimension_numbers<[1], [0], [0], [1], [0, 0, 1, 1], [], []>} : vector<8x128xbf16>, vector<128x128xbf16>, vector<8x128xf32> -> vector<8x128xf32>
    %c0_159 = arith.constant 0 : index
    %c3_160 = arith.constant 3 : index
    %c0_161 = arith.constant 0 : index
    %341 = vector.load %arg8[%c0_159, %c3_160, %c0_161] : memref<2x4x128xf32, #tpu.memory_space<vmem>>, vector<1x1x128xf32>
    %342 = vector.shape_cast %341 : vector<1x1x128xf32> to vector<128xf32>
    %343 = vector.shape_cast %342 : vector<128xf32> to vector<1x128xf32>
    %344 = vector.broadcast %343 : vector<1x128xf32> to vector<8x128xf32>
    %345 = arith.addf %340, %344 : vector<8x128xf32>
    %346 = arith.addf %323, %345 : vector<8x128xf32>
    %347 = arith.truncf %346 : vector<8x128xf32> to vector<8x128xbf16>
    %c0_162 = arith.constant 0 : index
    %c1_163 = arith.constant 1 : index
    %c0_164 = arith.constant 0 : index
    %c0_165 = arith.constant 0 : index
    %348 = vector.load %arg9[%c0_162, %c1_163, %c0_164, %c0_165] : memref<2x2x128x23xbf16, #tpu.memory_space<vmem>>, vector<1x1x128x23xbf16>
    %349 = vector.shape_cast %348 : vector<1x1x128x23xbf16> to vector<128x23xbf16>
    %cst_166 = arith.constant dense<0.000000e+00> : vector<8x23xf32>
    %350 = tpu.matmul %347, %349, %cst_166 {dimension_numbers = #tpu.dot_dimension_numbers<[1], [0], [0], [1], [0, 0, 1, 1], [], []>} : vector<8x128xbf16>, vector<128x23xbf16>, vector<8x23xf32> -> vector<8x23xf32>
    %c0_167 = arith.constant 0 : index
    %c1_168 = arith.constant 1 : index
    %c0_169 = arith.constant 0 : index
    %351 = vector.load %arg10[%c0_167, %c1_168, %c0_169] : memref<2x2x23xf32, #tpu.memory_space<vmem>>, vector<1x1x23xf32>
    %352 = vector.shape_cast %351 : vector<1x1x23xf32> to vector<23xf32>
    %353 = vector.shape_cast %352 : vector<23xf32> to vector<1x23xf32>
    %354 = vector.broadcast %353 : vector<1x23xf32> to vector<8x23xf32>
    %355 = arith.addf %350, %354 : vector<8x23xf32>
    %356 = vector.extract_strided_slice %355 {offsets = [0, 0], sizes = [8, 8], strides = [1, 1]} : vector<8x23xf32> to vector<8x8xf32>
    %cst_170 = arith.constant 0.0883883461 : f32
    %357 = vector.broadcast %cst_170 : f32 to vector<8x8xf32>
    %358 = arith.mulf %356, %357 : vector<8x8xf32>
    %359 = vector.extract_strided_slice %355 {offsets = [0, 8], sizes = [8, 8], strides = [1, 1]} : vector<8x23xf32> to vector<8x8xf32>
    %cst_171 = arith.constant 0.0883883461 : f32
    %360 = vector.broadcast %cst_171 : f32 to vector<8x8xf32>
    %361 = arith.mulf %359, %360 : vector<8x8xf32>
    %362 = vector.extract_strided_slice %355 {offsets = [0, 16], sizes = [8, 7], strides = [1, 1]} : vector<8x23xf32> to vector<8x7xf32>
    %363 = vector.extract_strided_slice %22 {offsets = [0, 1], sizes = [8, 1], strides = [1, 1]} : vector<8x2xf32> to vector<8x1xf32>
    %cst_172 = arith.constant -3.000000e+00 : f32
    %364 = vector.broadcast %cst_172 : f32 to vector<8x1xf32>
    %365 = arith.cmpf oge, %363, %364 : vector<8x1xf32>
    %cst_173 = arith.constant 3.000000e+00 : f32
    %366 = vector.broadcast %cst_173 : f32 to vector<8x1xf32>
    %367 = arith.cmpf ole, %363, %366 : vector<8x1xf32>
    %368 = arith.andi %365, %367 : vector<8x1xi1>
    %cst_174 = arith.constant -3.000000e+00 : f32
    %cst_175 = arith.constant 3.000000e+00 : f32
    %369 = vector.broadcast %cst_174 : f32 to vector<8x1xf32>
    %370 = arith.maximumf %369, %363 : vector<8x1xf32>
    %371 = vector.broadcast %cst_175 : f32 to vector<8x1xf32>
    %372 = arith.minimumf %371, %370 : vector<8x1xf32>
    %cst_176 = arith.constant dense<0xFF800000> : vector<8xf32>
    %373 = vector.multi_reduction <maximumf>, %358, %cst_176 [1] : vector<8x8xf32> to vector<8xf32>
    %374 = vector.shape_cast %373 : vector<8xf32> to vector<8x1xf32>
    %375 = vector.broadcast %374 : vector<8x1xf32> to vector<8x8xf32>
    %376 = arith.subf %358, %375 : vector<8x8xf32>
    %377 = math.exp %376 : vector<8x8xf32>
    %cst_177 = arith.constant dense<0.000000e+00> : vector<8xf32>
    %378 = vector.multi_reduction <add>, %377, %cst_177 [1] : vector<8x8xf32> to vector<8xf32>
    %379 = vector.shape_cast %378 : vector<8xf32> to vector<8x1xf32>
    %380 = tpu.reciprocal %379 {approx = true} : vector<8x1xf32> -> vector<8x1xf32>
    %381 = vector.broadcast %380 : vector<8x1xf32> to vector<8x8xf32>
    %382 = arith.mulf %377, %381 : vector<8x8xf32>
    %cst_178 = arith.constant 0.991999983 : f32
    %383 = vector.broadcast %cst_178 : f32 to vector<8x8xf32>
    %384 = arith.mulf %383, %382 : vector<8x8xf32>
    %cst_179 = arith.constant 1.000000e-03 : f32
    %385 = vector.broadcast %cst_179 : f32 to vector<8x8xf32>
    %386 = arith.addf %385, %384 : vector<8x8xf32>
    %cst_180 = arith.constant dense<0xFF800000> : vector<8xf32>
    %387 = vector.multi_reduction <maximumf>, %361, %cst_180 [1] : vector<8x8xf32> to vector<8xf32>
    %388 = vector.shape_cast %387 : vector<8xf32> to vector<8x1xf32>
    %389 = vector.broadcast %388 : vector<8x1xf32> to vector<8x8xf32>
    %390 = arith.subf %361, %389 : vector<8x8xf32>
    %391 = math.exp %390 : vector<8x8xf32>
    %cst_181 = arith.constant dense<0.000000e+00> : vector<8xf32>
    %392 = vector.multi_reduction <add>, %391, %cst_181 [1] : vector<8x8xf32> to vector<8xf32>
    %393 = vector.shape_cast %392 : vector<8xf32> to vector<8x1xf32>
    %394 = tpu.reciprocal %393 {approx = true} : vector<8x1xf32> -> vector<8x1xf32>
    %395 = vector.broadcast %394 : vector<8x1xf32> to vector<8x8xf32>
    %396 = arith.mulf %391, %395 : vector<8x8xf32>
    %cst_182 = arith.constant 0.991999983 : f32
    %397 = vector.broadcast %cst_182 : f32 to vector<8x8xf32>
    %398 = arith.mulf %397, %396 : vector<8x8xf32>
    %cst_183 = arith.constant 1.000000e-03 : f32
    %399 = vector.broadcast %cst_183 : f32 to vector<8x8xf32>
    %400 = arith.addf %399, %398 : vector<8x8xf32>
    %cst_184 = arith.constant dense<0.000000e+00> : vector<8x8xf32>
    %401 = tpu.matmul %386, %4, %cst_184 {dimension_numbers = #tpu.dot_dimension_numbers<[1], [0], [0], [1], [0, 0, 1, 1], [], []>} : vector<8x8xf32>, vector<8x8xf32>, vector<8x8xf32> -> vector<8x8xf32>
    %cst_185 = arith.constant 6.000000e+00 : f32
    %402 = vector.broadcast %cst_185 : f32 to vector<8x8xf32>
    %403 = arith.mulf %402, %401 : vector<8x8xf32>
    %cst_186 = arith.constant -3.000000e+00 : f32
    %404 = vector.broadcast %cst_186 : f32 to vector<8x8xf32>
    %405 = arith.addf %403, %404 : vector<8x8xf32>
    %cst_187 = arith.constant dense<0.000000e+00> : vector<8x8xf32>
    %406 = tpu.matmul %400, %4, %cst_187 {dimension_numbers = #tpu.dot_dimension_numbers<[1], [0], [0], [1], [0, 0, 1, 1], [], []>} : vector<8x8xf32>, vector<8x8xf32>, vector<8x8xf32> -> vector<8x8xf32>
    %cst_188 = arith.constant 6.000000e+00 : f32
    %407 = vector.broadcast %cst_188 : f32 to vector<8x8xf32>
    %408 = arith.mulf %407, %406 : vector<8x8xf32>
    %cst_189 = arith.constant -3.000000e+00 : f32
    %409 = vector.broadcast %cst_189 : f32 to vector<8x8xf32>
    %410 = arith.addf %408, %409 : vector<8x8xf32>
    %cst_190 = arith.constant 3.000000e+00 : f32
    %411 = vector.broadcast %cst_190 : f32 to vector<8x8xf32>
    %412 = arith.select %8, %411, %405 : vector<8x8xi1>, vector<8x8xf32>
    %cst_191 = arith.constant 3.000000e+00 : f32
    %413 = vector.broadcast %cst_191 : f32 to vector<8x8xf32>
    %414 = arith.select %8, %413, %410 : vector<8x8xi1>, vector<8x8xf32>
    %cst_192 = arith.constant 9.99999997E-7 : f32
    %415 = vector.broadcast %cst_192 : f32 to vector<8x8xf32>
    %416 = arith.addf %414, %415 : vector<8x8xf32>
    %417 = arith.select %8, %416, %414 : vector<8x8xi1>, vector<8x8xf32>
    %418 = vector.broadcast %372 : vector<8x1xf32> to vector<8x8xf32>
    %419 = arith.cmpf oge, %418, %417 : vector<8x8xf32>
    %420 = arith.extui %419 : vector<8x8xi1> to vector<8x8xi32>
    %cst_193 = arith.constant dense<0> : vector<8xi32>
    %421 = vector.multi_reduction <add>, %420, %cst_193 [1] : vector<8x8xi32> to vector<8xi32>
    %422 = vector.shape_cast %421 : vector<8xi32> to vector<8x1xi32>
    %423 = vector.broadcast %422 : vector<8x1xi32> to vector<8x8xi32>
    %424 = arith.cmpi eq, %423, %5 : vector<8x8xi32>
    %c1_i32_194 = arith.constant 1 : i32
    %425 = vector.broadcast %c1_i32_194 : i32 to vector<8x1xi32>
    %426 = arith.subi %422, %425 : vector<8x1xi32>
    %427 = vector.broadcast %426 : vector<8x1xi32> to vector<8x8xi32>
    %428 = arith.cmpi eq, %427, %5 : vector<8x8xi32>
    %c0_i32_195 = arith.constant 0 : i32
    %429 = vector.broadcast %c0_i32_195 : i32 to vector<8x1xi32>
    %430 = arith.cmpi eq, %422, %429 : vector<8x1xi32>
    %cst_196 = arith.constant 0.000000e+00 : f32
    %431 = vector.broadcast %cst_196 : f32 to vector<8x8xf32>
    %432 = arith.select %424, %412, %431 : vector<8x8xi1>, vector<8x8xf32>
    %cst_197 = arith.constant dense<0.000000e+00> : vector<8xf32>
    %433 = vector.multi_reduction <add>, %432, %cst_197 [1] : vector<8x8xf32> to vector<8xf32>
    %434 = vector.shape_cast %433 : vector<8xf32> to vector<8x1xf32>
    %cst_198 = arith.constant 0.000000e+00 : f32
    %435 = vector.broadcast %cst_198 : f32 to vector<8x8xf32>
    %436 = arith.select %428, %412, %435 : vector<8x8xi1>, vector<8x8xf32>
    %cst_199 = arith.constant dense<0.000000e+00> : vector<8xf32>
    %437 = vector.multi_reduction <add>, %436, %cst_199 [1] : vector<8x8xf32> to vector<8xf32>
    %438 = vector.shape_cast %437 : vector<8xf32> to vector<8x1xf32>
    %cst_200 = arith.constant -3.000000e+00 : f32
    %439 = vector.broadcast %cst_200 : f32 to vector<8x1xf32>
    %440 = arith.select %430, %439, %438 : vector<8x1xi1>, vector<8x1xf32>
    %cst_201 = arith.constant 0.000000e+00 : f32
    %441 = vector.broadcast %cst_201 : f32 to vector<8x8xf32>
    %442 = arith.select %424, %414, %441 : vector<8x8xi1>, vector<8x8xf32>
    %cst_202 = arith.constant dense<0.000000e+00> : vector<8xf32>
    %443 = vector.multi_reduction <add>, %442, %cst_202 [1] : vector<8x8xf32> to vector<8xf32>
    %444 = vector.shape_cast %443 : vector<8xf32> to vector<8x1xf32>
    %cst_203 = arith.constant 0.000000e+00 : f32
    %445 = vector.broadcast %cst_203 : f32 to vector<8x8xf32>
    %446 = arith.select %428, %414, %445 : vector<8x8xi1>, vector<8x8xf32>
    %cst_204 = arith.constant dense<0.000000e+00> : vector<8xf32>
    %447 = vector.multi_reduction <add>, %446, %cst_204 [1] : vector<8x8xf32> to vector<8xf32>
    %448 = vector.shape_cast %447 : vector<8xf32> to vector<8x1xf32>
    %cst_205 = arith.constant -3.000000e+00 : f32
    %449 = vector.broadcast %cst_205 : f32 to vector<8x1xf32>
    %450 = arith.select %430, %449, %448 : vector<8x1xi1>, vector<8x1xf32>
    %451 = arith.subf %434, %440 : vector<8x1xf32>
    %452 = arith.subf %444, %450 : vector<8x1xf32>
    %453 = tpu.reciprocal %451 {approx = true} : vector<8x1xf32> -> vector<8x1xf32>
    %454 = arith.mulf %452, %453 : vector<8x1xf32>
    %cst_206 = arith.constant 0.000000e+00 : f32
    %455 = vector.broadcast %cst_206 : f32 to vector<8x7xf32>
    %456 = arith.maximumf %362, %455 : vector<8x7xf32>
    %457 = math.absf %362 : vector<8x7xf32>
    %cst_207 = arith.constant 0.000000e+00 : f32
    %458 = vector.broadcast %cst_207 : f32 to vector<8x7xf32>
    %459 = arith.subf %458, %457 : vector<8x7xf32>
    %460 = math.exp %459 : vector<8x7xf32>
    %cst_208 = arith.constant 1.000000e+00 : f32
    %461 = vector.broadcast %cst_208 : f32 to vector<8x7xf32>
    %462 = arith.addf %461, %460 : vector<8x7xf32>
    %463 = math.log %462 : vector<8x7xf32>
    %464 = arith.addf %456, %463 : vector<8x7xf32>
    %cst_209 = arith.constant 1.000000e-03 : f32
    %465 = vector.broadcast %cst_209 : f32 to vector<8x7xf32>
    %466 = arith.addf %465, %464 : vector<8x7xf32>
    %c1_i32_210 = arith.constant 1 : i32
    %467 = vector.broadcast %c1_i32_210 : i32 to vector<8x1xi32>
    %468 = arith.subi %422, %467 : vector<8x1xi32>
    %469 = vector.broadcast %468 : vector<8x1xi32> to vector<8x7xi32>
    %470 = arith.cmpi eq, %469, %6 : vector<8x7xi32>
    %cst_211 = arith.constant 0.000000e+00 : f32
    %471 = vector.broadcast %cst_211 : f32 to vector<8x7xf32>
    %472 = arith.select %470, %466, %471 : vector<8x7xi1>, vector<8x7xf32>
    %cst_212 = arith.constant dense<0.000000e+00> : vector<8xf32>
    %473 = vector.multi_reduction <add>, %472, %cst_212 [1] : vector<8x7xf32> to vector<8xf32>
    %474 = vector.shape_cast %473 : vector<8xf32> to vector<8x1xf32>
    %cst_213 = arith.constant 1.000000e+00 : f32
    %475 = vector.broadcast %cst_213 : f32 to vector<8x1xf32>
    %476 = arith.select %430, %475, %474 : vector<8x1xi1>, vector<8x1xf32>
    %c7_i32_214 = arith.constant 7 : i32
    %477 = vector.broadcast %c7_i32_214 : i32 to vector<8x1xi32>
    %478 = arith.cmpi eq, %422, %477 : vector<8x1xi32>
    %479 = vector.broadcast %422 : vector<8x1xi32> to vector<8x7xi32>
    %480 = arith.cmpi eq, %479, %6 : vector<8x7xi32>
    %cst_215 = arith.constant 0.000000e+00 : f32
    %481 = vector.broadcast %cst_215 : f32 to vector<8x7xf32>
    %482 = arith.select %480, %466, %481 : vector<8x7xi1>, vector<8x7xf32>
    %cst_216 = arith.constant dense<0.000000e+00> : vector<8xf32>
    %483 = vector.multi_reduction <add>, %482, %cst_216 [1] : vector<8x7xf32> to vector<8xf32>
    %484 = vector.shape_cast %483 : vector<8xf32> to vector<8x1xf32>
    %cst_217 = arith.constant 1.000000e+00 : f32
    %485 = vector.broadcast %cst_217 : f32 to vector<8x1xf32>
    %486 = arith.select %478, %485, %484 : vector<8x1xi1>, vector<8x1xf32>
    %487 = arith.subf %372, %450 : vector<8x1xf32>
    %488 = arith.addf %476, %486 : vector<8x1xf32>
    %cst_218 = arith.constant 2.000000e+00 : f32
    %489 = vector.broadcast %cst_218 : f32 to vector<8x1xf32>
    %490 = arith.mulf %489, %454 : vector<8x1xf32>
    %491 = arith.subf %488, %490 : vector<8x1xf32>
    %492 = arith.mulf %487, %491 : vector<8x1xf32>
    %493 = arith.subf %454, %476 : vector<8x1xf32>
    %494 = arith.mulf %452, %493 : vector<8x1xf32>
    %495 = arith.addf %492, %494 : vector<8x1xf32>
    %496 = arith.mulf %452, %476 : vector<8x1xf32>
    %497 = arith.mulf %487, %491 : vector<8x1xf32>
    %498 = arith.subf %496, %497 : vector<8x1xf32>
    %cst_219 = arith.constant 0.000000e+00 : f32
    %499 = vector.broadcast %cst_219 : f32 to vector<8x1xf32>
    %500 = arith.subf %499, %454 : vector<8x1xf32>
    %501 = arith.mulf %500, %487 : vector<8x1xf32>
    %502 = arith.mulf %498, %498 : vector<8x1xf32>
    %cst_220 = arith.constant 4.000000e+00 : f32
    %503 = vector.broadcast %cst_220 : f32 to vector<8x1xf32>
    %504 = arith.mulf %503, %495 : vector<8x1xf32>
    %505 = arith.mulf %504, %501 : vector<8x1xf32>
    %506 = arith.subf %502, %505 : vector<8x1xf32>
    %cst_221 = arith.constant 0.000000e+00 : f32
    %507 = vector.broadcast %cst_221 : f32 to vector<8x1xf32>
    %508 = arith.maximumf %506, %507 : vector<8x1xf32>
    %cst_222 = arith.constant 2.000000e+00 : f32
    %509 = vector.broadcast %cst_222 : f32 to vector<8x1xf32>
    %510 = arith.mulf %509, %501 : vector<8x1xf32>
    %cst_223 = arith.constant 0.000000e+00 : f32
    %511 = vector.broadcast %cst_223 : f32 to vector<8x1xf32>
    %512 = arith.subf %511, %498 : vector<8x1xf32>
    %513 = math.sqrt %508 : vector<8x1xf32>
    %514 = arith.subf %512, %513 : vector<8x1xf32>
    %515 = tpu.reciprocal %514 {approx = true} : vector<8x1xf32> -> vector<8x1xf32>
    %516 = arith.mulf %510, %515 : vector<8x1xf32>
    %517 = arith.mulf %516, %451 : vector<8x1xf32>
    %518 = arith.addf %517, %440 : vector<8x1xf32>
    %cst_224 = arith.constant 1.000000e+00 : f32
    %519 = vector.broadcast %cst_224 : f32 to vector<8x1xf32>
    %520 = arith.subf %519, %516 : vector<8x1xf32>
    %521 = arith.mulf %516, %520 : vector<8x1xf32>
    %522 = arith.mulf %491, %521 : vector<8x1xf32>
    %523 = arith.addf %454, %522 : vector<8x1xf32>
    %524 = arith.mulf %454, %454 : vector<8x1xf32>
    %525 = arith.mulf %486, %516 : vector<8x1xf32>
    %526 = arith.mulf %525, %516 : vector<8x1xf32>
    %cst_225 = arith.constant 2.000000e+00 : f32
    %527 = vector.broadcast %cst_225 : f32 to vector<8x1xf32>
    %528 = arith.mulf %527, %454 : vector<8x1xf32>
    %529 = arith.mulf %528, %521 : vector<8x1xf32>
    %530 = arith.addf %526, %529 : vector<8x1xf32>
    %cst_226 = arith.constant 1.000000e+00 : f32
    %531 = vector.broadcast %cst_226 : f32 to vector<8x1xf32>
    %532 = arith.subf %531, %516 : vector<8x1xf32>
    %533 = arith.mulf %476, %532 : vector<8x1xf32>
    %cst_227 = arith.constant 1.000000e+00 : f32
    %534 = vector.broadcast %cst_227 : f32 to vector<8x1xf32>
    %535 = arith.subf %534, %516 : vector<8x1xf32>
    %536 = arith.mulf %533, %535 : vector<8x1xf32>
    %537 = arith.addf %530, %536 : vector<8x1xf32>
    %538 = arith.mulf %524, %537 : vector<8x1xf32>
    %539 = math.log %523 : vector<8x1xf32>
    %cst_228 = arith.constant 2.000000e+00 : f32
    %540 = vector.broadcast %cst_228 : f32 to vector<8x1xf32>
    %541 = arith.mulf %540, %539 : vector<8x1xf32>
    %542 = math.log %538 : vector<8x1xf32>
    %543 = arith.subf %541, %542 : vector<8x1xf32>
    %544 = arith.select %368, %518, %363 : vector<8x1xi1>, vector<8x1xf32>
    %cst_229 = arith.constant 0.000000e+00 : f32
    %545 = vector.broadcast %cst_229 : f32 to vector<8x1xf32>
    %546 = arith.select %368, %543, %545 : vector<8x1xi1>, vector<8x1xf32>
    %547 = vector.shape_cast %544 : vector<8x1xf32> to vector<8x1xf32>
    %548 = vector.broadcast %547 : vector<8x1xf32> to vector<8x2xf32>
    %549 = arith.select %13, %548, %290 : vector<8x2xi1>, vector<8x2xf32>
    %550 = arith.addf %291, %546 : vector<8x1xf32>
    %551 = arith.subf %30, %550 : vector<8x1xf32>
    %c0_230 = arith.constant 0 : index
    %c0_231 = arith.constant 0 : index
    %552 = vector.load %arg12[%c0_230, %c0_231] : memref<2x2xf32, #tpu.memory_space<vmem>>, vector<1x2xf32>
    %553 = vector.shape_cast %552 : vector<1x2xf32> to vector<2xf32>
    %554 = vector.shape_cast %553 : vector<2xf32> to vector<1x2xf32>
    %555 = vector.broadcast %554 : vector<1x2xf32> to vector<8x2xf32>
    %556 = arith.subf %549, %555 : vector<8x2xf32>
    %557 = arith.truncf %556 : vector<8x2xf32> to vector<8x2xbf16>
    %c0_232 = arith.constant 0 : index
    %c0_233 = arith.constant 0 : index
    %c0_234 = arith.constant 0 : index
    %558 = vector.load %arg11[%c0_232, %c0_233, %c0_234] : memref<2x2x2xbf16, #tpu.memory_space<vmem>>, vector<1x2x2xbf16>
    %559 = vector.shape_cast %558 : vector<1x2x2xbf16> to vector<2x2xbf16>
    %cst_235 = arith.constant dense<0.000000e+00> : vector<8x2xf32>
    %560 = tpu.matmul %557, %559, %cst_235 {dimension_numbers = #tpu.dot_dimension_numbers<[1], [0], [0], [1], [0, 0, 1, 1], [], []>} : vector<8x2xbf16>, vector<2x2xbf16>, vector<8x2xf32> -> vector<8x2xf32>
    %c0_236 = arith.constant 0 : index
    %561 = memref.load %arg13[%c0_236] : memref<2xf32, #tpu.memory_space<smem>>
    %562 = vector.broadcast %561 : f32 to vector<8x1xf32>
    %563 = arith.subf %551, %562 : vector<8x1xf32>
    %cst_237 = arith.constant 0.000000e+00 : f32
    %564 = vector.broadcast %cst_237 : f32 to vector<8x2xf32>
    %cst_238 = arith.constant 0.000000e+00 : f32
    %565 = vector.broadcast %cst_238 : f32 to vector<8x1xf32>
    %566 = arith.truncf %564 : vector<8x2xf32> to vector<8x2xbf16>
    %c1_239 = arith.constant 1 : index
    %c0_240 = arith.constant 0 : index
    %c0_241 = arith.constant 0 : index
    %567 = vector.load %arg5[%c1_239, %c0_240, %c0_241] : memref<2x2x128xbf16, #tpu.memory_space<vmem>>, vector<1x2x128xbf16>
    %568 = vector.shape_cast %567 : vector<1x2x128xbf16> to vector<2x128xbf16>
    %cst_242 = arith.constant dense<0.000000e+00> : vector<8x128xf32>
    %569 = tpu.matmul %566, %568, %cst_242 {dimension_numbers = #tpu.dot_dimension_numbers<[1], [0], [0], [1], [0, 0, 1, 1], [], []>} : vector<8x2xbf16>, vector<2x128xbf16>, vector<8x128xf32> -> vector<8x128xf32>
    %c1_243 = arith.constant 1 : index
    %c0_244 = arith.constant 0 : index
    %570 = vector.load %arg6[%c1_243, %c0_244] : memref<2x128xf32, #tpu.memory_space<vmem>>, vector<1x128xf32>
    %571 = vector.shape_cast %570 : vector<1x128xf32> to vector<128xf32>
    %572 = vector.shape_cast %571 : vector<128xf32> to vector<1x128xf32>
    %573 = vector.broadcast %572 : vector<1x128xf32> to vector<8x128xf32>
    %574 = arith.addf %569, %573 : vector<8x128xf32>
    %cst_245 = arith.constant 0.000000e+00 : f32
    %575 = vector.broadcast %cst_245 : f32 to vector<8x128xf32>
    %576 = arith.maximumf %574, %575 : vector<8x128xf32>
    %577 = arith.truncf %576 : vector<8x128xf32> to vector<8x128xbf16>
    %c1_246 = arith.constant 1 : index
    %c0_247 = arith.constant 0 : index
    %c0_248 = arith.constant 0 : index
    %c0_249 = arith.constant 0 : index
    %578 = vector.load %arg7[%c1_246, %c0_247, %c0_248, %c0_249] : memref<2x4x128x128xbf16, #tpu.memory_space<vmem>>, vector<1x1x128x128xbf16>
    %579 = vector.shape_cast %578 : vector<1x1x128x128xbf16> to vector<128x128xbf16>
    %cst_250 = arith.constant dense<0.000000e+00> : vector<8x128xf32>
    %580 = tpu.matmul %577, %579, %cst_250 {dimension_numbers = #tpu.dot_dimension_numbers<[1], [0], [0], [1], [0, 0, 1, 1], [], []>} : vector<8x128xbf16>, vector<128x128xbf16>, vector<8x128xf32> -> vector<8x128xf32>
    %c1_251 = arith.constant 1 : index
    %c0_252 = arith.constant 0 : index
    %c0_253 = arith.constant 0 : index
    %581 = vector.load %arg8[%c1_251, %c0_252, %c0_253] : memref<2x4x128xf32, #tpu.memory_space<vmem>>, vector<1x1x128xf32>
    %582 = vector.shape_cast %581 : vector<1x1x128xf32> to vector<128xf32>
    %583 = vector.shape_cast %582 : vector<128xf32> to vector<1x128xf32>
    %584 = vector.broadcast %583 : vector<1x128xf32> to vector<8x128xf32>
    %585 = arith.addf %580, %584 : vector<8x128xf32>
    %cst_254 = arith.constant 0.000000e+00 : f32
    %586 = vector.broadcast %cst_254 : f32 to vector<8x128xf32>
    %587 = arith.maximumf %585, %586 : vector<8x128xf32>
    %588 = arith.truncf %587 : vector<8x128xf32> to vector<8x128xbf16>
    %c1_255 = arith.constant 1 : index
    %c1_256 = arith.constant 1 : index
    %c0_257 = arith.constant 0 : index
    %c0_258 = arith.constant 0 : index
    %589 = vector.load %arg7[%c1_255, %c1_256, %c0_257, %c0_258] : memref<2x4x128x128xbf16, #tpu.memory_space<vmem>>, vector<1x1x128x128xbf16>
    %590 = vector.shape_cast %589 : vector<1x1x128x128xbf16> to vector<128x128xbf16>
    %cst_259 = arith.constant dense<0.000000e+00> : vector<8x128xf32>
    %591 = tpu.matmul %588, %590, %cst_259 {dimension_numbers = #tpu.dot_dimension_numbers<[1], [0], [0], [1], [0, 0, 1, 1], [], []>} : vector<8x128xbf16>, vector<128x128xbf16>, vector<8x128xf32> -> vector<8x128xf32>
    %c1_260 = arith.constant 1 : index
    %c1_261 = arith.constant 1 : index
    %c0_262 = arith.constant 0 : index
    %592 = vector.load %arg8[%c1_260, %c1_261, %c0_262] : memref<2x4x128xf32, #tpu.memory_space<vmem>>, vector<1x1x128xf32>
    %593 = vector.shape_cast %592 : vector<1x1x128xf32> to vector<128xf32>
    %594 = vector.shape_cast %593 : vector<128xf32> to vector<1x128xf32>
    %595 = vector.broadcast %594 : vector<1x128xf32> to vector<8x128xf32>
    %596 = arith.addf %591, %595 : vector<8x128xf32>
    %597 = arith.addf %574, %596 : vector<8x128xf32>
    %cst_263 = arith.constant 0.000000e+00 : f32
    %598 = vector.broadcast %cst_263 : f32 to vector<8x128xf32>
    %599 = arith.maximumf %597, %598 : vector<8x128xf32>
    %600 = arith.truncf %599 : vector<8x128xf32> to vector<8x128xbf16>
    %c1_264 = arith.constant 1 : index
    %c2_265 = arith.constant 2 : index
    %c0_266 = arith.constant 0 : index
    %c0_267 = arith.constant 0 : index
    %601 = vector.load %arg7[%c1_264, %c2_265, %c0_266, %c0_267] : memref<2x4x128x128xbf16, #tpu.memory_space<vmem>>, vector<1x1x128x128xbf16>
    %602 = vector.shape_cast %601 : vector<1x1x128x128xbf16> to vector<128x128xbf16>
    %cst_268 = arith.constant dense<0.000000e+00> : vector<8x128xf32>
    %603 = tpu.matmul %600, %602, %cst_268 {dimension_numbers = #tpu.dot_dimension_numbers<[1], [0], [0], [1], [0, 0, 1, 1], [], []>} : vector<8x128xbf16>, vector<128x128xbf16>, vector<8x128xf32> -> vector<8x128xf32>
    %c1_269 = arith.constant 1 : index
    %c2_270 = arith.constant 2 : index
    %c0_271 = arith.constant 0 : index
    %604 = vector.load %arg8[%c1_269, %c2_270, %c0_271] : memref<2x4x128xf32, #tpu.memory_space<vmem>>, vector<1x1x128xf32>
    %605 = vector.shape_cast %604 : vector<1x1x128xf32> to vector<128xf32>
    %606 = vector.shape_cast %605 : vector<128xf32> to vector<1x128xf32>
    %607 = vector.broadcast %606 : vector<1x128xf32> to vector<8x128xf32>
    %608 = arith.addf %603, %607 : vector<8x128xf32>
    %cst_272 = arith.constant 0.000000e+00 : f32
    %609 = vector.broadcast %cst_272 : f32 to vector<8x128xf32>
    %610 = arith.maximumf %608, %609 : vector<8x128xf32>
    %611 = arith.truncf %610 : vector<8x128xf32> to vector<8x128xbf16>
    %c1_273 = arith.constant 1 : index
    %c3_274 = arith.constant 3 : index
    %c0_275 = arith.constant 0 : index
    %c0_276 = arith.constant 0 : index
    %612 = vector.load %arg7[%c1_273, %c3_274, %c0_275, %c0_276] : memref<2x4x128x128xbf16, #tpu.memory_space<vmem>>, vector<1x1x128x128xbf16>
    %613 = vector.shape_cast %612 : vector<1x1x128x128xbf16> to vector<128x128xbf16>
    %cst_277 = arith.constant dense<0.000000e+00> : vector<8x128xf32>
    %614 = tpu.matmul %611, %613, %cst_277 {dimension_numbers = #tpu.dot_dimension_numbers<[1], [0], [0], [1], [0, 0, 1, 1], [], []>} : vector<8x128xbf16>, vector<128x128xbf16>, vector<8x128xf32> -> vector<8x128xf32>
    %c1_278 = arith.constant 1 : index
    %c3_279 = arith.constant 3 : index
    %c0_280 = arith.constant 0 : index
    %615 = vector.load %arg8[%c1_278, %c3_279, %c0_280] : memref<2x4x128xf32, #tpu.memory_space<vmem>>, vector<1x1x128xf32>
    %616 = vector.shape_cast %615 : vector<1x1x128xf32> to vector<128xf32>
    %617 = vector.shape_cast %616 : vector<128xf32> to vector<1x128xf32>
    %618 = vector.broadcast %617 : vector<1x128xf32> to vector<8x128xf32>
    %619 = arith.addf %614, %618 : vector<8x128xf32>
    %620 = arith.addf %597, %619 : vector<8x128xf32>
    %621 = arith.truncf %620 : vector<8x128xf32> to vector<8x128xbf16>
    %c1_281 = arith.constant 1 : index
    %c0_282 = arith.constant 0 : index
    %c0_283 = arith.constant 0 : index
    %c0_284 = arith.constant 0 : index
    %622 = vector.load %arg9[%c1_281, %c0_282, %c0_283, %c0_284] : memref<2x2x128x23xbf16, #tpu.memory_space<vmem>>, vector<1x1x128x23xbf16>
    %623 = vector.shape_cast %622 : vector<1x1x128x23xbf16> to vector<128x23xbf16>
    %cst_285 = arith.constant dense<0.000000e+00> : vector<8x23xf32>
    %624 = tpu.matmul %621, %623, %cst_285 {dimension_numbers = #tpu.dot_dimension_numbers<[1], [0], [0], [1], [0, 0, 1, 1], [], []>} : vector<8x128xbf16>, vector<128x23xbf16>, vector<8x23xf32> -> vector<8x23xf32>
    %c1_286 = arith.constant 1 : index
    %c0_287 = arith.constant 0 : index
    %c0_288 = arith.constant 0 : index
    %625 = vector.load %arg10[%c1_286, %c0_287, %c0_288] : memref<2x2x23xf32, #tpu.memory_space<vmem>>, vector<1x1x23xf32>
    %626 = vector.shape_cast %625 : vector<1x1x23xf32> to vector<23xf32>
    %627 = vector.shape_cast %626 : vector<23xf32> to vector<1x23xf32>
    %628 = vector.broadcast %627 : vector<1x23xf32> to vector<8x23xf32>
    %629 = arith.addf %624, %628 : vector<8x23xf32>
    %630 = vector.extract_strided_slice %629 {offsets = [0, 0], sizes = [8, 8], strides = [1, 1]} : vector<8x23xf32> to vector<8x8xf32>
    %cst_289 = arith.constant 0.0883883461 : f32
    %631 = vector.broadcast %cst_289 : f32 to vector<8x8xf32>
    %632 = arith.mulf %630, %631 : vector<8x8xf32>
    %633 = vector.extract_strided_slice %629 {offsets = [0, 8], sizes = [8, 8], strides = [1, 1]} : vector<8x23xf32> to vector<8x8xf32>
    %cst_290 = arith.constant 0.0883883461 : f32
    %634 = vector.broadcast %cst_290 : f32 to vector<8x8xf32>
    %635 = arith.mulf %633, %634 : vector<8x8xf32>
    %636 = vector.extract_strided_slice %629 {offsets = [0, 16], sizes = [8, 7], strides = [1, 1]} : vector<8x23xf32> to vector<8x7xf32>
    %637 = vector.extract_strided_slice %560 {offsets = [0, 0], sizes = [8, 1], strides = [1, 1]} : vector<8x2xf32> to vector<8x1xf32>
    %cst_291 = arith.constant -3.000000e+00 : f32
    %638 = vector.broadcast %cst_291 : f32 to vector<8x1xf32>
    %639 = arith.cmpf oge, %637, %638 : vector<8x1xf32>
    %cst_292 = arith.constant 3.000000e+00 : f32
    %640 = vector.broadcast %cst_292 : f32 to vector<8x1xf32>
    %641 = arith.cmpf ole, %637, %640 : vector<8x1xf32>
    %642 = arith.andi %639, %641 : vector<8x1xi1>
    %cst_293 = arith.constant -3.000000e+00 : f32
    %cst_294 = arith.constant 3.000000e+00 : f32
    %643 = vector.broadcast %cst_293 : f32 to vector<8x1xf32>
    %644 = arith.maximumf %643, %637 : vector<8x1xf32>
    %645 = vector.broadcast %cst_294 : f32 to vector<8x1xf32>
    %646 = arith.minimumf %645, %644 : vector<8x1xf32>
    %cst_295 = arith.constant dense<0xFF800000> : vector<8xf32>
    %647 = vector.multi_reduction <maximumf>, %632, %cst_295 [1] : vector<8x8xf32> to vector<8xf32>
    %648 = vector.shape_cast %647 : vector<8xf32> to vector<8x1xf32>
    %649 = vector.broadcast %648 : vector<8x1xf32> to vector<8x8xf32>
    %650 = arith.subf %632, %649 : vector<8x8xf32>
    %651 = math.exp %650 : vector<8x8xf32>
    %cst_296 = arith.constant dense<0.000000e+00> : vector<8xf32>
    %652 = vector.multi_reduction <add>, %651, %cst_296 [1] : vector<8x8xf32> to vector<8xf32>
    %653 = vector.shape_cast %652 : vector<8xf32> to vector<8x1xf32>
    %654 = tpu.reciprocal %653 {approx = true} : vector<8x1xf32> -> vector<8x1xf32>
    %655 = vector.broadcast %654 : vector<8x1xf32> to vector<8x8xf32>
    %656 = arith.mulf %651, %655 : vector<8x8xf32>
    %cst_297 = arith.constant 0.991999983 : f32
    %657 = vector.broadcast %cst_297 : f32 to vector<8x8xf32>
    %658 = arith.mulf %657, %656 : vector<8x8xf32>
    %cst_298 = arith.constant 1.000000e-03 : f32
    %659 = vector.broadcast %cst_298 : f32 to vector<8x8xf32>
    %660 = arith.addf %659, %658 : vector<8x8xf32>
    %cst_299 = arith.constant dense<0xFF800000> : vector<8xf32>
    %661 = vector.multi_reduction <maximumf>, %635, %cst_299 [1] : vector<8x8xf32> to vector<8xf32>
    %662 = vector.shape_cast %661 : vector<8xf32> to vector<8x1xf32>
    %663 = vector.broadcast %662 : vector<8x1xf32> to vector<8x8xf32>
    %664 = arith.subf %635, %663 : vector<8x8xf32>
    %665 = math.exp %664 : vector<8x8xf32>
    %cst_300 = arith.constant dense<0.000000e+00> : vector<8xf32>
    %666 = vector.multi_reduction <add>, %665, %cst_300 [1] : vector<8x8xf32> to vector<8xf32>
    %667 = vector.shape_cast %666 : vector<8xf32> to vector<8x1xf32>
    %668 = tpu.reciprocal %667 {approx = true} : vector<8x1xf32> -> vector<8x1xf32>
    %669 = vector.broadcast %668 : vector<8x1xf32> to vector<8x8xf32>
    %670 = arith.mulf %665, %669 : vector<8x8xf32>
    %cst_301 = arith.constant 0.991999983 : f32
    %671 = vector.broadcast %cst_301 : f32 to vector<8x8xf32>
    %672 = arith.mulf %671, %670 : vector<8x8xf32>
    %cst_302 = arith.constant 1.000000e-03 : f32
    %673 = vector.broadcast %cst_302 : f32 to vector<8x8xf32>
    %674 = arith.addf %673, %672 : vector<8x8xf32>
    %cst_303 = arith.constant dense<0.000000e+00> : vector<8x8xf32>
    %675 = tpu.matmul %660, %4, %cst_303 {dimension_numbers = #tpu.dot_dimension_numbers<[1], [0], [0], [1], [0, 0, 1, 1], [], []>} : vector<8x8xf32>, vector<8x8xf32>, vector<8x8xf32> -> vector<8x8xf32>
    %cst_304 = arith.constant 6.000000e+00 : f32
    %676 = vector.broadcast %cst_304 : f32 to vector<8x8xf32>
    %677 = arith.mulf %676, %675 : vector<8x8xf32>
    %cst_305 = arith.constant -3.000000e+00 : f32
    %678 = vector.broadcast %cst_305 : f32 to vector<8x8xf32>
    %679 = arith.addf %677, %678 : vector<8x8xf32>
    %cst_306 = arith.constant dense<0.000000e+00> : vector<8x8xf32>
    %680 = tpu.matmul %674, %4, %cst_306 {dimension_numbers = #tpu.dot_dimension_numbers<[1], [0], [0], [1], [0, 0, 1, 1], [], []>} : vector<8x8xf32>, vector<8x8xf32>, vector<8x8xf32> -> vector<8x8xf32>
    %cst_307 = arith.constant 6.000000e+00 : f32
    %681 = vector.broadcast %cst_307 : f32 to vector<8x8xf32>
    %682 = arith.mulf %681, %680 : vector<8x8xf32>
    %cst_308 = arith.constant -3.000000e+00 : f32
    %683 = vector.broadcast %cst_308 : f32 to vector<8x8xf32>
    %684 = arith.addf %682, %683 : vector<8x8xf32>
    %cst_309 = arith.constant 3.000000e+00 : f32
    %685 = vector.broadcast %cst_309 : f32 to vector<8x8xf32>
    %686 = arith.select %8, %685, %679 : vector<8x8xi1>, vector<8x8xf32>
    %cst_310 = arith.constant 3.000000e+00 : f32
    %687 = vector.broadcast %cst_310 : f32 to vector<8x8xf32>
    %688 = arith.select %8, %687, %684 : vector<8x8xi1>, vector<8x8xf32>
    %cst_311 = arith.constant 9.99999997E-7 : f32
    %689 = vector.broadcast %cst_311 : f32 to vector<8x8xf32>
    %690 = arith.addf %688, %689 : vector<8x8xf32>
    %691 = arith.select %8, %690, %688 : vector<8x8xi1>, vector<8x8xf32>
    %692 = vector.broadcast %646 : vector<8x1xf32> to vector<8x8xf32>
    %693 = arith.cmpf oge, %692, %691 : vector<8x8xf32>
    %694 = arith.extui %693 : vector<8x8xi1> to vector<8x8xi32>
    %cst_312 = arith.constant dense<0> : vector<8xi32>
    %695 = vector.multi_reduction <add>, %694, %cst_312 [1] : vector<8x8xi32> to vector<8xi32>
    %696 = vector.shape_cast %695 : vector<8xi32> to vector<8x1xi32>
    %697 = vector.broadcast %696 : vector<8x1xi32> to vector<8x8xi32>
    %698 = arith.cmpi eq, %697, %5 : vector<8x8xi32>
    %c1_i32_313 = arith.constant 1 : i32
    %699 = vector.broadcast %c1_i32_313 : i32 to vector<8x1xi32>
    %700 = arith.subi %696, %699 : vector<8x1xi32>
    %701 = vector.broadcast %700 : vector<8x1xi32> to vector<8x8xi32>
    %702 = arith.cmpi eq, %701, %5 : vector<8x8xi32>
    %c0_i32_314 = arith.constant 0 : i32
    %703 = vector.broadcast %c0_i32_314 : i32 to vector<8x1xi32>
    %704 = arith.cmpi eq, %696, %703 : vector<8x1xi32>
    %cst_315 = arith.constant 0.000000e+00 : f32
    %705 = vector.broadcast %cst_315 : f32 to vector<8x8xf32>
    %706 = arith.select %698, %686, %705 : vector<8x8xi1>, vector<8x8xf32>
    %cst_316 = arith.constant dense<0.000000e+00> : vector<8xf32>
    %707 = vector.multi_reduction <add>, %706, %cst_316 [1] : vector<8x8xf32> to vector<8xf32>
    %708 = vector.shape_cast %707 : vector<8xf32> to vector<8x1xf32>
    %cst_317 = arith.constant 0.000000e+00 : f32
    %709 = vector.broadcast %cst_317 : f32 to vector<8x8xf32>
    %710 = arith.select %702, %686, %709 : vector<8x8xi1>, vector<8x8xf32>
    %cst_318 = arith.constant dense<0.000000e+00> : vector<8xf32>
    %711 = vector.multi_reduction <add>, %710, %cst_318 [1] : vector<8x8xf32> to vector<8xf32>
    %712 = vector.shape_cast %711 : vector<8xf32> to vector<8x1xf32>
    %cst_319 = arith.constant -3.000000e+00 : f32
    %713 = vector.broadcast %cst_319 : f32 to vector<8x1xf32>
    %714 = arith.select %704, %713, %712 : vector<8x1xi1>, vector<8x1xf32>
    %cst_320 = arith.constant 0.000000e+00 : f32
    %715 = vector.broadcast %cst_320 : f32 to vector<8x8xf32>
    %716 = arith.select %698, %688, %715 : vector<8x8xi1>, vector<8x8xf32>
    %cst_321 = arith.constant dense<0.000000e+00> : vector<8xf32>
    %717 = vector.multi_reduction <add>, %716, %cst_321 [1] : vector<8x8xf32> to vector<8xf32>
    %718 = vector.shape_cast %717 : vector<8xf32> to vector<8x1xf32>
    %cst_322 = arith.constant 0.000000e+00 : f32
    %719 = vector.broadcast %cst_322 : f32 to vector<8x8xf32>
    %720 = arith.select %702, %688, %719 : vector<8x8xi1>, vector<8x8xf32>
    %cst_323 = arith.constant dense<0.000000e+00> : vector<8xf32>
    %721 = vector.multi_reduction <add>, %720, %cst_323 [1] : vector<8x8xf32> to vector<8xf32>
    %722 = vector.shape_cast %721 : vector<8xf32> to vector<8x1xf32>
    %cst_324 = arith.constant -3.000000e+00 : f32
    %723 = vector.broadcast %cst_324 : f32 to vector<8x1xf32>
    %724 = arith.select %704, %723, %722 : vector<8x1xi1>, vector<8x1xf32>
    %725 = arith.subf %708, %714 : vector<8x1xf32>
    %726 = arith.subf %718, %724 : vector<8x1xf32>
    %727 = tpu.reciprocal %725 {approx = true} : vector<8x1xf32> -> vector<8x1xf32>
    %728 = arith.mulf %726, %727 : vector<8x1xf32>
    %cst_325 = arith.constant 0.000000e+00 : f32
    %729 = vector.broadcast %cst_325 : f32 to vector<8x7xf32>
    %730 = arith.maximumf %636, %729 : vector<8x7xf32>
    %731 = math.absf %636 : vector<8x7xf32>
    %cst_326 = arith.constant 0.000000e+00 : f32
    %732 = vector.broadcast %cst_326 : f32 to vector<8x7xf32>
    %733 = arith.subf %732, %731 : vector<8x7xf32>
    %734 = math.exp %733 : vector<8x7xf32>
    %cst_327 = arith.constant 1.000000e+00 : f32
    %735 = vector.broadcast %cst_327 : f32 to vector<8x7xf32>
    %736 = arith.addf %735, %734 : vector<8x7xf32>
    %737 = math.log %736 : vector<8x7xf32>
    %738 = arith.addf %730, %737 : vector<8x7xf32>
    %cst_328 = arith.constant 1.000000e-03 : f32
    %739 = vector.broadcast %cst_328 : f32 to vector<8x7xf32>
    %740 = arith.addf %739, %738 : vector<8x7xf32>
    %c1_i32_329 = arith.constant 1 : i32
    %741 = vector.broadcast %c1_i32_329 : i32 to vector<8x1xi32>
    %742 = arith.subi %696, %741 : vector<8x1xi32>
    %743 = vector.broadcast %742 : vector<8x1xi32> to vector<8x7xi32>
    %744 = arith.cmpi eq, %743, %6 : vector<8x7xi32>
    %cst_330 = arith.constant 0.000000e+00 : f32
    %745 = vector.broadcast %cst_330 : f32 to vector<8x7xf32>
    %746 = arith.select %744, %740, %745 : vector<8x7xi1>, vector<8x7xf32>
    %cst_331 = arith.constant dense<0.000000e+00> : vector<8xf32>
    %747 = vector.multi_reduction <add>, %746, %cst_331 [1] : vector<8x7xf32> to vector<8xf32>
    %748 = vector.shape_cast %747 : vector<8xf32> to vector<8x1xf32>
    %cst_332 = arith.constant 1.000000e+00 : f32
    %749 = vector.broadcast %cst_332 : f32 to vector<8x1xf32>
    %750 = arith.select %704, %749, %748 : vector<8x1xi1>, vector<8x1xf32>
    %c7_i32_333 = arith.constant 7 : i32
    %751 = vector.broadcast %c7_i32_333 : i32 to vector<8x1xi32>
    %752 = arith.cmpi eq, %696, %751 : vector<8x1xi32>
    %753 = vector.broadcast %696 : vector<8x1xi32> to vector<8x7xi32>
    %754 = arith.cmpi eq, %753, %6 : vector<8x7xi32>
    %cst_334 = arith.constant 0.000000e+00 : f32
    %755 = vector.broadcast %cst_334 : f32 to vector<8x7xf32>
    %756 = arith.select %754, %740, %755 : vector<8x7xi1>, vector<8x7xf32>
    %cst_335 = arith.constant dense<0.000000e+00> : vector<8xf32>
    %757 = vector.multi_reduction <add>, %756, %cst_335 [1] : vector<8x7xf32> to vector<8xf32>
    %758 = vector.shape_cast %757 : vector<8xf32> to vector<8x1xf32>
    %cst_336 = arith.constant 1.000000e+00 : f32
    %759 = vector.broadcast %cst_336 : f32 to vector<8x1xf32>
    %760 = arith.select %752, %759, %758 : vector<8x1xi1>, vector<8x1xf32>
    %761 = arith.subf %646, %724 : vector<8x1xf32>
    %762 = arith.addf %750, %760 : vector<8x1xf32>
    %cst_337 = arith.constant 2.000000e+00 : f32
    %763 = vector.broadcast %cst_337 : f32 to vector<8x1xf32>
    %764 = arith.mulf %763, %728 : vector<8x1xf32>
    %765 = arith.subf %762, %764 : vector<8x1xf32>
    %766 = arith.mulf %761, %765 : vector<8x1xf32>
    %767 = arith.subf %728, %750 : vector<8x1xf32>
    %768 = arith.mulf %726, %767 : vector<8x1xf32>
    %769 = arith.addf %766, %768 : vector<8x1xf32>
    %770 = arith.mulf %726, %750 : vector<8x1xf32>
    %771 = arith.mulf %761, %765 : vector<8x1xf32>
    %772 = arith.subf %770, %771 : vector<8x1xf32>
    %cst_338 = arith.constant 0.000000e+00 : f32
    %773 = vector.broadcast %cst_338 : f32 to vector<8x1xf32>
    %774 = arith.subf %773, %728 : vector<8x1xf32>
    %775 = arith.mulf %774, %761 : vector<8x1xf32>
    %776 = arith.mulf %772, %772 : vector<8x1xf32>
    %cst_339 = arith.constant 4.000000e+00 : f32
    %777 = vector.broadcast %cst_339 : f32 to vector<8x1xf32>
    %778 = arith.mulf %777, %769 : vector<8x1xf32>
    %779 = arith.mulf %778, %775 : vector<8x1xf32>
    %780 = arith.subf %776, %779 : vector<8x1xf32>
    %cst_340 = arith.constant 0.000000e+00 : f32
    %781 = vector.broadcast %cst_340 : f32 to vector<8x1xf32>
    %782 = arith.maximumf %780, %781 : vector<8x1xf32>
    %cst_341 = arith.constant 2.000000e+00 : f32
    %783 = vector.broadcast %cst_341 : f32 to vector<8x1xf32>
    %784 = arith.mulf %783, %775 : vector<8x1xf32>
    %cst_342 = arith.constant 0.000000e+00 : f32
    %785 = vector.broadcast %cst_342 : f32 to vector<8x1xf32>
    %786 = arith.subf %785, %772 : vector<8x1xf32>
    %787 = math.sqrt %782 : vector<8x1xf32>
    %788 = arith.subf %786, %787 : vector<8x1xf32>
    %789 = tpu.reciprocal %788 {approx = true} : vector<8x1xf32> -> vector<8x1xf32>
    %790 = arith.mulf %784, %789 : vector<8x1xf32>
    %791 = arith.mulf %790, %725 : vector<8x1xf32>
    %792 = arith.addf %791, %714 : vector<8x1xf32>
    %cst_343 = arith.constant 1.000000e+00 : f32
    %793 = vector.broadcast %cst_343 : f32 to vector<8x1xf32>
    %794 = arith.subf %793, %790 : vector<8x1xf32>
    %795 = arith.mulf %790, %794 : vector<8x1xf32>
    %796 = arith.mulf %765, %795 : vector<8x1xf32>
    %797 = arith.addf %728, %796 : vector<8x1xf32>
    %798 = arith.mulf %728, %728 : vector<8x1xf32>
    %799 = arith.mulf %760, %790 : vector<8x1xf32>
    %800 = arith.mulf %799, %790 : vector<8x1xf32>
    %cst_344 = arith.constant 2.000000e+00 : f32
    %801 = vector.broadcast %cst_344 : f32 to vector<8x1xf32>
    %802 = arith.mulf %801, %728 : vector<8x1xf32>
    %803 = arith.mulf %802, %795 : vector<8x1xf32>
    %804 = arith.addf %800, %803 : vector<8x1xf32>
    %cst_345 = arith.constant 1.000000e+00 : f32
    %805 = vector.broadcast %cst_345 : f32 to vector<8x1xf32>
    %806 = arith.subf %805, %790 : vector<8x1xf32>
    %807 = arith.mulf %750, %806 : vector<8x1xf32>
    %cst_346 = arith.constant 1.000000e+00 : f32
    %808 = vector.broadcast %cst_346 : f32 to vector<8x1xf32>
    %809 = arith.subf %808, %790 : vector<8x1xf32>
    %810 = arith.mulf %807, %809 : vector<8x1xf32>
    %811 = arith.addf %804, %810 : vector<8x1xf32>
    %812 = arith.mulf %798, %811 : vector<8x1xf32>
    %813 = math.log %797 : vector<8x1xf32>
    %cst_347 = arith.constant 2.000000e+00 : f32
    %814 = vector.broadcast %cst_347 : f32 to vector<8x1xf32>
    %815 = arith.mulf %814, %813 : vector<8x1xf32>
    %816 = math.log %812 : vector<8x1xf32>
    %817 = arith.subf %815, %816 : vector<8x1xf32>
    %818 = arith.select %642, %792, %637 : vector<8x1xi1>, vector<8x1xf32>
    %cst_348 = arith.constant 0.000000e+00 : f32
    %819 = vector.broadcast %cst_348 : f32 to vector<8x1xf32>
    %820 = arith.select %642, %817, %819 : vector<8x1xi1>, vector<8x1xf32>
    %821 = vector.shape_cast %818 : vector<8x1xf32> to vector<8x1xf32>
    %822 = vector.broadcast %821 : vector<8x1xf32> to vector<8x2xf32>
    %823 = arith.select %11, %822, %564 : vector<8x2xi1>, vector<8x2xf32>
    %824 = arith.addf %565, %820 : vector<8x1xf32>
    %825 = arith.truncf %823 : vector<8x2xf32> to vector<8x2xbf16>
    %c1_349 = arith.constant 1 : index
    %c0_350 = arith.constant 0 : index
    %c0_351 = arith.constant 0 : index
    %826 = vector.load %arg5[%c1_349, %c0_350, %c0_351] : memref<2x2x128xbf16, #tpu.memory_space<vmem>>, vector<1x2x128xbf16>
    %827 = vector.shape_cast %826 : vector<1x2x128xbf16> to vector<2x128xbf16>
    %cst_352 = arith.constant dense<0.000000e+00> : vector<8x128xf32>
    %828 = tpu.matmul %825, %827, %cst_352 {dimension_numbers = #tpu.dot_dimension_numbers<[1], [0], [0], [1], [0, 0, 1, 1], [], []>} : vector<8x2xbf16>, vector<2x128xbf16>, vector<8x128xf32> -> vector<8x128xf32>
    %c1_353 = arith.constant 1 : index
    %c0_354 = arith.constant 0 : index
    %829 = vector.load %arg6[%c1_353, %c0_354] : memref<2x128xf32, #tpu.memory_space<vmem>>, vector<1x128xf32>
    %830 = vector.shape_cast %829 : vector<1x128xf32> to vector<128xf32>
    %831 = vector.shape_cast %830 : vector<128xf32> to vector<1x128xf32>
    %832 = vector.broadcast %831 : vector<1x128xf32> to vector<8x128xf32>
    %833 = arith.addf %828, %832 : vector<8x128xf32>
    %cst_355 = arith.constant 0.000000e+00 : f32
    %834 = vector.broadcast %cst_355 : f32 to vector<8x128xf32>
    %835 = arith.maximumf %833, %834 : vector<8x128xf32>
    %836 = arith.truncf %835 : vector<8x128xf32> to vector<8x128xbf16>
    %c1_356 = arith.constant 1 : index
    %c0_357 = arith.constant 0 : index
    %c0_358 = arith.constant 0 : index
    %c0_359 = arith.constant 0 : index
    %837 = vector.load %arg7[%c1_356, %c0_357, %c0_358, %c0_359] : memref<2x4x128x128xbf16, #tpu.memory_space<vmem>>, vector<1x1x128x128xbf16>
    %838 = vector.shape_cast %837 : vector<1x1x128x128xbf16> to vector<128x128xbf16>
    %cst_360 = arith.constant dense<0.000000e+00> : vector<8x128xf32>
    %839 = tpu.matmul %836, %838, %cst_360 {dimension_numbers = #tpu.dot_dimension_numbers<[1], [0], [0], [1], [0, 0, 1, 1], [], []>} : vector<8x128xbf16>, vector<128x128xbf16>, vector<8x128xf32> -> vector<8x128xf32>
    %c1_361 = arith.constant 1 : index
    %c0_362 = arith.constant 0 : index
    %c0_363 = arith.constant 0 : index
    %840 = vector.load %arg8[%c1_361, %c0_362, %c0_363] : memref<2x4x128xf32, #tpu.memory_space<vmem>>, vector<1x1x128xf32>
    %841 = vector.shape_cast %840 : vector<1x1x128xf32> to vector<128xf32>
    %842 = vector.shape_cast %841 : vector<128xf32> to vector<1x128xf32>
    %843 = vector.broadcast %842 : vector<1x128xf32> to vector<8x128xf32>
    %844 = arith.addf %839, %843 : vector<8x128xf32>
    %cst_364 = arith.constant 0.000000e+00 : f32
    %845 = vector.broadcast %cst_364 : f32 to vector<8x128xf32>
    %846 = arith.maximumf %844, %845 : vector<8x128xf32>
    %847 = arith.truncf %846 : vector<8x128xf32> to vector<8x128xbf16>
    %c1_365 = arith.constant 1 : index
    %c1_366 = arith.constant 1 : index
    %c0_367 = arith.constant 0 : index
    %c0_368 = arith.constant 0 : index
    %848 = vector.load %arg7[%c1_365, %c1_366, %c0_367, %c0_368] : memref<2x4x128x128xbf16, #tpu.memory_space<vmem>>, vector<1x1x128x128xbf16>
    %849 = vector.shape_cast %848 : vector<1x1x128x128xbf16> to vector<128x128xbf16>
    %cst_369 = arith.constant dense<0.000000e+00> : vector<8x128xf32>
    %850 = tpu.matmul %847, %849, %cst_369 {dimension_numbers = #tpu.dot_dimension_numbers<[1], [0], [0], [1], [0, 0, 1, 1], [], []>} : vector<8x128xbf16>, vector<128x128xbf16>, vector<8x128xf32> -> vector<8x128xf32>
    %c1_370 = arith.constant 1 : index
    %c1_371 = arith.constant 1 : index
    %c0_372 = arith.constant 0 : index
    %851 = vector.load %arg8[%c1_370, %c1_371, %c0_372] : memref<2x4x128xf32, #tpu.memory_space<vmem>>, vector<1x1x128xf32>
    %852 = vector.shape_cast %851 : vector<1x1x128xf32> to vector<128xf32>
    %853 = vector.shape_cast %852 : vector<128xf32> to vector<1x128xf32>
    %854 = vector.broadcast %853 : vector<1x128xf32> to vector<8x128xf32>
    %855 = arith.addf %850, %854 : vector<8x128xf32>
    %856 = arith.addf %833, %855 : vector<8x128xf32>
    %cst_373 = arith.constant 0.000000e+00 : f32
    %857 = vector.broadcast %cst_373 : f32 to vector<8x128xf32>
    %858 = arith.maximumf %856, %857 : vector<8x128xf32>
    %859 = arith.truncf %858 : vector<8x128xf32> to vector<8x128xbf16>
    %c1_374 = arith.constant 1 : index
    %c2_375 = arith.constant 2 : index
    %c0_376 = arith.constant 0 : index
    %c0_377 = arith.constant 0 : index
    %860 = vector.load %arg7[%c1_374, %c2_375, %c0_376, %c0_377] : memref<2x4x128x128xbf16, #tpu.memory_space<vmem>>, vector<1x1x128x128xbf16>
    %861 = vector.shape_cast %860 : vector<1x1x128x128xbf16> to vector<128x128xbf16>
    %cst_378 = arith.constant dense<0.000000e+00> : vector<8x128xf32>
    %862 = tpu.matmul %859, %861, %cst_378 {dimension_numbers = #tpu.dot_dimension_numbers<[1], [0], [0], [1], [0, 0, 1, 1], [], []>} : vector<8x128xbf16>, vector<128x128xbf16>, vector<8x128xf32> -> vector<8x128xf32>
    %c1_379 = arith.constant 1 : index
    %c2_380 = arith.constant 2 : index
    %c0_381 = arith.constant 0 : index
    %863 = vector.load %arg8[%c1_379, %c2_380, %c0_381] : memref<2x4x128xf32, #tpu.memory_space<vmem>>, vector<1x1x128xf32>
    %864 = vector.shape_cast %863 : vector<1x1x128xf32> to vector<128xf32>
    %865 = vector.shape_cast %864 : vector<128xf32> to vector<1x128xf32>
    %866 = vector.broadcast %865 : vector<1x128xf32> to vector<8x128xf32>
    %867 = arith.addf %862, %866 : vector<8x128xf32>
    %cst_382 = arith.constant 0.000000e+00 : f32
    %868 = vector.broadcast %cst_382 : f32 to vector<8x128xf32>
    %869 = arith.maximumf %867, %868 : vector<8x128xf32>
    %870 = arith.truncf %869 : vector<8x128xf32> to vector<8x128xbf16>
    %c1_383 = arith.constant 1 : index
    %c3_384 = arith.constant 3 : index
    %c0_385 = arith.constant 0 : index
    %c0_386 = arith.constant 0 : index
    %871 = vector.load %arg7[%c1_383, %c3_384, %c0_385, %c0_386] : memref<2x4x128x128xbf16, #tpu.memory_space<vmem>>, vector<1x1x128x128xbf16>
    %872 = vector.shape_cast %871 : vector<1x1x128x128xbf16> to vector<128x128xbf16>
    %cst_387 = arith.constant dense<0.000000e+00> : vector<8x128xf32>
    %873 = tpu.matmul %870, %872, %cst_387 {dimension_numbers = #tpu.dot_dimension_numbers<[1], [0], [0], [1], [0, 0, 1, 1], [], []>} : vector<8x128xbf16>, vector<128x128xbf16>, vector<8x128xf32> -> vector<8x128xf32>
    %c1_388 = arith.constant 1 : index
    %c3_389 = arith.constant 3 : index
    %c0_390 = arith.constant 0 : index
    %874 = vector.load %arg8[%c1_388, %c3_389, %c0_390] : memref<2x4x128xf32, #tpu.memory_space<vmem>>, vector<1x1x128xf32>
    %875 = vector.shape_cast %874 : vector<1x1x128xf32> to vector<128xf32>
    %876 = vector.shape_cast %875 : vector<128xf32> to vector<1x128xf32>
    %877 = vector.broadcast %876 : vector<1x128xf32> to vector<8x128xf32>
    %878 = arith.addf %873, %877 : vector<8x128xf32>
    %879 = arith.addf %856, %878 : vector<8x128xf32>
    %880 = arith.truncf %879 : vector<8x128xf32> to vector<8x128xbf16>
    %c1_391 = arith.constant 1 : index
    %c1_392 = arith.constant 1 : index
    %c0_393 = arith.constant 0 : index
    %c0_394 = arith.constant 0 : index
    %881 = vector.load %arg9[%c1_391, %c1_392, %c0_393, %c0_394] : memref<2x2x128x23xbf16, #tpu.memory_space<vmem>>, vector<1x1x128x23xbf16>
    %882 = vector.shape_cast %881 : vector<1x1x128x23xbf16> to vector<128x23xbf16>
    %cst_395 = arith.constant dense<0.000000e+00> : vector<8x23xf32>
    %883 = tpu.matmul %880, %882, %cst_395 {dimension_numbers = #tpu.dot_dimension_numbers<[1], [0], [0], [1], [0, 0, 1, 1], [], []>} : vector<8x128xbf16>, vector<128x23xbf16>, vector<8x23xf32> -> vector<8x23xf32>
    %c1_396 = arith.constant 1 : index
    %c1_397 = arith.constant 1 : index
    %c0_398 = arith.constant 0 : index
    %884 = vector.load %arg10[%c1_396, %c1_397, %c0_398] : memref<2x2x23xf32, #tpu.memory_space<vmem>>, vector<1x1x23xf32>
    %885 = vector.shape_cast %884 : vector<1x1x23xf32> to vector<23xf32>
    %886 = vector.shape_cast %885 : vector<23xf32> to vector<1x23xf32>
    %887 = vector.broadcast %886 : vector<1x23xf32> to vector<8x23xf32>
    %888 = arith.addf %883, %887 : vector<8x23xf32>
    %889 = vector.extract_strided_slice %888 {offsets = [0, 0], sizes = [8, 8], strides = [1, 1]} : vector<8x23xf32> to vector<8x8xf32>
    %cst_399 = arith.constant 0.0883883461 : f32
    %890 = vector.broadcast %cst_399 : f32 to vector<8x8xf32>
    %891 = arith.mulf %889, %890 : vector<8x8xf32>
    %892 = vector.extract_strided_slice %888 {offsets = [0, 8], sizes = [8, 8], strides = [1, 1]} : vector<8x23xf32> to vector<8x8xf32>
    %cst_400 = arith.constant 0.0883883461 : f32
    %893 = vector.broadcast %cst_400 : f32 to vector<8x8xf32>
    %894 = arith.mulf %892, %893 : vector<8x8xf32>
    %895 = vector.extract_strided_slice %888 {offsets = [0, 16], sizes = [8, 7], strides = [1, 1]} : vector<8x23xf32> to vector<8x7xf32>
    %896 = vector.extract_strided_slice %560 {offsets = [0, 1], sizes = [8, 1], strides = [1, 1]} : vector<8x2xf32> to vector<8x1xf32>
    %cst_401 = arith.constant -3.000000e+00 : f32
    %897 = vector.broadcast %cst_401 : f32 to vector<8x1xf32>
    %898 = arith.cmpf oge, %896, %897 : vector<8x1xf32>
    %cst_402 = arith.constant 3.000000e+00 : f32
    %899 = vector.broadcast %cst_402 : f32 to vector<8x1xf32>
    %900 = arith.cmpf ole, %896, %899 : vector<8x1xf32>
    %901 = arith.andi %898, %900 : vector<8x1xi1>
    %cst_403 = arith.constant -3.000000e+00 : f32
    %cst_404 = arith.constant 3.000000e+00 : f32
    %902 = vector.broadcast %cst_403 : f32 to vector<8x1xf32>
    %903 = arith.maximumf %902, %896 : vector<8x1xf32>
    %904 = vector.broadcast %cst_404 : f32 to vector<8x1xf32>
    %905 = arith.minimumf %904, %903 : vector<8x1xf32>
    %cst_405 = arith.constant dense<0xFF800000> : vector<8xf32>
    %906 = vector.multi_reduction <maximumf>, %891, %cst_405 [1] : vector<8x8xf32> to vector<8xf32>
    %907 = vector.shape_cast %906 : vector<8xf32> to vector<8x1xf32>
    %908 = vector.broadcast %907 : vector<8x1xf32> to vector<8x8xf32>
    %909 = arith.subf %891, %908 : vector<8x8xf32>
    %910 = math.exp %909 : vector<8x8xf32>
    %cst_406 = arith.constant dense<0.000000e+00> : vector<8xf32>
    %911 = vector.multi_reduction <add>, %910, %cst_406 [1] : vector<8x8xf32> to vector<8xf32>
    %912 = vector.shape_cast %911 : vector<8xf32> to vector<8x1xf32>
    %913 = tpu.reciprocal %912 {approx = true} : vector<8x1xf32> -> vector<8x1xf32>
    %914 = vector.broadcast %913 : vector<8x1xf32> to vector<8x8xf32>
    %915 = arith.mulf %910, %914 : vector<8x8xf32>
    %cst_407 = arith.constant 0.991999983 : f32
    %916 = vector.broadcast %cst_407 : f32 to vector<8x8xf32>
    %917 = arith.mulf %916, %915 : vector<8x8xf32>
    %cst_408 = arith.constant 1.000000e-03 : f32
    %918 = vector.broadcast %cst_408 : f32 to vector<8x8xf32>
    %919 = arith.addf %918, %917 : vector<8x8xf32>
    %cst_409 = arith.constant dense<0xFF800000> : vector<8xf32>
    %920 = vector.multi_reduction <maximumf>, %894, %cst_409 [1] : vector<8x8xf32> to vector<8xf32>
    %921 = vector.shape_cast %920 : vector<8xf32> to vector<8x1xf32>
    %922 = vector.broadcast %921 : vector<8x1xf32> to vector<8x8xf32>
    %923 = arith.subf %894, %922 : vector<8x8xf32>
    %924 = math.exp %923 : vector<8x8xf32>
    %cst_410 = arith.constant dense<0.000000e+00> : vector<8xf32>
    %925 = vector.multi_reduction <add>, %924, %cst_410 [1] : vector<8x8xf32> to vector<8xf32>
    %926 = vector.shape_cast %925 : vector<8xf32> to vector<8x1xf32>
    %927 = tpu.reciprocal %926 {approx = true} : vector<8x1xf32> -> vector<8x1xf32>
    %928 = vector.broadcast %927 : vector<8x1xf32> to vector<8x8xf32>
    %929 = arith.mulf %924, %928 : vector<8x8xf32>
    %cst_411 = arith.constant 0.991999983 : f32
    %930 = vector.broadcast %cst_411 : f32 to vector<8x8xf32>
    %931 = arith.mulf %930, %929 : vector<8x8xf32>
    %cst_412 = arith.constant 1.000000e-03 : f32
    %932 = vector.broadcast %cst_412 : f32 to vector<8x8xf32>
    %933 = arith.addf %932, %931 : vector<8x8xf32>
    %cst_413 = arith.constant dense<0.000000e+00> : vector<8x8xf32>
    %934 = tpu.matmul %919, %4, %cst_413 {dimension_numbers = #tpu.dot_dimension_numbers<[1], [0], [0], [1], [0, 0, 1, 1], [], []>} : vector<8x8xf32>, vector<8x8xf32>, vector<8x8xf32> -> vector<8x8xf32>
    %cst_414 = arith.constant 6.000000e+00 : f32
    %935 = vector.broadcast %cst_414 : f32 to vector<8x8xf32>
    %936 = arith.mulf %935, %934 : vector<8x8xf32>
    %cst_415 = arith.constant -3.000000e+00 : f32
    %937 = vector.broadcast %cst_415 : f32 to vector<8x8xf32>
    %938 = arith.addf %936, %937 : vector<8x8xf32>
    %cst_416 = arith.constant dense<0.000000e+00> : vector<8x8xf32>
    %939 = tpu.matmul %933, %4, %cst_416 {dimension_numbers = #tpu.dot_dimension_numbers<[1], [0], [0], [1], [0, 0, 1, 1], [], []>} : vector<8x8xf32>, vector<8x8xf32>, vector<8x8xf32> -> vector<8x8xf32>
    %cst_417 = arith.constant 6.000000e+00 : f32
    %940 = vector.broadcast %cst_417 : f32 to vector<8x8xf32>
    %941 = arith.mulf %940, %939 : vector<8x8xf32>
    %cst_418 = arith.constant -3.000000e+00 : f32
    %942 = vector.broadcast %cst_418 : f32 to vector<8x8xf32>
    %943 = arith.addf %941, %942 : vector<8x8xf32>
    %cst_419 = arith.constant 3.000000e+00 : f32
    %944 = vector.broadcast %cst_419 : f32 to vector<8x8xf32>
    %945 = arith.select %8, %944, %938 : vector<8x8xi1>, vector<8x8xf32>
    %cst_420 = arith.constant 3.000000e+00 : f32
    %946 = vector.broadcast %cst_420 : f32 to vector<8x8xf32>
    %947 = arith.select %8, %946, %943 : vector<8x8xi1>, vector<8x8xf32>
    %cst_421 = arith.constant 9.99999997E-7 : f32
    %948 = vector.broadcast %cst_421 : f32 to vector<8x8xf32>
    %949 = arith.addf %947, %948 : vector<8x8xf32>
    %950 = arith.select %8, %949, %947 : vector<8x8xi1>, vector<8x8xf32>
    %951 = vector.broadcast %905 : vector<8x1xf32> to vector<8x8xf32>
    %952 = arith.cmpf oge, %951, %950 : vector<8x8xf32>
    %953 = arith.extui %952 : vector<8x8xi1> to vector<8x8xi32>
    %cst_422 = arith.constant dense<0> : vector<8xi32>
    %954 = vector.multi_reduction <add>, %953, %cst_422 [1] : vector<8x8xi32> to vector<8xi32>
    %955 = vector.shape_cast %954 : vector<8xi32> to vector<8x1xi32>
    %956 = vector.broadcast %955 : vector<8x1xi32> to vector<8x8xi32>
    %957 = arith.cmpi eq, %956, %5 : vector<8x8xi32>
    %c1_i32_423 = arith.constant 1 : i32
    %958 = vector.broadcast %c1_i32_423 : i32 to vector<8x1xi32>
    %959 = arith.subi %955, %958 : vector<8x1xi32>
    %960 = vector.broadcast %959 : vector<8x1xi32> to vector<8x8xi32>
    %961 = arith.cmpi eq, %960, %5 : vector<8x8xi32>
    %c0_i32_424 = arith.constant 0 : i32
    %962 = vector.broadcast %c0_i32_424 : i32 to vector<8x1xi32>
    %963 = arith.cmpi eq, %955, %962 : vector<8x1xi32>
    %cst_425 = arith.constant 0.000000e+00 : f32
    %964 = vector.broadcast %cst_425 : f32 to vector<8x8xf32>
    %965 = arith.select %957, %945, %964 : vector<8x8xi1>, vector<8x8xf32>
    %cst_426 = arith.constant dense<0.000000e+00> : vector<8xf32>
    %966 = vector.multi_reduction <add>, %965, %cst_426 [1] : vector<8x8xf32> to vector<8xf32>
    %967 = vector.shape_cast %966 : vector<8xf32> to vector<8x1xf32>
    %cst_427 = arith.constant 0.000000e+00 : f32
    %968 = vector.broadcast %cst_427 : f32 to vector<8x8xf32>
    %969 = arith.select %961, %945, %968 : vector<8x8xi1>, vector<8x8xf32>
    %cst_428 = arith.constant dense<0.000000e+00> : vector<8xf32>
    %970 = vector.multi_reduction <add>, %969, %cst_428 [1] : vector<8x8xf32> to vector<8xf32>
    %971 = vector.shape_cast %970 : vector<8xf32> to vector<8x1xf32>
    %cst_429 = arith.constant -3.000000e+00 : f32
    %972 = vector.broadcast %cst_429 : f32 to vector<8x1xf32>
    %973 = arith.select %963, %972, %971 : vector<8x1xi1>, vector<8x1xf32>
    %cst_430 = arith.constant 0.000000e+00 : f32
    %974 = vector.broadcast %cst_430 : f32 to vector<8x8xf32>
    %975 = arith.select %957, %947, %974 : vector<8x8xi1>, vector<8x8xf32>
    %cst_431 = arith.constant dense<0.000000e+00> : vector<8xf32>
    %976 = vector.multi_reduction <add>, %975, %cst_431 [1] : vector<8x8xf32> to vector<8xf32>
    %977 = vector.shape_cast %976 : vector<8xf32> to vector<8x1xf32>
    %cst_432 = arith.constant 0.000000e+00 : f32
    %978 = vector.broadcast %cst_432 : f32 to vector<8x8xf32>
    %979 = arith.select %961, %947, %978 : vector<8x8xi1>, vector<8x8xf32>
    %cst_433 = arith.constant dense<0.000000e+00> : vector<8xf32>
    %980 = vector.multi_reduction <add>, %979, %cst_433 [1] : vector<8x8xf32> to vector<8xf32>
    %981 = vector.shape_cast %980 : vector<8xf32> to vector<8x1xf32>
    %cst_434 = arith.constant -3.000000e+00 : f32
    %982 = vector.broadcast %cst_434 : f32 to vector<8x1xf32>
    %983 = arith.select %963, %982, %981 : vector<8x1xi1>, vector<8x1xf32>
    %984 = arith.subf %967, %973 : vector<8x1xf32>
    %985 = arith.subf %977, %983 : vector<8x1xf32>
    %986 = tpu.reciprocal %984 {approx = true} : vector<8x1xf32> -> vector<8x1xf32>
    %987 = arith.mulf %985, %986 : vector<8x1xf32>
    %cst_435 = arith.constant 0.000000e+00 : f32
    %988 = vector.broadcast %cst_435 : f32 to vector<8x7xf32>
    %989 = arith.maximumf %895, %988 : vector<8x7xf32>
    %990 = math.absf %895 : vector<8x7xf32>
    %cst_436 = arith.constant 0.000000e+00 : f32
    %991 = vector.broadcast %cst_436 : f32 to vector<8x7xf32>
    %992 = arith.subf %991, %990 : vector<8x7xf32>
    %993 = math.exp %992 : vector<8x7xf32>
    %cst_437 = arith.constant 1.000000e+00 : f32
    %994 = vector.broadcast %cst_437 : f32 to vector<8x7xf32>
    %995 = arith.addf %994, %993 : vector<8x7xf32>
    %996 = math.log %995 : vector<8x7xf32>
    %997 = arith.addf %989, %996 : vector<8x7xf32>
    %cst_438 = arith.constant 1.000000e-03 : f32
    %998 = vector.broadcast %cst_438 : f32 to vector<8x7xf32>
    %999 = arith.addf %998, %997 : vector<8x7xf32>
    %c1_i32_439 = arith.constant 1 : i32
    %1000 = vector.broadcast %c1_i32_439 : i32 to vector<8x1xi32>
    %1001 = arith.subi %955, %1000 : vector<8x1xi32>
    %1002 = vector.broadcast %1001 : vector<8x1xi32> to vector<8x7xi32>
    %1003 = arith.cmpi eq, %1002, %6 : vector<8x7xi32>
    %cst_440 = arith.constant 0.000000e+00 : f32
    %1004 = vector.broadcast %cst_440 : f32 to vector<8x7xf32>
    %1005 = arith.select %1003, %999, %1004 : vector<8x7xi1>, vector<8x7xf32>
    %cst_441 = arith.constant dense<0.000000e+00> : vector<8xf32>
    %1006 = vector.multi_reduction <add>, %1005, %cst_441 [1] : vector<8x7xf32> to vector<8xf32>
    %1007 = vector.shape_cast %1006 : vector<8xf32> to vector<8x1xf32>
    %cst_442 = arith.constant 1.000000e+00 : f32
    %1008 = vector.broadcast %cst_442 : f32 to vector<8x1xf32>
    %1009 = arith.select %963, %1008, %1007 : vector<8x1xi1>, vector<8x1xf32>
    %c7_i32_443 = arith.constant 7 : i32
    %1010 = vector.broadcast %c7_i32_443 : i32 to vector<8x1xi32>
    %1011 = arith.cmpi eq, %955, %1010 : vector<8x1xi32>
    %1012 = vector.broadcast %955 : vector<8x1xi32> to vector<8x7xi32>
    %1013 = arith.cmpi eq, %1012, %6 : vector<8x7xi32>
    %cst_444 = arith.constant 0.000000e+00 : f32
    %1014 = vector.broadcast %cst_444 : f32 to vector<8x7xf32>
    %1015 = arith.select %1013, %999, %1014 : vector<8x7xi1>, vector<8x7xf32>
    %cst_445 = arith.constant dense<0.000000e+00> : vector<8xf32>
    %1016 = vector.multi_reduction <add>, %1015, %cst_445 [1] : vector<8x7xf32> to vector<8xf32>
    %1017 = vector.shape_cast %1016 : vector<8xf32> to vector<8x1xf32>
    %cst_446 = arith.constant 1.000000e+00 : f32
    %1018 = vector.broadcast %cst_446 : f32 to vector<8x1xf32>
    %1019 = arith.select %1011, %1018, %1017 : vector<8x1xi1>, vector<8x1xf32>
    %1020 = arith.subf %905, %983 : vector<8x1xf32>
    %1021 = arith.addf %1009, %1019 : vector<8x1xf32>
    %cst_447 = arith.constant 2.000000e+00 : f32
    %1022 = vector.broadcast %cst_447 : f32 to vector<8x1xf32>
    %1023 = arith.mulf %1022, %987 : vector<8x1xf32>
    %1024 = arith.subf %1021, %1023 : vector<8x1xf32>
    %1025 = arith.mulf %1020, %1024 : vector<8x1xf32>
    %1026 = arith.subf %987, %1009 : vector<8x1xf32>
    %1027 = arith.mulf %985, %1026 : vector<8x1xf32>
    %1028 = arith.addf %1025, %1027 : vector<8x1xf32>
    %1029 = arith.mulf %985, %1009 : vector<8x1xf32>
    %1030 = arith.mulf %1020, %1024 : vector<8x1xf32>
    %1031 = arith.subf %1029, %1030 : vector<8x1xf32>
    %cst_448 = arith.constant 0.000000e+00 : f32
    %1032 = vector.broadcast %cst_448 : f32 to vector<8x1xf32>
    %1033 = arith.subf %1032, %987 : vector<8x1xf32>
    %1034 = arith.mulf %1033, %1020 : vector<8x1xf32>
    %1035 = arith.mulf %1031, %1031 : vector<8x1xf32>
    %cst_449 = arith.constant 4.000000e+00 : f32
    %1036 = vector.broadcast %cst_449 : f32 to vector<8x1xf32>
    %1037 = arith.mulf %1036, %1028 : vector<8x1xf32>
    %1038 = arith.mulf %1037, %1034 : vector<8x1xf32>
    %1039 = arith.subf %1035, %1038 : vector<8x1xf32>
    %cst_450 = arith.constant 0.000000e+00 : f32
    %1040 = vector.broadcast %cst_450 : f32 to vector<8x1xf32>
    %1041 = arith.maximumf %1039, %1040 : vector<8x1xf32>
    %cst_451 = arith.constant 2.000000e+00 : f32
    %1042 = vector.broadcast %cst_451 : f32 to vector<8x1xf32>
    %1043 = arith.mulf %1042, %1034 : vector<8x1xf32>
    %cst_452 = arith.constant 0.000000e+00 : f32
    %1044 = vector.broadcast %cst_452 : f32 to vector<8x1xf32>
    %1045 = arith.subf %1044, %1031 : vector<8x1xf32>
    %1046 = math.sqrt %1041 : vector<8x1xf32>
    %1047 = arith.subf %1045, %1046 : vector<8x1xf32>
    %1048 = tpu.reciprocal %1047 {approx = true} : vector<8x1xf32> -> vector<8x1xf32>
    %1049 = arith.mulf %1043, %1048 : vector<8x1xf32>
    %1050 = arith.mulf %1049, %984 : vector<8x1xf32>
    %1051 = arith.addf %1050, %973 : vector<8x1xf32>
    %cst_453 = arith.constant 1.000000e+00 : f32
    %1052 = vector.broadcast %cst_453 : f32 to vector<8x1xf32>
    %1053 = arith.subf %1052, %1049 : vector<8x1xf32>
    %1054 = arith.mulf %1049, %1053 : vector<8x1xf32>
    %1055 = arith.mulf %1024, %1054 : vector<8x1xf32>
    %1056 = arith.addf %987, %1055 : vector<8x1xf32>
    %1057 = arith.mulf %987, %987 : vector<8x1xf32>
    %1058 = arith.mulf %1019, %1049 : vector<8x1xf32>
    %1059 = arith.mulf %1058, %1049 : vector<8x1xf32>
    %cst_454 = arith.constant 2.000000e+00 : f32
    %1060 = vector.broadcast %cst_454 : f32 to vector<8x1xf32>
    %1061 = arith.mulf %1060, %987 : vector<8x1xf32>
    %1062 = arith.mulf %1061, %1054 : vector<8x1xf32>
    %1063 = arith.addf %1059, %1062 : vector<8x1xf32>
    %cst_455 = arith.constant 1.000000e+00 : f32
    %1064 = vector.broadcast %cst_455 : f32 to vector<8x1xf32>
    %1065 = arith.subf %1064, %1049 : vector<8x1xf32>
    %1066 = arith.mulf %1009, %1065 : vector<8x1xf32>
    %cst_456 = arith.constant 1.000000e+00 : f32
    %1067 = vector.broadcast %cst_456 : f32 to vector<8x1xf32>
    %1068 = arith.subf %1067, %1049 : vector<8x1xf32>
    %1069 = arith.mulf %1066, %1068 : vector<8x1xf32>
    %1070 = arith.addf %1063, %1069 : vector<8x1xf32>
    %1071 = arith.mulf %1057, %1070 : vector<8x1xf32>
    %1072 = math.log %1056 : vector<8x1xf32>
    %cst_457 = arith.constant 2.000000e+00 : f32
    %1073 = vector.broadcast %cst_457 : f32 to vector<8x1xf32>
    %1074 = arith.mulf %1073, %1072 : vector<8x1xf32>
    %1075 = math.log %1071 : vector<8x1xf32>
    %1076 = arith.subf %1074, %1075 : vector<8x1xf32>
    %1077 = arith.select %901, %1051, %896 : vector<8x1xi1>, vector<8x1xf32>
    %cst_458 = arith.constant 0.000000e+00 : f32
    %1078 = vector.broadcast %cst_458 : f32 to vector<8x1xf32>
    %1079 = arith.select %901, %1076, %1078 : vector<8x1xi1>, vector<8x1xf32>
    %1080 = vector.shape_cast %1077 : vector<8x1xf32> to vector<8x1xf32>
    %1081 = vector.broadcast %1080 : vector<8x1xf32> to vector<8x2xf32>
    %1082 = arith.select %13, %1081, %823 : vector<8x2xi1>, vector<8x2xf32>
    %1083 = arith.addf %824, %1079 : vector<8x1xf32>
    %1084 = arith.subf %563, %1083 : vector<8x1xf32>
    %c1_459 = arith.constant 1 : index
    %c0_460 = arith.constant 0 : index
    %1085 = vector.load %arg12[%c1_459, %c0_460] : memref<2x2xf32, #tpu.memory_space<vmem>>, vector<1x2xf32>
    %1086 = vector.shape_cast %1085 : vector<1x2xf32> to vector<2xf32>
    %1087 = vector.shape_cast %1086 : vector<2xf32> to vector<1x2xf32>
    %1088 = vector.broadcast %1087 : vector<1x2xf32> to vector<8x2xf32>
    %1089 = arith.subf %1082, %1088 : vector<8x2xf32>
    %1090 = arith.truncf %1089 : vector<8x2xf32> to vector<8x2xbf16>
    %c1_461 = arith.constant 1 : index
    %c0_462 = arith.constant 0 : index
    %c0_463 = arith.constant 0 : index
    %1091 = vector.load %arg11[%c1_461, %c0_462, %c0_463] : memref<2x2x2xbf16, #tpu.memory_space<vmem>>, vector<1x2x2xbf16>
    %1092 = vector.shape_cast %1091 : vector<1x2x2xbf16> to vector<2x2xbf16>
    %cst_464 = arith.constant dense<0.000000e+00> : vector<8x2xf32>
    %1093 = tpu.matmul %1090, %1092, %cst_464 {dimension_numbers = #tpu.dot_dimension_numbers<[1], [0], [0], [1], [0, 0, 1, 1], [], []>} : vector<8x2xbf16>, vector<2x2xbf16>, vector<8x2xf32> -> vector<8x2xf32>
    %c1_465 = arith.constant 1 : index
    %1094 = memref.load %arg13[%c1_465] : memref<2xf32, #tpu.memory_space<smem>>
    %1095 = vector.broadcast %1094 : f32 to vector<8x1xf32>
    %1096 = arith.subf %1084, %1095 : vector<8x1xf32>
    %c0_466 = arith.constant 0 : index
    %c0_467 = arith.constant 0 : index
    %1097 = vector.load %arg14[%c0_466, %c0_467] : memref<8x2xf32, #tpu.memory_space<vmem>>, vector<8x2xf32>
    tpu.vector_store %arg14[%c0_466, %c0_467], %1093 {strides = array<i32>} : memref<8x2xf32, #tpu.memory_space<vmem>>, vector<8x2xf32>,
    %c0_468 = arith.constant 0 : index
    %c0_469 = arith.constant 0 : index
    %1098 = vector.load %arg15[%c0_468, %c0_469] : memref<8x1xf32, #tpu.memory_space<vmem>>, vector<8x1xf32>
    tpu.vector_store %arg15[%c0_468, %c0_469], %1096 {strides = array<i32>} : memref<8x1xf32, #tpu.memory_space<vmem>>, vector<8x1xf32>,
    return
  }
  func.func @transform_0(%arg0: i32) -> (i32, i32) {
    %c0_i32 = arith.constant 0 : i32
    %c0_i32_0 = arith.constant 0 : i32
    return %arg0, %c0_i32 : i32, i32
  }
  func.func @transform_1(%arg0: i32) -> (i32, i32) {
    %c0_i32 = arith.constant 0 : i32
    %c0_i32_0 = arith.constant 0 : i32
    return %arg0, %c0_i32 : i32, i32
  }
  func.func @transform_2(%arg0: i32) -> (i32, i32) {
    %c0_i32 = arith.constant 0 : i32
    %c0_i32_0 = arith.constant 0 : i32
    %c0_i32_1 = arith.constant 0 : i32
    return %c0_i32, %c0_i32_0 : i32, i32
  }
  func.func @transform_3(%arg0: i32) -> (i32, i32) {
    %c0_i32 = arith.constant 0 : i32
    %c0_i32_0 = arith.constant 0 : i32
    %c0_i32_1 = arith.constant 0 : i32
    return %c0_i32, %c0_i32_0 : i32, i32
  }
  func.func @transform_4(%arg0: i32) -> (i32, i32, i32) {
    %c0_i32 = arith.constant 0 : i32
    %c0_i32_0 = arith.constant 0 : i32
    %c0_i32_1 = arith.constant 0 : i32
    %c0_i32_2 = arith.constant 0 : i32
    return %c0_i32, %c0_i32_0, %c0_i32_1 : i32, i32, i32
  }
  func.func @transform_5(%arg0: i32) -> (i32, i32) {
    %c0_i32 = arith.constant 0 : i32
    %c0_i32_0 = arith.constant 0 : i32
    %c0_i32_1 = arith.constant 0 : i32
    return %c0_i32, %c0_i32_0 : i32, i32
  }
  func.func @transform_6(%arg0: i32) -> (i32, i32, i32, i32) {
    %c0_i32 = arith.constant 0 : i32
    %c0_i32_0 = arith.constant 0 : i32
    %c0_i32_1 = arith.constant 0 : i32
    %c0_i32_2 = arith.constant 0 : i32
    %c0_i32_3 = arith.constant 0 : i32
    return %c0_i32, %c0_i32_0, %c0_i32_1, %c0_i32_2 : i32, i32, i32, i32
  }
  func.func @transform_7(%arg0: i32) -> (i32, i32, i32) {
    %c0_i32 = arith.constant 0 : i32
    %c0_i32_0 = arith.constant 0 : i32
    %c0_i32_1 = arith.constant 0 : i32
    %c0_i32_2 = arith.constant 0 : i32
    return %c0_i32, %c0_i32_0, %c0_i32_1 : i32, i32, i32
  }
  func.func @transform_8(%arg0: i32) -> (i32, i32, i32, i32) {
    %c0_i32 = arith.constant 0 : i32
    %c0_i32_0 = arith.constant 0 : i32
    %c0_i32_1 = arith.constant 0 : i32
    %c0_i32_2 = arith.constant 0 : i32
    %c0_i32_3 = arith.constant 0 : i32
    return %c0_i32, %c0_i32_0, %c0_i32_1, %c0_i32_2 : i32, i32, i32, i32
  }
  func.func @transform_9(%arg0: i32) -> (i32, i32, i32) {
    %c0_i32 = arith.constant 0 : i32
    %c0_i32_0 = arith.constant 0 : i32
    %c0_i32_1 = arith.constant 0 : i32
    %c0_i32_2 = arith.constant 0 : i32
    return %c0_i32, %c0_i32_0, %c0_i32_1 : i32, i32, i32
  }
  func.func @transform_10(%arg0: i32) -> (i32, i32, i32) {
    %c0_i32 = arith.constant 0 : i32
    %c0_i32_0 = arith.constant 0 : i32
    %c0_i32_1 = arith.constant 0 : i32
    %c0_i32_2 = arith.constant 0 : i32
    return %c0_i32, %c0_i32_0, %c0_i32_1 : i32, i32, i32
  }
  func.func @transform_11(%arg0: i32) -> (i32, i32) {
    %c0_i32 = arith.constant 0 : i32
    %c0_i32_0 = arith.constant 0 : i32
    %c0_i32_1 = arith.constant 0 : i32
    return %c0_i32, %c0_i32_0 : i32, i32
  }
  func.func @transform_12(%arg0: i32) -> i32 {
    %c0_i32 = arith.constant 0 : i32
    %c0_i32_0 = arith.constant 0 : i32
    return %c0_i32 : i32
  }
  func.func @transform_13(%arg0: i32) -> (i32, i32) {
    %c0_i32 = arith.constant 0 : i32
    %c0_i32_0 = arith.constant 0 : i32
    return %arg0, %c0_i32 : i32, i32
  }
  func.func @transform_14(%arg0: i32) -> (i32, i32) {
    %c0_i32 = arith.constant 0 : i32
    %c0_i32_0 = arith.constant 0 : i32
    return %arg0, %c0_i32 : i32, i32
  }
}

</mosaic_0001>

<llo_original>
// kernel: tpu_custom_call.1
$region0: #{tpu_custom_call.1}
  #allocation0 [shape = 'u32[]', space=smem, size = 0x4, offset = 0x4, fixed_abs, tag = 'smem constant byte address 0x4 - core index']
  #allocation1 [shape = 'u32[144,128]{1,0:T(1,128)}', space=vmem, size = 0x12000, scoped, tag = 'internal scratch']
  %s0 = inlined_call_operand.vmem [shape: f32[8,6], index: 0, kind: input, shape index: {}]
  %s1 = inlined_call_operand.vmem [shape: f32[8,2], index: 1, kind: input, shape index: {}]
  %s2 = inlined_call_operand.vmem [shape: f32[6,2], index: 2, kind: input, shape index: {}]
  %s3 = inlined_call_operand.vmem [shape: f32[6,2], index: 3, kind: input, shape index: {}]
  %s4 = inlined_call_operand.vmem [shape: bf16[2,2,128], index: 4, kind: input, shape index: {}]
  %s5 = inlined_call_operand.vmem [shape: f32[2,128], index: 5, kind: input, shape index: {}]
  %s6 = inlined_call_operand.hbm [shape: bf16[2,4,128,128], index: 6, kind: input, shape index: {}]
  %s7 = inlined_call_operand.vmem [shape: f32[2,4,128], index: 7, kind: input, shape index: {}]
  %s8 = inlined_call_operand.vmem [shape: bf16[2,2,128,23], index: 8, kind: input, shape index: {}]
  %s9 = inlined_call_operand.vmem [shape: f32[2,2,23], index: 9, kind: input, shape index: {}]
  %s10 = inlined_call_operand.vmem [shape: bf16[2,2,2], index: 10, kind: input, shape index: {}]
  %s11 = inlined_call_operand.vmem [shape: f32[2,2], index: 11, kind: input, shape index: {}]
  %s12 = inlined_call_operand.vmem [shape: f32[2], index: 12, kind: input, shape index: {}]
  %s13 = inlined_call_operand.vmem [shape: f32[8,2], index: 13, kind: output, shape index: {0}]
  %s14 = inlined_call_operand.vmem [shape: f32[8,1], index: 14, kind: output, shape index: {1}]
  %15 = xla_tuple %s13, %s14
  %s16 = sld [smem:[#allocation0]]
  $region78: #{tpu_custom_call.1} parent=0
    _
  %s18 = ssub.s32 1, %s16
  %s19 = scalar_select 0, %s18, %s16
  $region1: #{tpu_custom_call.1} parent=0
    #allocation2 [shape = 'u8[262144]{0}', space=vmem, size = 0x40000, scoped, tag = 'input window, operand 6, single buffered']
    #allocation3 [shape = 's32[1]{0}', space=sflag, size = 0x4, scoped, tag = 'scoped memory for tpu_custom_call.1']
    #allocation4 [shape = 's32[1]{0}', space=sflag, size = 0x4, scoped, tag = 'scoped memory for tpu_custom_call.1']
    #allocation5 [shape = 'u8[512]{0}', space=smem, size = 0x200, scoped, tag = 'input window, operand 12, single buffered']
    %20 = vsyncpa [#allocation3], 0
    %21 = vsyncpa [#allocation4], 0
    // Predicated region
    $region2: #{tpu_custom_call.1} parent=1 // pred_check
      _
    $region3: #{tpu_custom_call.1} parent=1 // pred_check_branch
      %23 = sbr.rel (0) target = $region5
    $region4: #{tpu_custom_call.1} parent=1 // pred_region
      _
    $region5: #{tpu_custom_call.1} parent=1 // pred_fallthru
      _
    // Predicated region
    $region6: #{tpu_custom_call.1} parent=1 // pred_check
      _
    $region7: #{tpu_custom_call.1} parent=1 // pred_check_branch
      %25 = sbr.rel (0) target = $region9
    $region8: #{tpu_custom_call.1} parent=1 // pred_region
      _
    $region9: #{tpu_custom_call.1} parent=1 // pred_fallthru
      _
    // Predicated region
    $region10: #{tpu_custom_call.1} parent=1 // pred_check
      _
    $region11: #{tpu_custom_call.1} parent=1 // pred_check_branch
      %27 = sbr.rel (0) target = $region13
    $region12: #{tpu_custom_call.1} parent=1 // pred_region
      _
    $region13: #{tpu_custom_call.1} parent=1 // pred_fallthru
      _
    // Predicated region
    $region14: #{tpu_custom_call.1} parent=1 // pred_check
      _
    $region15: #{tpu_custom_call.1} parent=1 // pred_check_branch
      %29 = sbr.rel (0) target = $region17
    $region16: #{tpu_custom_call.1} parent=1 // pred_region
      _
    $region17: #{tpu_custom_call.1} parent=1 // pred_fallthru
      _
    // Predicated region
    $region18: #{tpu_custom_call.1} parent=1 // pred_check
      _
    $region19: #{tpu_custom_call.1} parent=1 // pred_check_branch
      %31 = sbr.rel (0) target = $region21
    $region20: #{tpu_custom_call.1} parent=1 // pred_region
      _
    $region21: #{tpu_custom_call.1} parent=1 // pred_fallthru
      _
    // Predicated region
    $region22: #{tpu_custom_call.1} parent=1 // pred_check
      _
    $region23: #{tpu_custom_call.1} parent=1 // pred_check_branch
      %33 = sbr.rel (0) target = $region25
    $region24: #{tpu_custom_call.1} parent=1 // pred_region
      _
    $region25: #{tpu_custom_call.1} parent=1 // pred_fallthru
      _
    // Predicated region
    $region26: #{tpu_custom_call.1} parent=1 // pred_check
      _
    $region27: #{tpu_custom_call.1} parent=1 // pred_check_branch
      %35 = sbr.rel (0) target = $region29
    $region28: #{tpu_custom_call.1} parent=1 // pred_region
      %s37 = ssub.s32 8192, 8192
      %38 = vsyncadd [#allocation3], %s37
      %s39 = sshll.u32 [#allocation2], 4
      %s40 = int_to_ptr.vmem [resolvable:$true] %s39
      %45 = dma.hbm_to_vmem [thread:$0]  %s6, 8192, %s40, [#allocation3], 64, 64, 4
    $region29: #{tpu_custom_call.1} parent=1 // pred_fallthru
      _
    // Predicated region
    $region30: #{tpu_custom_call.1} parent=1 // pred_check
      _
    $region31: #{tpu_custom_call.1} parent=1 // pred_check_branch
      %47 = sbr.rel (0) target = $region33
    $region32: #{tpu_custom_call.1} parent=1 // pred_region
      _
    $region33: #{tpu_custom_call.1} parent=1 // pred_fallthru
      _
    // Predicated region
    $region34: #{tpu_custom_call.1} parent=1 // pred_check
      _
    $region35: #{tpu_custom_call.1} parent=1 // pred_check_branch
      %49 = sbr.rel (0) target = $region37
    $region36: #{tpu_custom_call.1} parent=1 // pred_region
      _
    $region37: #{tpu_custom_call.1} parent=1 // pred_fallthru
      _
    // Predicated region
    $region38: #{tpu_custom_call.1} parent=1 // pred_check
      _
    $region39: #{tpu_custom_call.1} parent=1 // pred_check_branch
      %51 = sbr.rel (0) target = $region41
    $region40: #{tpu_custom_call.1} parent=1 // pred_region
      _
    $region41: #{tpu_custom_call.1} parent=1 // pred_fallthru
      _
    // Predicated region
    $region42: #{tpu_custom_call.1} parent=1 // pred_check
      _
    $region43: #{tpu_custom_call.1} parent=1 // pred_check_branch
      %53 = sbr.rel (0) target = $region45
    $region44: #{tpu_custom_call.1} parent=1 // pred_region
      _
    $region45: #{tpu_custom_call.1} parent=1 // pred_fallthru
      _
    // Predicated region
    $region46: #{tpu_custom_call.1} parent=1 // pred_check
      _
    $region47: #{tpu_custom_call.1} parent=1 // pred_check_branch
      %55 = sbr.rel (0) target = $region49
    $region48: #{tpu_custom_call.1} parent=1 // pred_region
      _
    $region49: #{tpu_custom_call.1} parent=1 // pred_fallthru
      _
    // Predicated region
    $region50: #{tpu_custom_call.1} parent=1 // pred_check
      _
    $region51: #{tpu_custom_call.1} parent=1 // pred_check_branch
      %57 = sbr.rel (0) target = $region53
    $region52: #{tpu_custom_call.1} parent=1 // pred_region
      %s59 = ssub.s32 16, 16
      %60 = vsyncadd [#allocation4], %s59
      %s62 = sshll.u32 %s12, 4
      %s63 = int_to_ptr.vmem [resolvable:$true] %s62
      %65 = dma.vmem_to_smem %s63, 16, [#allocation5], [#allocation4]
    $region53: #{tpu_custom_call.1} parent=1 // pred_fallthru
      _
    // Predicated region
    $region54: #{tpu_custom_call.1} parent=1 // pred_check
      _
    $region55: #{tpu_custom_call.1} parent=1 // pred_check_branch
      %67 = sbr.rel (0) target = $region57
    $region56: #{tpu_custom_call.1} parent=1 // pred_region
      %68 = dma.done [#allocation3], 8192
    $region57: #{tpu_custom_call.1} parent=1 // pred_fallthru
      _
    // Predicated region
    $region58: #{tpu_custom_call.1} parent=1 // pred_check
      _
    $region59: #{tpu_custom_call.1} parent=1 // pred_check_branch
      %70 = sbr.rel (0) target = $region61
    $region60: #{tpu_custom_call.1} parent=1 // pred_region
      %71 = dma.done [#allocation4], 16
    $region61: #{tpu_custom_call.1} parent=1 // pred_fallthru
      _
    %72 = sfence
    %v74 = vlaneseq
    %v75 = vshrl.u32 %v74, 7
    %v76 = vlaneseq
    %v77 = vand.u32 %v76, 127
    %vm78 = vcmp.le.s32.totalorder %v75, %v77
    %v79 = vsel %vm78, 1, 0
    %v80 = vcvt.s32.f32 %v79
    %vm81 = vcmp.eq.s32.totalorder %v77, 7
    %vm82 = vcmp.eq.s32.totalorder %v77, 0
    %vm83 = vcmp.eq.s32.totalorder %v77, 1
    %v84 = vld [vmem:[%s0] sm:$0xff]
    %v85 = vld [vmem:[%s1] sm:$0xff]
    %v86 = vld [vmem:[%s2] sm:$0x3f]
    %v87 = vld [vmem:[%s3] sm:$0x3f]
    %vm88 = vcmask 48128
    %v90 = vsel %vm88, %v84, 0
    %vm92 = vcmask 1045504
    %v94 = vsel %vm92, %v87, 0
    %96 = vmatprep.subr.mxu0 0.0
    %97 = vmatpush1.msra.mxu0 %v94
    %98 = vmatprep.subr.mxu0 0.0
    %99 = vmatpush1.msra.mxu0 0.0
    %100 = vmatprep.subr.mxu0 0.0
    %101 = vmatpush1.msra.mxu0 0.0
    %102 = vmatprep.subr.mxu0 0.0
    %103 = vmatpush1.msra.mxu0 0.0
    %104 = vmatprep.subr.mxu0 0.0
    %105 = vmatpush1.msra.mxu0 0.0
    %106 = vmatprep.subr.mxu0 0.0
    %107 = vmatpush1.msra.mxu0 0.0
    %108 = vmatprep.subr.mxu0 0.0
    %109 = vmatpush1.msra.mxu0 0.0
    %110 = vmatprep.subr.mxu0 0.0
    %111 = vmatpush1.msra.mxu0 0.0
    %112 = vmatprep.subr.mxu0 0.0
    %113 = vmatpush1.msra.mxu0 0.0
    %114 = vmatprep.subr.mxu0 0.0
    %115 = vmatpush1.msra.mxu0 0.0
    %116 = vmatprep.subr.mxu0 0.0
    %117 = vmatpush1.msra.mxu0 0.0
    %118 = vmatprep.subr.mxu0 0.0
    %119 = vmatpush1.msra.mxu0 0.0
    %120 = vmatprep.subr.mxu0 0.0
    %121 = vmatpush1.msra.mxu0 0.0
    %122 = vmatprep.subr.mxu0 0.0
    %123 = vmatpush1.msra.mxu0 0.0
    %124 = vmatprep.subr.mxu0 0.0
    %125 = vmatpush1.msra.mxu0 0.0
    %126 = vmatprep.subr.mxu0 0.0
    %127 = vmatpush1.msra.mxu0 0.0
    %128 = vmatprep.subr.mxu0 0.0
    %129 = vmatpush1.msra.mxu0 0.0
    %130 = vmatprep.subr.mxu0 0.0
    %131 = vmatpush1.msra.mxu0 0.0
    %132 = vmatprep.subr.mxu0 0.0
    %133 = vmatpush1.msra.mxu0 0.0
    %134 = vmatprep.subr.mxu0 0.0
    %135 = vmatpush1.msra.mxu0 0.0
    %136 = vmatprep.subr.mxu0 0.0
    %137 = vmatpush1.msra.mxu0 0.0
    %138 = vmatprep.subr.mxu0 0.0
    %139 = vmatpush1.msra.mxu0 0.0
    %140 = vmatprep.subr.mxu0 0.0
    %141 = vmatpush1.msra.mxu0 0.0
    %142 = vmatprep.subr.mxu0 0.0
    %143 = vmatpush1.msra.mxu0 0.0
    %144 = vmatprep.subr.mxu0 0.0
    %145 = vmatpush1.msra.mxu0 0.0
    %146 = vmatprep.subr.mxu0 0.0
    %147 = vmatpush1.msra.mxu0 0.0
    %148 = vmatprep.subr.mxu0 0.0
    %149 = vmatpush1.msra.mxu0 0.0
    %150 = vmatprep.subr.mxu0 0.0
    %151 = vmatpush1.msra.mxu0 0.0
    %152 = vmatprep.subr.mxu0 0.0
    %153 = vmatpush1.msra.mxu0 0.0
    %154 = vmatprep.subr.mxu0 0.0
    %155 = vmatpush1.msra.mxu0 0.0
    %156 = vmatprep.subr.mxu0 0.0
    %157 = vmatpush1.msra.mxu0 0.0
    %158 = vmatprep.subr.mxu0 0.0
    %159 = vmatpush1.msra.mxu0 0.0
    %160 = vmatprep.mubr.f32.mxu0 0.0
    %161 = vmatmul.mubr.f32.gmra.mrb[0].mxu0 %v90
    %v162 = vpop.f32.mrb[0].mxu0
    %v163 = vadd.f32 0.0, %v162
    %v164 = vpop.f32.mrb[0].mxu0
    %165 = vdwg.mxu0
    %v166 = vmul.f32 %v163, 1.442695
    %v167 = vpow.pop %v166
    %v168 = vmul.f32 %v167, %v85
    %v170 = vsel %vm92, %v86, 0
    %172 = vmatprep.subr.mxu0 0.0
    %173 = vmatpush1.msra.mxu0 %v170
    %174 = vmatprep.subr.mxu0 0.0
    %175 = vmatpush1.msra.mxu0 0.0
    %176 = vmatprep.subr.mxu0 0.0
    %177 = vmatpush1.msra.mxu0 0.0
    %178 = vmatprep.subr.mxu0 0.0
    %179 = vmatpush1.msra.mxu0 0.0
    %180 = vmatprep.subr.mxu0 0.0
    %181 = vmatpush1.msra.mxu0 0.0
    %182 = vmatprep.subr.mxu0 0.0
    %183 = vmatpush1.msra.mxu0 0.0
    %184 = vmatprep.subr.mxu0 0.0
    %185 = vmatpush1.msra.mxu0 0.0
    %186 = vmatprep.subr.mxu0 0.0
    %187 = vmatpush1.msra.mxu0 0.0
    %188 = vmatprep.subr.mxu0 0.0
    %189 = vmatpush1.msra.mxu0 0.0
    %190 = vmatprep.subr.mxu0 0.0
    %191 = vmatpush1.msra.mxu0 0.0
    %192 = vmatprep.subr.mxu0 0.0
    %193 = vmatpush1.msra.mxu0 0.0
    %194 = vmatprep.subr.mxu0 0.0
    %195 = vmatpush1.msra.mxu0 0.0
    %196 = vmatprep.subr.mxu0 0.0
    %197 = vmatpush1.msra.mxu0 0.0
    %198 = vmatprep.subr.mxu0 0.0
    %199 = vmatpush1.msra.mxu0 0.0
    %200 = vmatprep.subr.mxu0 0.0
    %201 = vmatpush1.msra.mxu0 0.0
    %202 = vmatprep.subr.mxu0 0.0
    %203 = vmatpush1.msra.mxu0 0.0
    %204 = vmatprep.subr.mxu0 0.0
    %205 = vmatpush1.msra.mxu0 0.0
    %206 = vmatprep.subr.mxu0 0.0
    %207 = vmatpush1.msra.mxu0 0.0
    %208 = vmatprep.subr.mxu0 0.0
    %209 = vmatpush1.msra.mxu0 0.0
    %210 = vmatprep.subr.mxu0 0.0
    %211 = vmatpush1.msra.mxu0 0.0
    %212 = vmatprep.subr.mxu0 0.0
    %213 = vmatpush1.msra.mxu0 0.0
    %214 = vmatprep.subr.mxu0 0.0
    %215 = vmatpush1.msra.mxu0 0.0
    %216 = vmatprep.subr.mxu0 0.0
    %217 = vmatpush1.msra.mxu0 0.0
    %218 = vmatprep.subr.mxu0 0.0
    %219 = vmatpush1.msra.mxu0 0.0
    %220 = vmatprep.subr.mxu0 0.0
    %221 = vmatpush1.msra.mxu0 0.0
    %222 = vmatprep.subr.mxu0 0.0
    %223 = vmatpush1.msra.mxu0 0.0
    %224 = vmatprep.subr.mxu0 0.0
    %225 = vmatpush1.msra.mxu0 0.0
    %226 = vmatprep.subr.mxu0 0.0
    %227 = vmatpush1.msra.mxu0 0.0
    %228 = vmatprep.subr.mxu0 0.0
    %229 = vmatpush1.msra.mxu0 0.0
    %230 = vmatprep.subr.mxu0 0.0
    %231 = vmatpush1.msra.mxu0 0.0
    %232 = vmatprep.subr.mxu0 0.0
    %233 = vmatpush1.msra.mxu0 0.0
    %234 = vmatprep.subr.mxu0 0.0
    %235 = vmatpush1.msra.mxu0 0.0
    %236 = vmatprep.mubr.f32.mxu0 0.0
    %237 = vmatmul.mubr.f32.gmra.mrb[0].mxu0 %v90
    %v238 = vpop.f32.mrb[0].mxu0
    %v239 = vadd.f32 %v168, %v238
    %v240 = vpop.f32.mrb[0].mxu0
    %241 = vdwg.mxu0
    %v242 = vmul.f32 %v85, 0.5
    %v243 = vmul.f32 %v242, %v85
    %v244 = vadd.f32 %v163, %v243
    %vm245 = vcmask 15360
    %v246 = vsel %vm245, %v244, 0.0
    %247 = vadd.xlane.f32.xlu0 %v246
    %v248 = vpop.xlane.xlu0 %247
    %v249 = vsub.f32 -1.837877, %v248
    %v250 = vld [vmem:[%s4] sm:$0x1]
    %v251 = vld [vmem:[%s5] sm:$0x1]
    %v252 = vlaneseq
    %v253 = vshrl.u32 %v252, 7
    %v254 = vsub.s32 0, %v253
    %v255 = vrot.slane %v251, %v254
    %v257 = vsel %vm245, 0, 0
    %vm259 = vcmask 1040384
    %v261 = vsel %vm259, %v250, 0
    %263 = vmatprep.subr.bf16.mxu0 0
    %264 = vmatpush1.bf16.msra.mxu0 %v261
    %265 = vmatprep.subr.bf16.mxu0 0
    %266 = vmatpush1.bf16.msra.mxu0 0
    %267 = vmatprep.subr.bf16.mxu0 0
    %268 = vmatpush1.bf16.msra.mxu0 0
    %269 = vmatprep.subr.bf16.mxu0 0
    %270 = vmatpush1.bf16.msra.mxu0 0
    %271 = vmatprep.subr.bf16.mxu0 0
    %272 = vmatpush1.bf16.msra.mxu0 0
    %273 = vmatprep.subr.bf16.mxu0 0
    %274 = vmatpush1.bf16.msra.mxu0 0
    %275 = vmatprep.subr.bf16.mxu0 0
    %276 = vmatpush1.bf16.msra.mxu0 0
    %277 = vmatprep.subr.bf16.mxu0 0
    %278 = vmatpush1.bf16.msra.mxu0 0
    %279 = vmatprep.subr.bf16.mxu0 0
    %280 = vmatpush1.bf16.msra.mxu0 0
    %281 = vmatprep.subr.bf16.mxu0 0
    %282 = vmatpush1.bf16.msra.mxu0 0
    %283 = vmatprep.subr.bf16.mxu0 0
    %284 = vmatpush1.bf16.msra.mxu0 0
    %285 = vmatprep.subr.bf16.mxu0 0
    %286 = vmatpush1.bf16.msra.mxu0 0
    %287 = vmatprep.subr.bf16.mxu0 0
    %288 = vmatpush1.bf16.msra.mxu0 0
    %289 = vmatprep.subr.bf16.mxu0 0
    %290 = vmatpush1.bf16.msra.mxu0 0
    %291 = vmatprep.subr.bf16.mxu0 0
    %292 = vmatpush1.bf16.msra.mxu0 0
    %293 = vmatprep.subr.bf16.mxu0 0
    %294 = vmatpush1.bf16.msra.mxu0 0
    %295 = vmatprep.mubr.bf16.mxu0 0
    %296 = vmatmul.mubr.bf16.gmra.mrb[0].mxu0 %v257
    %v297 = vpop.f32.mrb[0].mxu0
    %v298 = vadd.f32 %v255, %v297
    %v299 = vpop.f32.mrb[0].mxu0
    %v300 = vpop.f32.mrb[0].mxu0
    %v301 = vpop.f32.mrb[0].mxu0
    %302 = vdwg.mxu0
    %v303 = vmax.f32 %v298, 0.0
    %v304 = vpack.c.bf16 %v303, %v303
    %v305 = vld [vmem:[#allocation2] sm:$0xf]
    %v306 = vld [vmem:[#allocation2 + $0x4] sm:$0xf]
    %v307 = vld [vmem:[#allocation2 + $0x8] sm:$0xf]
    %v308 = vld [vmem:[#allocation2 + $0xc] sm:$0xf]
    %v309 = vld [vmem:[#allocation2 + $0x10] sm:$0xf]
    %v310 = vld [vmem:[#allocation2 + $0x14] sm:$0xf]
    %v311 = vld [vmem:[#allocation2 + $0x18] sm:$0xf]
    %v312 = vld [vmem:[#allocation2 + $0x1c] sm:$0xf]
    %v313 = vld [vmem:[#allocation2 + $0x20] sm:$0xf]
    %v314 = vld [vmem:[#allocation2 + $0x24] sm:$0xf]
    %v315 = vld [vmem:[#allocation2 + $0x28] sm:$0xf]
    %v316 = vld [vmem:[#allocation2 + $0x2c] sm:$0xf]
    %v317 = vld [vmem:[#allocation2 + $0x30] sm:$0xf]
    %v318 = vld [vmem:[#allocation2 + $0x34] sm:$0xf]
    %v319 = vld [vmem:[#allocation2 + $0x38] sm:$0xf]
    %v320 = vld [vmem:[#allocation2 + $0x3c] sm:$0xf]
    %v321 = vld [vmem:[%s7] sm:$0x1]
    %v322 = vlaneseq
    %v323 = vshrl.u32 %v322, 7
    %v324 = vsub.s32 0, %v323
    %v325 = vrot.slane %v321, %v324
    %v342 = vunpack.c.l.b16 %v305
    %v343 = vunpack.c.l.b16 %v306
    %v344 = vunpack.c.l.b16 %v307
    %v345 = vunpack.c.l.b16 %v308
    %v346 = vunpack.c.l.b16 %v309
    %v347 = vunpack.c.l.b16 %v310
    %v348 = vunpack.c.l.b16 %v311
    %v349 = vunpack.c.l.b16 %v312
    %v350 = vunpack.c.l.b16 %v313
    %v351 = vunpack.c.l.b16 %v314
    %v352 = vunpack.c.l.b16 %v315
    %v353 = vunpack.c.l.b16 %v316
    %v354 = vunpack.c.l.b16 %v317
    %v355 = vunpack.c.l.b16 %v318
    %v356 = vunpack.c.l.b16 %v319
    %v357 = vunpack.c.l.b16 %v320
    %v358 = vpack.c.b16 %v343, %v342
    %v359 = vpack.c.b16 %v345, %v344
    %v360 = vpack.c.b16 %v347, %v346
    %v361 = vpack.c.b16 %v349, %v348
    %v362 = vpack.c.b16 %v351, %v350
    %v363 = vpack.c.b16 %v353, %v352
    %v364 = vpack.c.b16 %v355, %v354
    %v365 = vpack.c.b16 %v357, %v356
    %374 = vmatprep.subr.bf16.mxu0 0
    %375 = vmatpush1.bf16.msra.mxu0 %v358
    %376 = vmatprep.subr.bf16.mxu0 0
    %377 = vmatpush1.bf16.msra.mxu0 %v359
    %378 = vmatprep.subr.bf16.mxu0 0
    %379 = vmatpush1.bf16.msra.mxu0 %v360
    %380 = vmatprep.subr.bf16.mxu0 0
    %381 = vmatpush1.bf16.msra.mxu0 %v361
    %382 = vmatprep.subr.bf16.mxu0 0
    %383 = vmatpush1.bf16.msra.mxu0 %v362
    %384 = vmatprep.subr.bf16.mxu0 0
    %385 = vmatpush1.bf16.msra.mxu0 %v363
    %386 = vmatprep.subr.bf16.mxu0 0
    %387 = vmatpush1.bf16.msra.mxu0 %v364
    %388 = vmatprep.subr.bf16.mxu0 0
    %389 = vmatpush1.bf16.msra.mxu0 %v365
    %390 = vmatprep.subr.bf16.mxu0 0
    %391 = vmatpush1.bf16.msra.mxu0 0
    %392 = vmatprep.subr.bf16.mxu0 0
    %393 = vmatpush1.bf16.msra.mxu0 0
    %394 = vmatprep.subr.bf16.mxu0 0
    %395 = vmatpush1.bf16.msra.mxu0 0
    %396 = vmatprep.subr.bf16.mxu0 0
    %397 = vmatpush1.bf16.msra.mxu0 0
    %398 = vmatprep.subr.bf16.mxu0 0
    %399 = vmatpush1.bf16.msra.mxu0 0
    %400 = vmatprep.subr.bf16.mxu0 0
    %401 = vmatpush1.bf16.msra.mxu0 0
    %402 = vmatprep.subr.bf16.mxu0 0
    %403 = vmatpush1.bf16.msra.mxu0 0
    %404 = vmatprep.subr.bf16.mxu0 0
    %405 = vmatpush1.bf16.msra.mxu0 0
    %406 = vmatprep.mubr.bf16.mxu0 0
    %407 = vmatmul.mubr.bf16.gmra.mrb[0].mxu0 %v304
    %v408 = vpop.f32.mrb[0].mxu0
    %v409 = vadd.f32 %v325, %v408
    %v410 = vpop.f32.mrb[0].mxu0
    %v411 = vpop.f32.mrb[0].mxu0
    %v412 = vpop.f32.mrb[0].mxu0
    %413 = vdwg.mxu0
    %v414 = vmax.f32 %v409, 0.0
    %v415 = vpack.c.bf16 %v414, %v414
    %s416 = scalar_lea.vmem [#allocation2], 64
    %v417 = vld [vmem:[%s416] sm:$0xf]
    %v418 = vld [vmem:[%s416 + $0x4] sm:$0xf]
    %v419 = vld [vmem:[%s416 + $0x8] sm:$0xf]
    %v420 = vld [vmem:[%s416 + $0xc] sm:$0xf]
    %v421 = vld [vmem:[%s416 + $0x10] sm:$0xf]
    %v422 = vld [vmem:[%s416 + $0x14] sm:$0xf]
    %v423 = vld [vmem:[%s416 + $0x18] sm:$0xf]
    %v424 = vld [vmem:[%s416 + $0x1c] sm:$0xf]
    %v425 = vld [vmem:[%s416 + $0x20] sm:$0xf]
    %v426 = vld [vmem:[%s416 + $0x24] sm:$0xf]
    %v427 = vld [vmem:[%s416 + $0x28] sm:$0xf]
    %v428 = vld [vmem:[%s416 + $0x2c] sm:$0xf]
    %v429 = vld [vmem:[%s416 + $0x30] sm:$0xf]
    %v430 = vld [vmem:[%s416 + $0x34] sm:$0xf]
    %v431 = vld [vmem:[%s416 + $0x38] sm:$0xf]
    %v432 = vld [vmem:[%s416 + $0x3c] sm:$0xf]
    %v433 = vld [vmem:[%s7 + $0x1] sm:$0x1]
    %v434 = vlaneseq
    %v435 = vshrl.u32 %v434, 7
    %v436 = vsub.s32 0, %v435
    %v437 = vrot.slane %v433, %v436
    %v454 = vunpack.c.l.b16 %v417
    %v455 = vunpack.c.l.b16 %v418
    %v456 = vunpack.c.l.b16 %v419
    %v457 = vunpack.c.l.b16 %v420
    %v458 = vunpack.c.l.b16 %v421
    %v459 = vunpack.c.l.b16 %v422
    %v460 = vunpack.c.l.b16 %v423
    %v461 = vunpack.c.l.b16 %v424
    %v462 = vunpack.c.l.b16 %v425
    %v463 = vunpack.c.l.b16 %v426
    %v464 = vunpack.c.l.b16 %v427
    %v465 = vunpack.c.l.b16 %v428
    %v466 = vunpack.c.l.b16 %v429
    %v467 = vunpack.c.l.b16 %v430
    %v468 = vunpack.c.l.b16 %v431
    %v469 = vunpack.c.l.b16 %v432
    %v470 = vpack.c.b16 %v455, %v454
    %v471 = vpack.c.b16 %v457, %v456
    %v472 = vpack.c.b16 %v459, %v458
    %v473 = vpack.c.b16 %v461, %v460
    %v474 = vpack.c.b16 %v463, %v462
    %v475 = vpack.c.b16 %v465, %v464
    %v476 = vpack.c.b16 %v467, %v466
    %v477 = vpack.c.b16 %v469, %v468
    %486 = vmatprep.subr.bf16.mxu0 0
    %487 = vmatpush1.bf16.msra.mxu0 %v470
    %488 = vmatprep.subr.bf16.mxu0 0
    %489 = vmatpush1.bf16.msra.mxu0 %v471
    %490 = vmatprep.subr.bf16.mxu0 0
    %491 = vmatpush1.bf16.msra.mxu0 %v472
    %492 = vmatprep.subr.bf16.mxu0 0
    %493 = vmatpush1.bf16.msra.mxu0 %v473
    %494 = vmatprep.subr.bf16.mxu0 0
    %495 = vmatpush1.bf16.msra.mxu0 %v474
    %496 = vmatprep.subr.bf16.mxu0 0
    %497 = vmatpush1.bf16.msra.mxu0 %v475
    %498 = vmatprep.subr.bf16.mxu0 0
    %499 = vmatpush1.bf16.msra.mxu0 %v476
    %500 = vmatprep.subr.bf16.mxu0 0
    %501 = vmatpush1.bf16.msra.mxu0 %v477
    %502 = vmatprep.subr.bf16.mxu0 0
    %503 = vmatpush1.bf16.msra.mxu0 0
    %504 = vmatprep.subr.bf16.mxu0 0
    %505 = vmatpush1.bf16.msra.mxu0 0
    %506 = vmatprep.subr.bf16.mxu0 0
    %507 = vmatpush1.bf16.msra.mxu0 0
    %508 = vmatprep.subr.bf16.mxu0 0
    %509 = vmatpush1.bf16.msra.mxu0 0
    %510 = vmatprep.subr.bf16.mxu0 0
    %511 = vmatpush1.bf16.msra.mxu0 0
    %512 = vmatprep.subr.bf16.mxu0 0
    %513 = vmatpush1.bf16.msra.mxu0 0
    %514 = vmatprep.subr.bf16.mxu0 0
    %515 = vmatpush1.bf16.msra.mxu0 0
    %516 = vmatprep.subr.bf16.mxu0 0
    %517 = vmatpush1.bf16.msra.mxu0 0
    %518 = vmatprep.mubr.bf16.mxu0 0
    %519 = vmatmul.mubr.bf16.gmra.mrb[0].mxu0 %v415
    %v520 = vpop.f32.mrb[0].mxu0
    %v521 = vadd.f32 %v437, %v520
    %v522 = vpop.f32.mrb[0].mxu0
    %v523 = vpop.f32.mrb[0].mxu0
    %v524 = vpop.f32.mrb[0].mxu0
    %525 = vdwg.mxu0
    %v526 = vadd.f32 %v298, %v521
    %v527 = vmax.f32 %v526, 0.0
    %v528 = vpack.c.bf16 %v527, %v527
    %s529 = scalar_lea.vmem [#allocation2], 128
    %v530 = vld [vmem:[%s529] sm:$0xf]
    %v531 = vld [vmem:[%s529 + $0x4] sm:$0xf]
    %v532 = vld [vmem:[%s529 + $0x8] sm:$0xf]
    %v533 = vld [vmem:[%s529 + $0xc] sm:$0xf]
    %v534 = vld [vmem:[%s529 + $0x10] sm:$0xf]
    %v535 = vld [vmem:[%s529 + $0x14] sm:$0xf]
    %v536 = vld [vmem:[%s529 + $0x18] sm:$0xf]
    %v537 = vld [vmem:[%s529 + $0x1c] sm:$0xf]
    %v538 = vld [vmem:[%s529 + $0x20] sm:$0xf]
    %v539 = vld [vmem:[%s529 + $0x24] sm:$0xf]
    %v540 = vld [vmem:[%s529 + $0x28] sm:$0xf]
    %v541 = vld [vmem:[%s529 + $0x2c] sm:$0xf]
    %v542 = vld [vmem:[%s529 + $0x30] sm:$0xf]
    %v543 = vld [vmem:[%s529 + $0x34] sm:$0xf]
    %v544 = vld [vmem:[%s529 + $0x38] sm:$0xf]
    %v545 = vld [vmem:[%s529 + $0x3c] sm:$0xf]
    %v546 = vld [vmem:[%s7 + $0x2] sm:$0x1]
    %v547 = vlaneseq
    %v548 = vshrl.u32 %v547, 7
    %v549 = vsub.s32 0, %v548
    %v550 = vrot.slane %v546, %v549
    %v567 = vunpack.c.l.b16 %v530
    %v568 = vunpack.c.l.b16 %v531
    %v569 = vunpack.c.l.b16 %v532
    %v570 = vunpack.c.l.b16 %v533
    %v571 = vunpack.c.l.b16 %v534
    %v572 = vunpack.c.l.b16 %v535
    %v573 = vunpack.c.l.b16 %v536
    %v574 = vunpack.c.l.b16 %v537
    %v575 = vunpack.c.l.b16 %v538
    %v576 = vunpack.c.l.b16 %v539
    %v577 = vunpack.c.l.b16 %v540
    %v578 = vunpack.c.l.b16 %v541
    %v579 = vunpack.c.l.b16 %v542
    %v580 = vunpack.c.l.b16 %v543
    %v581 = vunpack.c.l.b16 %v544
    %v582 = vunpack.c.l.b16 %v545
    %v583 = vpack.c.b16 %v568, %v567
    %v584 = vpack.c.b16 %v570, %v569
    %v585 = vpack.c.b16 %v572, %v571
    %v586 = vpack.c.b16 %v574, %v573
    %v587 = vpack.c.b16 %v576, %v575
    %v588 = vpack.c.b16 %v578, %v577
    %v589 = vpack.c.b16 %v580, %v579
    %v590 = vpack.c.b16 %v582, %v581
    %599 = vmatprep.subr.bf16.mxu0 0
    %600 = vmatpush1.bf16.msra.mxu0 %v583
    %601 = vmatprep.subr.bf16.mxu0 0
    %602 = vmatpush1.bf16.msra.mxu0 %v584
    %603 = vmatprep.subr.bf16.mxu0 0
    %604 = vmatpush1.bf16.msra.mxu0 %v585
    %605 = vmatprep.subr.bf16.mxu0 0
    %606 = vmatpush1.bf16.msra.mxu0 %v586
    %607 = vmatprep.subr.bf16.mxu0 0
    %608 = vmatpush1.bf16.msra.mxu0 %v587
    %609 = vmatprep.subr.bf16.mxu0 0
    %610 = vmatpush1.bf16.msra.mxu0 %v588
    %611 = vmatprep.subr.bf16.mxu0 0
    %612 = vmatpush1.bf16.msra.mxu0 %v589
    %613 = vmatprep.subr.bf16.mxu0 0
    %614 = vmatpush1.bf16.msra.mxu0 %v590
    %615 = vmatprep.subr.bf16.mxu0 0
    %616 = vmatpush1.bf16.msra.mxu0 0
    %617 = vmatprep.subr.bf16.mxu0 0
    %618 = vmatpush1.bf16.msra.mxu0 0
    %619 = vmatprep.subr.bf16.mxu0 0
    %620 = vmatpush1.bf16.msra.mxu0 0
    %621 = vmatprep.subr.bf16.mxu0 0
    %622 = vmatpush1.bf16.msra.mxu0 0
    %623 = vmatprep.subr.bf16.mxu0 0
    %624 = vmatpush1.bf16.msra.mxu0 0
    %625 = vmatprep.subr.bf16.mxu0 0
    %626 = vmatpush1.bf16.msra.mxu0 0
    %627 = vmatprep.subr.bf16.mxu0 0
    %628 = vmatpush1.bf16.msra.mxu0 0
    %629 = vmatprep.subr.bf16.mxu0 0
    %630 = vmatpush1.bf16.msra.mxu0 0
    %631 = vmatprep.mubr.bf16.mxu0 0
    %632 = vmatmul.mubr.bf16.gmra.mrb[0].mxu0 %v528
    %v633 = vpop.f32.mrb[0].mxu0
    %v634 = vadd.f32 %v550, %v633
    %v635 = vpop.f32.mrb[0].mxu0
    %v636 = vpop.f32.mrb[0].mxu0
    %v637 = vpop.f32.mrb[0].mxu0
    %638 = vdwg.mxu0
    %v639 = vmax.f32 %v634, 0.0
    %v640 = vpack.c.bf16 %v639, %v639
    %s641 = scalar_lea.vmem [#allocation2], 192
    %v642 = vld [vmem:[%s641] sm:$0xf]
    %v643 = vld [vmem:[%s641 + $0x4] sm:$0xf]
    %v644 = vld [vmem:[%s641 + $0x8] sm:$0xf]
    %v645 = vld [vmem:[%s641 + $0xc] sm:$0xf]
    %v646 = vld [vmem:[%s641 + $0x10] sm:$0xf]
    %v647 = vld [vmem:[%s641 + $0x14] sm:$0xf]
    %v648 = vld [vmem:[%s641 + $0x18] sm:$0xf]
    %v649 = vld [vmem:[%s641 + $0x1c] sm:$0xf]
    %v650 = vld [vmem:[%s641 + $0x20] sm:$0xf]
    %v651 = vld [vmem:[%s641 + $0x24] sm:$0xf]
    %v652 = vld [vmem:[%s641 + $0x28] sm:$0xf]
    %v653 = vld [vmem:[%s641 + $0x2c] sm:$0xf]
    %v654 = vld [vmem:[%s641 + $0x30] sm:$0xf]
    %v655 = vld [vmem:[%s641 + $0x34] sm:$0xf]
    %v656 = vld [vmem:[%s641 + $0x38] sm:$0xf]
    %v657 = vld [vmem:[%s641 + $0x3c] sm:$0xf]
    %v658 = vld [vmem:[%s7 + $0x3] sm:$0x1]
    %v659 = vlaneseq
    %v660 = vshrl.u32 %v659, 7
    %v661 = vsub.s32 0, %v660
    %v662 = vrot.slane %v658, %v661
    %v679 = vunpack.c.l.b16 %v642
    %v680 = vunpack.c.l.b16 %v643
    %v681 = vunpack.c.l.b16 %v644
    %v682 = vunpack.c.l.b16 %v645
    %v683 = vunpack.c.l.b16 %v646
    %v684 = vunpack.c.l.b16 %v647
    %v685 = vunpack.c.l.b16 %v648
    %v686 = vunpack.c.l.b16 %v649
    %v687 = vunpack.c.l.b16 %v650
    %v688 = vunpack.c.l.b16 %v651
    %v689 = vunpack.c.l.b16 %v652
    %v690 = vunpack.c.l.b16 %v653
    %v691 = vunpack.c.l.b16 %v654
    %v692 = vunpack.c.l.b16 %v655
    %v693 = vunpack.c.l.b16 %v656
    %v694 = vunpack.c.l.b16 %v657
    %v695 = vpack.c.b16 %v680, %v679
    %v696 = vpack.c.b16 %v682, %v681
    %v697 = vpack.c.b16 %v684, %v683
    %v698 = vpack.c.b16 %v686, %v685
    %v699 = vpack.c.b16 %v688, %v687
    %v700 = vpack.c.b16 %v690, %v689
    %v701 = vpack.c.b16 %v692, %v691
    %v702 = vpack.c.b16 %v694, %v693
    %711 = vmatprep.subr.bf16.mxu0 0
    %712 = vmatpush1.bf16.msra.mxu0 %v695
    %713 = vmatprep.subr.bf16.mxu0 0
    %714 = vmatpush1.bf16.msra.mxu0 %v696
    %715 = vmatprep.subr.bf16.mxu0 0
    %716 = vmatpush1.bf16.msra.mxu0 %v697
    %717 = vmatprep.subr.bf16.mxu0 0
    %718 = vmatpush1.bf16.msra.mxu0 %v698
    %719 = vmatprep.subr.bf16.mxu0 0
    %720 = vmatpush1.bf16.msra.mxu0 %v699
    %721 = vmatprep.subr.bf16.mxu0 0
    %722 = vmatpush1.bf16.msra.mxu0 %v700
    %723 = vmatprep.subr.bf16.mxu0 0
    %724 = vmatpush1.bf16.msra.mxu0 %v701
    %725 = vmatprep.subr.bf16.mxu0 0
    %726 = vmatpush1.bf16.msra.mxu0 %v702
    %727 = vmatprep.subr.bf16.mxu0 0
    %728 = vmatpush1.bf16.msra.mxu0 0
    %729 = vmatprep.subr.bf16.mxu0 0
    %730 = vmatpush1.bf16.msra.mxu0 0
    %731 = vmatprep.subr.bf16.mxu0 0
    %732 = vmatpush1.bf16.msra.mxu0 0
    %733 = vmatprep.subr.bf16.mxu0 0
    %734 = vmatpush1.bf16.msra.mxu0 0
    %735 = vmatprep.subr.bf16.mxu0 0
    %736 = vmatpush1.bf16.msra.mxu0 0
    %737 = vmatprep.subr.bf16.mxu0 0
    %738 = vmatpush1.bf16.msra.mxu0 0
    %739 = vmatprep.subr.bf16.mxu0 0
    %740 = vmatpush1.bf16.msra.mxu0 0
    %741 = vmatprep.subr.bf16.mxu0 0
    %742 = vmatpush1.bf16.msra.mxu0 0
    %743 = vmatprep.mubr.bf16.mxu0 0
    %744 = vmatmul.mubr.bf16.gmra.mrb[0].mxu0 %v640
    %v745 = vpop.f32.mrb[0].mxu0
    %v746 = vadd.f32 %v662, %v745
    %v747 = vpop.f32.mrb[0].mxu0
    %v748 = vpop.f32.mrb[0].mxu0
    %v749 = vpop.f32.mrb[0].mxu0
    %750 = vdwg.mxu0
    %v751 = vadd.f32 %v526, %v746
    %v752 = vpack.c.bf16 %v751, %v751
    %v753 = vld [vmem:[%s8] sm:$0xf]
    %v754 = vld [vmem:[%s8 + $0x4] sm:$0xf]
    %v755 = vld [vmem:[%s8 + $0x8] sm:$0xf]
    %v756 = vld [vmem:[%s8 + $0xc] sm:$0xf]
    %v757 = vld [vmem:[%s8 + $0x10] sm:$0xf]
    %v758 = vld [vmem:[%s8 + $0x14] sm:$0xf]
    %v759 = vld [vmem:[%s8 + $0x18] sm:$0xf]
    %v760 = vld [vmem:[%s8 + $0x1c] sm:$0xf]
    %v761 = vld [vmem:[%s8 + $0x20] sm:$0xf]
    %v762 = vld [vmem:[%s8 + $0x24] sm:$0xf]
    %v763 = vld [vmem:[%s8 + $0x28] sm:$0xf]
    %v764 = vld [vmem:[%s8 + $0x2c] sm:$0xf]
    %v765 = vld [vmem:[%s8 + $0x30] sm:$0xf]
    %v766 = vld [vmem:[%s8 + $0x34] sm:$0xf]
    %v767 = vld [vmem:[%s8 + $0x38] sm:$0xf]
    %v768 = vld [vmem:[%s8 + $0x3c] sm:$0xf]
    %v769 = vld [vmem:[%s9] sm:$0x1]
    %v770 = vlaneseq
    %v771 = vshrl.u32 %v770, 7
    %v772 = vsub.s32 0, %v771
    %v773 = vrot.slane %v769, %v772
    %v790 = vunpack.c.l.b16 %v753
    %v791 = vunpack.c.l.b16 %v754
    %v792 = vunpack.c.l.b16 %v755
    %v793 = vunpack.c.l.b16 %v756
    %v794 = vunpack.c.l.b16 %v757
    %v795 = vunpack.c.l.b16 %v758
    %v796 = vunpack.c.l.b16 %v759
    %v797 = vunpack.c.l.b16 %v760
    %v798 = vunpack.c.l.b16 %v761
    %v799 = vunpack.c.l.b16 %v762
    %v800 = vunpack.c.l.b16 %v763
    %v801 = vunpack.c.l.b16 %v764
    %v802 = vunpack.c.l.b16 %v765
    %v803 = vunpack.c.l.b16 %v766
    %v804 = vunpack.c.l.b16 %v767
    %v805 = vunpack.c.l.b16 %v768
    %v806 = vpack.c.b16 %v791, %v790
    %v807 = vpack.c.b16 %v793, %v792
    %v808 = vpack.c.b16 %v795, %v794
    %v809 = vpack.c.b16 %v797, %v796
    %v810 = vpack.c.b16 %v799, %v798
    %v811 = vpack.c.b16 %v801, %v800
    %v812 = vpack.c.b16 %v803, %v802
    %v813 = vpack.c.b16 %v805, %v804
    %822 = vmatprep.subr.bf16.mxu0 0
    %823 = vmatpush1.bf16.msra.mxu0 %v806
    %824 = vmatprep.subr.bf16.mxu0 0
    %825 = vmatpush1.bf16.msra.mxu0 %v807
    %826 = vmatprep.subr.bf16.mxu0 0
    %827 = vmatpush1.bf16.msra.mxu0 %v808
    %828 = vmatprep.subr.bf16.mxu0 0
    %829 = vmatpush1.bf16.msra.mxu0 %v809
    %830 = vmatprep.subr.bf16.mxu0 0
    %831 = vmatpush1.bf16.msra.mxu0 %v810
    %832 = vmatprep.subr.bf16.mxu0 0
    %833 = vmatpush1.bf16.msra.mxu0 %v811
    %834 = vmatprep.subr.bf16.mxu0 0
    %835 = vmatpush1.bf16.msra.mxu0 %v812
    %836 = vmatprep.subr.bf16.mxu0 0
    %837 = vmatpush1.bf16.msra.mxu0 %v813
    %838 = vmatprep.subr.bf16.mxu0 0
    %839 = vmatpush1.bf16.msra.mxu0 0
    %840 = vmatprep.subr.bf16.mxu0 0
    %841 = vmatpush1.bf16.msra.mxu0 0
    %842 = vmatprep.subr.bf16.mxu0 0
    %843 = vmatpush1.bf16.msra.mxu0 0
    %844 = vmatprep.subr.bf16.mxu0 0
    %845 = vmatpush1.bf16.msra.mxu0 0
    %846 = vmatprep.subr.bf16.mxu0 0
    %847 = vmatpush1.bf16.msra.mxu0 0
    %848 = vmatprep.subr.bf16.mxu0 0
    %849 = vmatpush1.bf16.msra.mxu0 0
    %850 = vmatprep.subr.bf16.mxu0 0
    %851 = vmatpush1.bf16.msra.mxu0 0
    %852 = vmatprep.subr.bf16.mxu0 0
    %853 = vmatpush1.bf16.msra.mxu0 0
    %854 = vmatprep.mubr.bf16.mxu0 0
    %855 = vmatmul.mubr.bf16.gmra.mrb[0].mxu0 %v752
    %v856 = vpop.f32.mrb[0].mxu0
    %v857 = vadd.f32 %v773, %v856
    %v858 = vpop.f32.mrb[0].mxu0
    %v859 = vpop.f32.mrb[0].mxu0
    %v860 = vpop.f32.mrb[0].mxu0
    %861 = vdwg.mxu0
    %v862 = vmul.f32 %v857, 0.088388346
    %vm863 = vcmp.ge.f32.partialorder %v239, -3.0
    %vm864 = vcmp.le.f32.partialorder %v239, 3.0
    %vm865 = vmand %vm863, %vm864
    %v866 = vmax.f32 %v239, -3.0
    %v867 = vmin.f32 %v866, 3.0
    %vm868 = vcmask 64512
    %v869 = vsel %vm868, %v862, -inf
    %870 = vmax.xlane.f32.xlu0 %v869
    %v871 = vpop.xlane.xlu0 %870
    %v872 = vsub.f32 %v862, %v871
    %v873 = vmul.f32 %v872, 1.442695
    %v874 = vpow.pop %v873
    %v875 = vsel %vm868, %v874, 0.0
    %876 = vadd.xlane.f32.xlu0 %v875
    %v877 = vpop.xlane.xlu0 %876
    %v878 = vrcp.pop %v877
    %v879 = vmul.f32 %v874, %v878
    %v880 = vmul.f32 %v879, 0.992
    %v881 = vadd.f32 %v880, 0.001
    %vm882 = vcmask 130112
    %v883 = vsel %vm882, %v862, -inf
    %884 = vmax.xlane.f32.xlu0 %v883
    %v885 = vpop.xlane.xlu0 %884
    %v886 = vsub.f32 %v862, %v885
    %v887 = vmul.f32 %v886, 1.442695
    %v888 = vpow.pop %v887
    %890 = vrot.lane.b32.xlu0 %v888, 120
    %v891 = vpop.permute.xlu0 %890
    %v893 = vsel %vm868, %v891, 0.0
    %894 = vadd.xlane.f32.xlu0 %v893
    %v895 = vpop.xlane.xlu0 %894
    %v896 = vrcp.pop %v895
    %v897 = vmul.f32 %v888, %v896
    %v898 = vmul.f32 %v897, 0.992
    %v899 = vadd.f32 %v898, 0.001
    %v901 = vsel %vm868, %v881, 0
    %903 = vmatprep.subr.mxu0 0.0
    %904 = vmatpush1.msra.mxu0 %v80
    %905 = vmatprep.subr.mxu0 0.0
    %906 = vmatpush1.msra.mxu0 0.0
    %907 = vmatprep.subr.mxu0 0.0
    %908 = vmatpush1.msra.mxu0 0.0
    %909 = vmatprep.subr.mxu0 0.0
    %910 = vmatpush1.msra.mxu0 0.0
    %911 = vmatprep.subr.mxu0 0.0
    %912 = vmatpush1.msra.mxu0 0.0
    %913 = vmatprep.subr.mxu0 0.0
    %914 = vmatpush1.msra.mxu0 0.0
    %915 = vmatprep.subr.mxu0 0.0
    %916 = vmatpush1.msra.mxu0 0.0
    %917 = vmatprep.subr.mxu0 0.0
    %918 = vmatpush1.msra.mxu0 0.0
    %919 = vmatprep.subr.mxu0 0.0
    %920 = vmatpush1.msra.mxu0 0.0
    %921 = vmatprep.subr.mxu0 0.0
    %922 = vmatpush1.msra.mxu0 0.0
    %923 = vmatprep.subr.mxu0 0.0
    %924 = vmatpush1.msra.mxu0 0.0
    %925 = vmatprep.subr.mxu0 0.0
    %926 = vmatpush1.msra.mxu0 0.0
    %927 = vmatprep.subr.mxu0 0.0
    %928 = vmatpush1.msra.mxu0 0.0
    %929 = vmatprep.subr.mxu0 0.0
    %930 = vmatpush1.msra.mxu0 0.0
    %931 = vmatprep.subr.mxu0 0.0
    %932 = vmatpush1.msra.mxu0 0.0
    %933 = vmatprep.subr.mxu0 0.0
    %934 = vmatpush1.msra.mxu0 0.0
    %935 = vmatprep.subr.mxu0 0.0
    %936 = vmatpush1.msra.mxu0 0.0
    %937 = vmatprep.subr.mxu0 0.0
    %938 = vmatpush1.msra.mxu0 0.0
    %939 = vmatprep.subr.mxu0 0.0
    %940 = vmatpush1.msra.mxu0 0.0
    %941 = vmatprep.subr.mxu0 0.0
    %942 = vmatpush1.msra.mxu0 0.0
    %943 = vmatprep.subr.mxu0 0.0
    %944 = vmatpush1.msra.mxu0 0.0
    %945 = vmatprep.subr.mxu0 0.0
    %946 = vmatpush1.msra.mxu0 0.0
    %947 = vmatprep.subr.mxu0 0.0
    %948 = vmatpush1.msra.mxu0 0.0
    %949 = vmatprep.subr.mxu0 0.0
    %950 = vmatpush1.msra.mxu0 0.0
    %951 = vmatprep.subr.mxu0 0.0
    %952 = vmatpush1.msra.mxu0 0.0
    %953 = vmatprep.subr.mxu0 0.0
    %954 = vmatpush1.msra.mxu0 0.0
    %955 = vmatprep.subr.mxu0 0.0
    %956 = vmatpush1.msra.mxu0 0.0
    %957 = vmatprep.subr.mxu0 0.0
    %958 = vmatpush1.msra.mxu0 0.0
    %959 = vmatprep.subr.mxu0 0.0
    %960 = vmatpush1.msra.mxu0 0.0
    %961 = vmatprep.subr.mxu0 0.0
    %962 = vmatpush1.msra.mxu0 0.0
    %963 = vmatprep.subr.mxu0 0.0
    %964 = vmatpush1.msra.mxu0 0.0
    %965 = vmatprep.subr.mxu0 0.0
    %966 = vmatpush1.msra.mxu0 0.0
    %967 = vmatprep.mubr.f32.mxu0 0.0
    %968 = vmatmul.mubr.f32.gmra.mrb[0].mxu0 %v901
    %v969 = vpop.f32.mrb[0].mxu0
    %v970 = vadd.f32 0.0, %v969
    %v971 = vpop.f32.mrb[0].mxu0
    %972 = vdwg.mxu0
    %v973 = vmul.f32 %v970, 6.0
    %v974 = vadd.f32 %v973, -3.0
    %976 = vrot.lane.b32.xlu0 %v899, 120
    %v977 = vpop.permute.xlu0 %976
    %v978 = vsel %vm868, %v977, 0
    %980 = vmatprep.subr.mxu0 0.0
    %981 = vmatpush1.msra.mxu0 %v80
    %982 = vmatprep.subr.mxu0 0.0
    %983 = vmatpush1.msra.mxu0 0.0
    %984 = vmatprep.subr.mxu0 0.0
    %985 = vmatpush1.msra.mxu0 0.0
    %986 = vmatprep.subr.mxu0 0.0
    %987 = vmatpush1.msra.mxu0 0.0
    %988 = vmatprep.subr.mxu0 0.0
    %989 = vmatpush1.msra.mxu0 0.0
    %990 = vmatprep.subr.mxu0 0.0
    %991 = vmatpush1.msra.mxu0 0.0
    %992 = vmatprep.subr.mxu0 0.0
    %993 = vmatpush1.msra.mxu0 0.0
    %994 = vmatprep.subr.mxu0 0.0
    %995 = vmatpush1.msra.mxu0 0.0
    %996 = vmatprep.subr.mxu0 0.0
    %997 = vmatpush1.msra.mxu0 0.0
    %998 = vmatprep.subr.mxu0 0.0
    %999 = vmatpush1.msra.mxu0 0.0
    %1000 = vmatprep.subr.mxu0 0.0
    %1001 = vmatpush1.msra.mxu0 0.0
    %1002 = vmatprep.subr.mxu0 0.0
    %1003 = vmatpush1.msra.mxu0 0.0
    %1004 = vmatprep.subr.mxu0 0.0
    %1005 = vmatpush1.msra.mxu0 0.0
    %1006 = vmatprep.subr.mxu0 0.0
    %1007 = vmatpush1.msra.mxu0 0.0
    %1008 = vmatprep.subr.mxu0 0.0
    %1009 = vmatpush1.msra.mxu0 0.0
    %1010 = vmatprep.subr.mxu0 0.0
    %1011 = vmatpush1.msra.mxu0 0.0
    %1012 = vmatprep.subr.mxu0 0.0
    %1013 = vmatpush1.msra.mxu0 0.0
    %1014 = vmatprep.subr.mxu0 0.0
    %1015 = vmatpush1.msra.mxu0 0.0
    %1016 = vmatprep.subr.mxu0 0.0
    %1017 = vmatpush1.msra.mxu0 0.0
    %1018 = vmatprep.subr.mxu0 0.0
    %1019 = vmatpush1.msra.mxu0 0.0
    %1020 = vmatprep.subr.mxu0 0.0
    %1021 = vmatpush1.msra.mxu0 0.0
    %1022 = vmatprep.subr.mxu0 0.0
    %1023 = vmatpush1.msra.mxu0 0.0
    %1024 = vmatprep.subr.mxu0 0.0
    %1025 = vmatpush1.msra.mxu0 0.0
    %1026 = vmatprep.subr.mxu0 0.0
    %1027 = vmatpush1.msra.mxu0 0.0
    %1028 = vmatprep.subr.mxu0 0.0
    %1029 = vmatpush1.msra.mxu0 0.0
    %1030 = vmatprep.subr.mxu0 0.0
    %1031 = vmatpush1.msra.mxu0 0.0
    %1032 = vmatprep.subr.mxu0 0.0
    %1033 = vmatpush1.msra.mxu0 0.0
    %1034 = vmatprep.subr.mxu0 0.0
    %1035 = vmatpush1.msra.mxu0 0.0
    %1036 = vmatprep.subr.mxu0 0.0
    %1037 = vmatpush1.msra.mxu0 0.0
    %1038 = vmatprep.subr.mxu0 0.0
    %1039 = vmatpush1.msra.mxu0 0.0
    %1040 = vmatprep.subr.mxu0 0.0
    %1041 = vmatpush1.msra.mxu0 0.0
    %1042 = vmatprep.subr.mxu0 0.0
    %1043 = vmatpush1.msra.mxu0 0.0
    %1044 = vmatprep.mubr.f32.mxu0 0.0
    %1045 = vmatmul.mubr.f32.gmra.mrb[0].mxu0 %v978
    %v1046 = vpop.f32.mrb[0].mxu0
    %v1047 = vadd.f32 0.0, %v1046
    %v1048 = vpop.f32.mrb[0].mxu0
    %1049 = vdwg.mxu0
    %v1050 = vmul.f32 %v1047, 6.0
    %v1051 = vadd.f32 %v1050, -3.0
    %v1052 = vsel %vm81, 3.0, %v974
    %v1053 = vsel %vm81, 3.0, %v1051
    %v1054 = vadd.f32 %v1053, 1e-06
    %v1055 = vsel %vm81, %v1054, %v1051
    %1057 = vset.pattern.permute.xlu0 0
    %1058 = vperm.xlu0 %1057, %v867
    %v1059 = vpop.permute.xlu0 %1058
    %vm1061 = vcmp.ge.f32.partialorder %v1059, %v1055
    %v1062 = vsel %vm1061, 1, 0
    %v1063 = vsel %vm868, %v1062, 0
    %v1064 = vand.u32 %v1063, 65535
    %v1065 = vshrl.u32 %v1063, 16
    %v1066 = vcvt.s32.f32 %v1064
    %v1067 = vcvt.s32.f32 %v1065
    %1068 = vadd.xlane.f32.xlu0 %v1066
    %v1069 = vpop.xlane.xlu0 %1068
    %1070 = vadd.xlane.f32.xlu0 %v1067
    %v1071 = vpop.xlane.xlu0 %1070
    %v1072 = vcvt.f32.s32 %v1069
    %v1073 = vcvt.f32.s32 %v1071
    %v1074 = vshll.u32 %v1073, 16
    %v1075 = vadd.s32 %v1074, %v1072
    %vm1076 = vcmp.eq.s32.totalorder %v1075, %v77
    %v1077 = vsub.s32 %v1075, 1
    %vm1078 = vcmp.eq.s32.totalorder %v1077, %v77
    %vm1079 = vcmp.eq.s32.totalorder %v1075, 0
    %v1080 = vsel %vm1076, %v1052, 0.0
    %v1081 = vsel %vm868, %v1080, 0.0
    %1082 = vadd.xlane.f32.xlu0 %v1081
    %v1083 = vpop.xlane.xlu0 %1082
    %v1084 = vsel %vm1078, %v1052, 0.0
    %v1085 = vsel %vm868, %v1084, 0.0
    %1086 = vadd.xlane.f32.xlu0 %v1085
    %v1087 = vpop.xlane.xlu0 %1086
    %v1088 = vsel %vm1079, -3.0, %v1087
    %v1089 = vsel %vm1076, %v1053, 0.0
    %v1090 = vsel %vm868, %v1089, 0.0
    %1091 = vadd.xlane.f32.xlu0 %v1090
    %v1092 = vpop.xlane.xlu0 %1091
    %v1093 = vsel %vm1078, %v1053, 0.0
    %v1094 = vsel %vm868, %v1093, 0.0
    %1095 = vadd.xlane.f32.xlu0 %v1094
    %v1096 = vpop.xlane.xlu0 %1095
    %v1097 = vsel %vm1079, -3.0, %v1096
    %v1098 = vsub.f32 %v1083, %v1088
    %v1099 = vsub.f32 %v1092, %v1097
    %v1100 = vrcp.pop %v1098
    %v1101 = vmul.f32 %v1099, %v1100
    %v1102 = vmax.f32 %v857, 0.0
    %v1103 = vand.u32 2147483647, %v857
    %v1104 = vsub.f32 0.0, %v1103
    %v1105 = vmul.f32 %v1104, 1.442695
    %v1106 = vpow.pop %v1105
    %v1107 = vadd.f32 %v1106, 1.0
    %v1108 = vlog2.pop %v1107
    %v1109 = vmul.f32 %v1108, 0.6931472
    %v1110 = vadd.f32 %v1102, %v1109
    %v1111 = vadd.f32 %v1110, 0.001
    %1113 = vrot.lane.b32.xlu0 %v1111, 112
    %v1114 = vpop.permute.xlu0 %1113
    %v1116 = vsel %vm1078, %v1114, 0.0
    %vm1117 = vcmask 56320
    %v1118 = vsel %vm1117, %v1116, 0.0
    %1119 = vadd.xlane.f32.xlu0 %v1118
    %v1120 = vpop.xlane.xlu0 %1119
    %v1121 = vsel %vm1079, 1.0, %v1120
    %vm1122 = vcmp.eq.s32.totalorder %v1075, 7
    %v1123 = vsel %vm1076, %v1114, 0.0
    %v1124 = vsel %vm1117, %v1123, 0.0
    %1125 = vadd.xlane.f32.xlu0 %v1124
    %v1126 = vpop.xlane.xlu0 %1125
    %v1127 = vsel %vm1122, 1.0, %v1126
    %v1128 = vsub.f32 %v867, %v1097
    %v1129 = vadd.f32 %v1121, %v1127
    %v1130 = vmul.f32 %v1101, 2.0
    %v1131 = vsub.f32 %v1129, %v1130
    %v1132 = vmul.f32 %v1128, %v1131
    %v1133 = vsub.f32 %v1101, %v1121
    %v1134 = vmul.f32 %v1099, %v1133
    %v1135 = vadd.f32 %v1132, %v1134
    %v1136 = vmul.f32 %v1099, %v1121
    %v1137 = vsub.f32 %v1136, %v1132
    %v1138 = vsub.f32 0.0, %v1101
    %v1139 = vmul.f32 %v1138, %v1128
    %v1140 = vmul.f32 %v1137, %v1137
    %v1141 = vmul.f32 %v1135, 4.0
    %v1142 = vmul.f32 %v1141, %v1139
    %v1143 = vsub.f32 %v1140, %v1142
    %v1144 = vmax.f32 %v1143, 0.0
    %v1145 = vmul.f32 %v1139, 2.0
    %v1146 = vsub.f32 0.0, %v1137
    %v1147 = vrsqrt.pop %v1144
    %v1148 = vmul.f32 %v1144, %v1147
    %vm1149 = vcmp.eq.f32.partialorder %v1144, inf
    %v1150 = vsel %vm1149, %v1144, %v1148
    %vm1151 = vcmp.eq.f32.partialorder %v1144, 0.0
    %v1152 = vand.u32 %v1144, 2147483648
    %v1153 = vsel %vm1151, %v1152, %v1150
    %v1154 = vsub.f32 %v1146, %v1153
    %v1155 = vrcp.pop %v1154
    %v1156 = vmul.f32 %v1145, %v1155
    %v1157 = vmul.f32 %v1156, %v1098
    %v1158 = vadd.f32 %v1157, %v1088
    %v1159 = vsub.f32 1.0, %v1156
    %v1160 = vmul.f32 %v1156, %v1159
    %v1161 = vmul.f32 %v1131, %v1160
    %v1162 = vadd.f32 %v1101, %v1161
    %v1163 = vmul.f32 %v1101, %v1101
    %v1164 = vmul.f32 %v1127, %v1156
    %v1165 = vmul.f32 %v1164, %v1156
    %v1166 = vmul.f32 %v1130, %v1160
    %v1167 = vadd.f32 %v1165, %v1166
    %v1168 = vmul.f32 %v1121, %v1159
    %v1169 = vmul.f32 %v1168, %v1159
    %v1170 = vadd.f32 %v1167, %v1169
    %v1171 = vmul.f32 %v1163, %v1170
    %v1172 = vlog2.pop %v1162
    %v1173 = vmul.f32 %v1172, 0.6931472
    %v1174 = vmul.f32 %v1173, 2.0
    %v1175 = vlog2.pop %v1171
    %v1176 = vmul.f32 %v1175, 0.6931472
    %v1177 = vsub.f32 %v1174, %v1176
    %v1178 = vsel %vm865, %v1158, %v239
    %v1179 = vsel %vm865, %v1177, 0.0
    %1181 = vset.pattern.permute.xlu0 0
    %1182 = vperm.xlu0 %1181, %v1178
    %v1183 = vpop.permute.xlu0 %1182
    %v1185 = vsel %vm82, %v1183, 0.0
    %v1186 = vadd.f32 %v1179, 0.0
    %v1187 = vpack.c.bf16 %v1185, %v1185
    %v1189 = vsel %vm245, %v1187, 0
    %1191 = vmatprep.subr.bf16.mxu0 0
    %1192 = vmatpush1.bf16.msra.mxu0 %v261
    %1193 = vmatprep.subr.bf16.mxu0 0
    %1194 = vmatpush1.bf16.msra.mxu0 0
    %1195 = vmatprep.subr.bf16.mxu0 0
    %1196 = vmatpush1.bf16.msra.mxu0 0
    %1197 = vmatprep.subr.bf16.mxu0 0
    %1198 = vmatpush1.bf16.msra.mxu0 0
    %1199 = vmatprep.subr.bf16.mxu0 0
    %1200 = vmatpush1.bf16.msra.mxu0 0
    %1201 = vmatprep.subr.bf16.mxu0 0
    %1202 = vmatpush1.bf16.msra.mxu0 0
    %1203 = vmatprep.subr.bf16.mxu0 0
    %1204 = vmatpush1.bf16.msra.mxu0 0
    %1205 = vmatprep.subr.bf16.mxu0 0
    %1206 = vmatpush1.bf16.msra.mxu0 0
    %1207 = vmatprep.subr.bf16.mxu0 0
    %1208 = vmatpush1.bf16.msra.mxu0 0
    %1209 = vmatprep.subr.bf16.mxu0 0
    %1210 = vmatpush1.bf16.msra.mxu0 0
    %1211 = vmatprep.subr.bf16.mxu0 0
    %1212 = vmatpush1.bf16.msra.mxu0 0
    %1213 = vmatprep.subr.bf16.mxu0 0
    %1214 = vmatpush1.bf16.msra.mxu0 0
    %1215 = vmatprep.subr.bf16.mxu0 0
    %1216 = vmatpush1.bf16.msra.mxu0 0
    %1217 = vmatprep.subr.bf16.mxu0 0
    %1218 = vmatpush1.bf16.msra.mxu0 0
    %1219 = vmatprep.subr.bf16.mxu0 0
    %1220 = vmatpush1.bf16.msra.mxu0 0
    %1221 = vmatprep.subr.bf16.mxu0 0
    %1222 = vmatpush1.bf16.msra.mxu0 0
    %1223 = vmatprep.mubr.bf16.mxu0 0
    %1224 = vmatmul.mubr.bf16.gmra.mrb[0].mxu0 %v1189
    %v1225 = vpop.f32.mrb[0].mxu0
    %v1226 = vadd.f32 %v255, %v1225
    %v1227 = vpop.f32.mrb[0].mxu0
    %v1228 = vpop.f32.mrb[0].mxu0
    %v1229 = vpop.f32.mrb[0].mxu0
    %1230 = vdwg.mxu0
    %v1231 = vmax.f32 %v1226, 0.0
    %v1232 = vpack.c.bf16 %v1231, %v1231
    %1233 = vmatprep.subr.bf16.mxu0 0
    %1234 = vmatpush1.bf16.msra.mxu0 %v358
    %1235 = vmatprep.subr.bf16.mxu0 0
    %1236 = vmatpush1.bf16.msra.mxu0 %v359
    %1237 = vmatprep.subr.bf16.mxu0 0
    %1238 = vmatpush1.bf16.msra.mxu0 %v360
    %1239 = vmatprep.subr.bf16.mxu0 0
    %1240 = vmatpush1.bf16.msra.mxu0 %v361
    %1241 = vmatprep.subr.bf16.mxu0 0
    %1242 = vmatpush1.bf16.msra.mxu0 %v362
    %1243 = vmatprep.subr.bf16.mxu0 0
    %1244 = vmatpush1.bf16.msra.mxu0 %v363
    %1245 = vmatprep.subr.bf16.mxu0 0
    %1246 = vmatpush1.bf16.msra.mxu0 %v364
    %1247 = vmatprep.subr.bf16.mxu0 0
    %1248 = vmatpush1.bf16.msra.mxu0 %v365
    %1249 = vmatprep.subr.bf16.mxu0 0
    %1250 = vmatpush1.bf16.msra.mxu0 0
    %1251 = vmatprep.subr.bf16.mxu0 0
    %1252 = vmatpush1.bf16.msra.mxu0 0
    %1253 = vmatprep.subr.bf16.mxu0 0
    %1254 = vmatpush1.bf16.msra.mxu0 0
    %1255 = vmatprep.subr.bf16.mxu0 0
    %1256 = vmatpush1.bf16.msra.mxu0 0
    %1257 = vmatprep.subr.bf16.mxu0 0
    %1258 = vmatpush1.bf16.msra.mxu0 0
    %1259 = vmatprep.subr.bf16.mxu0 0
    %1260 = vmatpush1.bf16.msra.mxu0 0
    %1261 = vmatprep.subr.bf16.mxu0 0
    %1262 = vmatpush1.bf16.msra.mxu0 0
    %1263 = vmatprep.subr.bf16.mxu0 0
    %1264 = vmatpush1.bf16.msra.mxu0 0
    %1265 = vmatprep.mubr.bf16.mxu0 0
    %1266 = vmatmul.mubr.bf16.gmra.mrb[0].mxu0 %v1232
    %v1267 = vpop.f32.mrb[0].mxu0
    %v1268 = vadd.f32 %v325, %v1267
    %v1269 = vpop.f32.mrb[0].mxu0
    %v1270 = vpop.f32.mrb[0].mxu0
    %v1271 = vpop.f32.mrb[0].mxu0
    %1272 = vdwg.mxu0
    %v1273 = vmax.f32 %v1268, 0.0
    %v1274 = vpack.c.bf16 %v1273, %v1273
    %1275 = vmatprep.subr.bf16.mxu0 0
    %1276 = vmatpush1.bf16.msra.mxu0 %v470
    %1277 = vmatprep.subr.bf16.mxu0 0
    %1278 = vmatpush1.bf16.msra.mxu0 %v471
    %1279 = vmatprep.subr.bf16.mxu0 0
    %1280 = vmatpush1.bf16.msra.mxu0 %v472
    %1281 = vmatprep.subr.bf16.mxu0 0
    %1282 = vmatpush1.bf16.msra.mxu0 %v473
    %1283 = vmatprep.subr.bf16.mxu0 0
    %1284 = vmatpush1.bf16.msra.mxu0 %v474
    %1285 = vmatprep.subr.bf16.mxu0 0
    %1286 = vmatpush1.bf16.msra.mxu0 %v475
    %1287 = vmatprep.subr.bf16.mxu0 0
    %1288 = vmatpush1.bf16.msra.mxu0 %v476
    %1289 = vmatprep.subr.bf16.mxu0 0
    %1290 = vmatpush1.bf16.msra.mxu0 %v477
    %1291 = vmatprep.subr.bf16.mxu0 0
    %1292 = vmatpush1.bf16.msra.mxu0 0
    %1293 = vmatprep.subr.bf16.mxu0 0
    %1294 = vmatpush1.bf16.msra.mxu0 0
    %1295 = vmatprep.subr.bf16.mxu0 0
    %1296 = vmatpush1.bf16.msra.mxu0 0
    %1297 = vmatprep.subr.bf16.mxu0 0
    %1298 = vmatpush1.bf16.msra.mxu0 0
    %1299 = vmatprep.subr.bf16.mxu0 0
    %1300 = vmatpush1.bf16.msra.mxu0 0
    %1301 = vmatprep.subr.bf16.mxu0 0
    %1302 = vmatpush1.bf16.msra.mxu0 0
    %1303 = vmatprep.subr.bf16.mxu0 0
    %1304 = vmatpush1.bf16.msra.mxu0 0
    %1305 = vmatprep.subr.bf16.mxu0 0
    %1306 = vmatpush1.bf16.msra.mxu0 0
    %1307 = vmatprep.mubr.bf16.mxu0 0
    %1308 = vmatmul.mubr.bf16.gmra.mrb[0].mxu0 %v1274
    %v1309 = vpop.f32.mrb[0].mxu0
    %v1310 = vadd.f32 %v437, %v1309
    %v1311 = vpop.f32.mrb[0].mxu0
    %v1312 = vpop.f32.mrb[0].mxu0
    %v1313 = vpop.f32.mrb[0].mxu0
    %1314 = vdwg.mxu0
    %v1315 = vadd.f32 %v1226, %v1310
    %v1316 = vmax.f32 %v1315, 0.0
    %v1317 = vpack.c.bf16 %v1316, %v1316
    %1318 = vmatprep.subr.bf16.mxu0 0
    %1319 = vmatpush1.bf16.msra.mxu0 %v583
    %1320 = vmatprep.subr.bf16.mxu0 0
    %1321 = vmatpush1.bf16.msra.mxu0 %v584
    %1322 = vmatprep.subr.bf16.mxu0 0
    %1323 = vmatpush1.bf16.msra.mxu0 %v585
    %1324 = vmatprep.subr.bf16.mxu0 0
    %1325 = vmatpush1.bf16.msra.mxu0 %v586
    %1326 = vmatprep.subr.bf16.mxu0 0
    %1327 = vmatpush1.bf16.msra.mxu0 %v587
    %1328 = vmatprep.subr.bf16.mxu0 0
    %1329 = vmatpush1.bf16.msra.mxu0 %v588
    %1330 = vmatprep.subr.bf16.mxu0 0
    %1331 = vmatpush1.bf16.msra.mxu0 %v589
    %1332 = vmatprep.subr.bf16.mxu0 0
    %1333 = vmatpush1.bf16.msra.mxu0 %v590
    %1334 = vmatprep.subr.bf16.mxu0 0
    %1335 = vmatpush1.bf16.msra.mxu0 0
    %1336 = vmatprep.subr.bf16.mxu0 0
    %1337 = vmatpush1.bf16.msra.mxu0 0
    %1338 = vmatprep.subr.bf16.mxu0 0
    %1339 = vmatpush1.bf16.msra.mxu0 0
    %1340 = vmatprep.subr.bf16.mxu0 0
    %1341 = vmatpush1.bf16.msra.mxu0 0
    %1342 = vmatprep.subr.bf16.mxu0 0
    %1343 = vmatpush1.bf16.msra.mxu0 0
    %1344 = vmatprep.subr.bf16.mxu0 0
    %1345 = vmatpush1.bf16.msra.mxu0 0
    %1346 = vmatprep.subr.bf16.mxu0 0
    %1347 = vmatpush1.bf16.msra.mxu0 0
    %1348 = vmatprep.subr.bf16.mxu0 0
    %1349 = vmatpush1.bf16.msra.mxu0 0
    %1350 = vmatprep.mubr.bf16.mxu0 0
    %1351 = vmatmul.mubr.bf16.gmra.mrb[0].mxu0 %v1317
    %v1352 = vpop.f32.mrb[0].mxu0
    %v1353 = vadd.f32 %v550, %v1352
    %v1354 = vpop.f32.mrb[0].mxu0
    %v1355 = vpop.f32.mrb[0].mxu0
    %v1356 = vpop.f32.mrb[0].mxu0
    %1357 = vdwg.mxu0
    %v1358 = vmax.f32 %v1353, 0.0
    %v1359 = vpack.c.bf16 %v1358, %v1358
    %1360 = vmatprep.subr.bf16.mxu0 0
    %1361 = vmatpush1.bf16.msra.mxu0 %v695
    %1362 = vmatprep.subr.bf16.mxu0 0
    %1363 = vmatpush1.bf16.msra.mxu0 %v696
    %1364 = vmatprep.subr.bf16.mxu0 0
    %1365 = vmatpush1.bf16.msra.mxu0 %v697
    %1366 = vmatprep.subr.bf16.mxu0 0
    %1367 = vmatpush1.bf16.msra.mxu0 %v698
    %1368 = vmatprep.subr.bf16.mxu0 0
    %1369 = vmatpush1.bf16.msra.mxu0 %v699
    %1370 = vmatprep.subr.bf16.mxu0 0
    %1371 = vmatpush1.bf16.msra.mxu0 %v700
    %1372 = vmatprep.subr.bf16.mxu0 0
    %1373 = vmatpush1.bf16.msra.mxu0 %v701
    %1374 = vmatprep.subr.bf16.mxu0 0
    %1375 = vmatpush1.bf16.msra.mxu0 %v702
    %1376 = vmatprep.subr.bf16.mxu0 0
    %1377 = vmatpush1.bf16.msra.mxu0 0
    %1378 = vmatprep.subr.bf16.mxu0 0
    %1379 = vmatpush1.bf16.msra.mxu0 0
    %1380 = vmatprep.subr.bf16.mxu0 0
    %1381 = vmatpush1.bf16.msra.mxu0 0
    %1382 = vmatprep.subr.bf16.mxu0 0
    %1383 = vmatpush1.bf16.msra.mxu0 0
    %1384 = vmatprep.subr.bf16.mxu0 0
    %1385 = vmatpush1.bf16.msra.mxu0 0
    %1386 = vmatprep.subr.bf16.mxu0 0
    %1387 = vmatpush1.bf16.msra.mxu0 0
    %1388 = vmatprep.subr.bf16.mxu0 0
    %1389 = vmatpush1.bf16.msra.mxu0 0
    %1390 = vmatprep.subr.bf16.mxu0 0
    %1391 = vmatpush1.bf16.msra.mxu0 0
    %1392 = vmatprep.mubr.bf16.mxu0 0
    %1393 = vmatmul.mubr.bf16.gmra.mrb[0].mxu0 %v1359
    %v1394 = vpop.f32.mrb[0].mxu0
    %v1395 = vadd.f32 %v662, %v1394
    %v1396 = vpop.f32.mrb[0].mxu0
    %v1397 = vpop.f32.mrb[0].mxu0
    %v1398 = vpop.f32.mrb[0].mxu0
    %1399 = vdwg.mxu0
    %v1400 = vadd.f32 %v1315, %v1395
    %v1401 = vpack.c.bf16 %v1400, %v1400
    %s1402 = scalar_lea.vmem %s8, 64
    %v1403 = vld [vmem:[%s1402] sm:$0xf]
    %v1404 = vld [vmem:[%s1402 + $0x4] sm:$0xf]
    %v1405 = vld [vmem:[%s1402 + $0x8] sm:$0xf]
    %v1406 = vld [vmem:[%s1402 + $0xc] sm:$0xf]
    %v1407 = vld [vmem:[%s1402 + $0x10] sm:$0xf]
    %v1408 = vld [vmem:[%s1402 + $0x14] sm:$0xf]
    %v1409 = vld [vmem:[%s1402 + $0x18] sm:$0xf]
    %v1410 = vld [vmem:[%s1402 + $0x1c] sm:$0xf]
    %v1411 = vld [vmem:[%s1402 + $0x20] sm:$0xf]
    %v1412 = vld [vmem:[%s1402 + $0x24] sm:$0xf]
    %v1413 = vld [vmem:[%s1402 + $0x28] sm:$0xf]
    %v1414 = vld [vmem:[%s1402 + $0x2c] sm:$0xf]
    %v1415 = vld [vmem:[%s1402 + $0x30] sm:$0xf]
    %v1416 = vld [vmem:[%s1402 + $0x34] sm:$0xf]
    %v1417 = vld [vmem:[%s1402 + $0x38] sm:$0xf]
    %v1418 = vld [vmem:[%s1402 + $0x3c] sm:$0xf]
    %v1419 = vld [vmem:[%s9 + $0x1] sm:$0x1]
    %v1420 = vlaneseq
    %v1421 = vshrl.u32 %v1420, 7
    %v1422 = vsub.s32 0, %v1421
    %v1423 = vrot.slane %v1419, %v1422
    %v1440 = vunpack.c.l.b16 %v1403
    %v1441 = vunpack.c.l.b16 %v1404
    %v1442 = vunpack.c.l.b16 %v1405
    %v1443 = vunpack.c.l.b16 %v1406
    %v1444 = vunpack.c.l.b16 %v1407
    %v1445 = vunpack.c.l.b16 %v1408
    %v1446 = vunpack.c.l.b16 %v1409
    %v1447 = vunpack.c.l.b16 %v1410
    %v1448 = vunpack.c.l.b16 %v1411
    %v1449 = vunpack.c.l.b16 %v1412
    %v1450 = vunpack.c.l.b16 %v1413
    %v1451 = vunpack.c.l.b16 %v1414
    %v1452 = vunpack.c.l.b16 %v1415
    %v1453 = vunpack.c.l.b16 %v1416
    %v1454 = vunpack.c.l.b16 %v1417
    %v1455 = vunpack.c.l.b16 %v1418
    %v1456 = vpack.c.b16 %v1441, %v1440
    %v1457 = vpack.c.b16 %v1443, %v1442
    %v1458 = vpack.c.b16 %v1445, %v1444
    %v1459 = vpack.c.b16 %v1447, %v1446
    %v1460 = vpack.c.b16 %v1449, %v1448
    %v1461 = vpack.c.b16 %v1451, %v1450
    %v1462 = vpack.c.b16 %v1453, %v1452
    %v1463 = vpack.c.b16 %v1455, %v1454
    %1472 = vmatprep.subr.bf16.mxu0 0
    %1473 = vmatpush1.bf16.msra.mxu0 %v1456
    %1474 = vmatprep.subr.bf16.mxu0 0
    %1475 = vmatpush1.bf16.msra.mxu0 %v1457
    %1476 = vmatprep.subr.bf16.mxu0 0
    %1477 = vmatpush1.bf16.msra.mxu0 %v1458
    %1478 = vmatprep.subr.bf16.mxu0 0
    %1479 = vmatpush1.bf16.msra.mxu0 %v1459
    %1480 = vmatprep.subr.bf16.mxu0 0
    %1481 = vmatpush1.bf16.msra.mxu0 %v1460
    %1482 = vmatprep.subr.bf16.mxu0 0
    %1483 = vmatpush1.bf16.msra.mxu0 %v1461
    %1484 = vmatprep.subr.bf16.mxu0 0
    %1485 = vmatpush1.bf16.msra.mxu0 %v1462
    %1486 = vmatprep.subr.bf16.mxu0 0
    %1487 = vmatpush1.bf16.msra.mxu0 %v1463
    %1488 = vmatprep.subr.bf16.mxu0 0
    %1489 = vmatpush1.bf16.msra.mxu0 0
    %1490 = vmatprep.subr.bf16.mxu0 0
    %1491 = vmatpush1.bf16.msra.mxu0 0
    %1492 = vmatprep.subr.bf16.mxu0 0
    %1493 = vmatpush1.bf16.msra.mxu0 0
    %1494 = vmatprep.subr.bf16.mxu0 0
    %1495 = vmatpush1.bf16.msra.mxu0 0
    %1496 = vmatprep.subr.bf16.mxu0 0
    %1497 = vmatpush1.bf16.msra.mxu0 0
    %1498 = vmatprep.subr.bf16.mxu0 0
    %1499 = vmatpush1.bf16.msra.mxu0 0
    %1500 = vmatprep.subr.bf16.mxu0 0
    %1501 = vmatpush1.bf16.msra.mxu0 0
    %1502 = vmatprep.subr.bf16.mxu0 0
    %1503 = vmatpush1.bf16.msra.mxu0 0
    %1504 = vmatprep.mubr.bf16.mxu0 0
    %1505 = vmatmul.mubr.bf16.gmra.mrb[0].mxu0 %v1401
    %v1506 = vpop.f32.mrb[0].mxu0
    %v1507 = vadd.f32 %v1423, %v1506
    %v1508 = vpop.f32.mrb[0].mxu0
    %v1509 = vpop.f32.mrb[0].mxu0
    %v1510 = vpop.f32.mrb[0].mxu0
    %1511 = vdwg.mxu0
    %v1512 = vmul.f32 %v1507, 0.088388346
    %v1513 = vsel %vm868, %v1512, -inf
    %1514 = vmax.xlane.f32.xlu0 %v1513
    %v1515 = vpop.xlane.xlu0 %1514
    %v1516 = vsub.f32 %v1512, %v1515
    %v1517 = vmul.f32 %v1516, 1.442695
    %v1518 = vpow.pop %v1517
    %v1519 = vsel %vm868, %v1518, 0.0
    %1520 = vadd.xlane.f32.xlu0 %v1519
    %v1521 = vpop.xlane.xlu0 %1520
    %v1522 = vrcp.pop %v1521
    %v1523 = vmul.f32 %v1518, %v1522
    %v1524 = vmul.f32 %v1523, 0.992
    %v1525 = vadd.f32 %v1524, 0.001
    %v1526 = vsel %vm882, %v1512, -inf
    %1527 = vmax.xlane.f32.xlu0 %v1526
    %v1528 = vpop.xlane.xlu0 %1527
    %v1529 = vsub.f32 %v1512, %v1528
    %v1530 = vmul.f32 %v1529, 1.442695
    %v1531 = vpow.pop %v1530
    %1533 = vrot.lane.b32.xlu0 %v1531, 120
    %v1534 = vpop.permute.xlu0 %1533
    %v1536 = vsel %vm868, %v1534, 0.0
    %1537 = vadd.xlane.f32.xlu0 %v1536
    %v1538 = vpop.xlane.xlu0 %1537
    %v1539 = vrcp.pop %v1538
    %v1540 = vmul.f32 %v1531, %v1539
    %v1541 = vmul.f32 %v1540, 0.992
    %v1542 = vadd.f32 %v1541, 0.001
    %v1544 = vsel %vm868, %v1525, 0
    %1546 = vmatprep.subr.mxu0 0.0
    %1547 = vmatpush1.msra.mxu0 %v80
    %1548 = vmatprep.subr.mxu0 0.0
    %1549 = vmatpush1.msra.mxu0 0.0
    %1550 = vmatprep.subr.mxu0 0.0
    %1551 = vmatpush1.msra.mxu0 0.0
    %1552 = vmatprep.subr.mxu0 0.0
    %1553 = vmatpush1.msra.mxu0 0.0
    %1554 = vmatprep.subr.mxu0 0.0
    %1555 = vmatpush1.msra.mxu0 0.0
    %1556 = vmatprep.subr.mxu0 0.0
    %1557 = vmatpush1.msra.mxu0 0.0
    %1558 = vmatprep.subr.mxu0 0.0
    %1559 = vmatpush1.msra.mxu0 0.0
    %1560 = vmatprep.subr.mxu0 0.0
    %1561 = vmatpush1.msra.mxu0 0.0
    %1562 = vmatprep.subr.mxu0 0.0
    %1563 = vmatpush1.msra.mxu0 0.0
    %1564 = vmatprep.subr.mxu0 0.0
    %1565 = vmatpush1.msra.mxu0 0.0
    %1566 = vmatprep.subr.mxu0 0.0
    %1567 = vmatpush1.msra.mxu0 0.0
    %1568 = vmatprep.subr.mxu0 0.0
    %1569 = vmatpush1.msra.mxu0 0.0
    %1570 = vmatprep.subr.mxu0 0.0
    %1571 = vmatpush1.msra.mxu0 0.0
    %1572 = vmatprep.subr.mxu0 0.0
    %1573 = vmatpush1.msra.mxu0 0.0
    %1574 = vmatprep.subr.mxu0 0.0
    %1575 = vmatpush1.msra.mxu0 0.0
    %1576 = vmatprep.subr.mxu0 0.0
    %1577 = vmatpush1.msra.mxu0 0.0
    %1578 = vmatprep.subr.mxu0 0.0
    %1579 = vmatpush1.msra.mxu0 0.0
    %1580 = vmatprep.subr.mxu0 0.0
    %1581 = vmatpush1.msra.mxu0 0.0
    %1582 = vmatprep.subr.mxu0 0.0
    %1583 = vmatpush1.msra.mxu0 0.0
    %1584 = vmatprep.subr.mxu0 0.0
    %1585 = vmatpush1.msra.mxu0 0.0
    %1586 = vmatprep.subr.mxu0 0.0
    %1587 = vmatpush1.msra.mxu0 0.0
    %1588 = vmatprep.subr.mxu0 0.0
    %1589 = vmatpush1.msra.mxu0 0.0
    %1590 = vmatprep.subr.mxu0 0.0
    %1591 = vmatpush1.msra.mxu0 0.0
    %1592 = vmatprep.subr.mxu0 0.0
    %1593 = vmatpush1.msra.mxu0 0.0
    %1594 = vmatprep.subr.mxu0 0.0
    %1595 = vmatpush1.msra.mxu0 0.0
    %1596 = vmatprep.subr.mxu0 0.0
    %1597 = vmatpush1.msra.mxu0 0.0
    %1598 = vmatprep.subr.mxu0 0.0
    %1599 = vmatpush1.msra.mxu0 0.0
    %1600 = vmatprep.subr.mxu0 0.0
    %1601 = vmatpush1.msra.mxu0 0.0
    %1602 = vmatprep.subr.mxu0 0.0
    %1603 = vmatpush1.msra.mxu0 0.0
    %1604 = vmatprep.subr.mxu0 0.0
    %1605 = vmatpush1.msra.mxu0 0.0
    %1606 = vmatprep.subr.mxu0 0.0
    %1607 = vmatpush1.msra.mxu0 0.0
    %1608 = vmatprep.subr.mxu0 0.0
    %1609 = vmatpush1.msra.mxu0 0.0
    %1610 = vmatprep.mubr.f32.mxu0 0.0
    %1611 = vmatmul.mubr.f32.gmra.mrb[0].mxu0 %v1544
    %v1612 = vpop.f32.mrb[0].mxu0
    %v1613 = vadd.f32 0.0, %v1612
    %v1614 = vpop.f32.mrb[0].mxu0
    %1615 = vdwg.mxu0
    %v1616 = vmul.f32 %v1613, 6.0
    %v1617 = vadd.f32 %v1616, -3.0
    %1619 = vrot.lane.b32.xlu0 %v1542, 120
    %v1620 = vpop.permute.xlu0 %1619
    %v1621 = vsel %vm868, %v1620, 0
    %1623 = vmatprep.subr.mxu0 0.0
    %1624 = vmatpush1.msra.mxu0 %v80
    %1625 = vmatprep.subr.mxu0 0.0
    %1626 = vmatpush1.msra.mxu0 0.0
    %1627 = vmatprep.subr.mxu0 0.0
    %1628 = vmatpush1.msra.mxu0 0.0
    %1629 = vmatprep.subr.mxu0 0.0
    %1630 = vmatpush1.msra.mxu0 0.0
    %1631 = vmatprep.subr.mxu0 0.0
    %1632 = vmatpush1.msra.mxu0 0.0
    %1633 = vmatprep.subr.mxu0 0.0
    %1634 = vmatpush1.msra.mxu0 0.0
    %1635 = vmatprep.subr.mxu0 0.0
    %1636 = vmatpush1.msra.mxu0 0.0
    %1637 = vmatprep.subr.mxu0 0.0
    %1638 = vmatpush1.msra.mxu0 0.0
    %1639 = vmatprep.subr.mxu0 0.0
    %1640 = vmatpush1.msra.mxu0 0.0
    %1641 = vmatprep.subr.mxu0 0.0
    %1642 = vmatpush1.msra.mxu0 0.0
    %1643 = vmatprep.subr.mxu0 0.0
    %1644 = vmatpush1.msra.mxu0 0.0
    %1645 = vmatprep.subr.mxu0 0.0
    %1646 = vmatpush1.msra.mxu0 0.0
    %1647 = vmatprep.subr.mxu0 0.0
    %1648 = vmatpush1.msra.mxu0 0.0
    %1649 = vmatprep.subr.mxu0 0.0
    %1650 = vmatpush1.msra.mxu0 0.0
    %1651 = vmatprep.subr.mxu0 0.0
    %1652 = vmatpush1.msra.mxu0 0.0
    %1653 = vmatprep.subr.mxu0 0.0
    %1654 = vmatpush1.msra.mxu0 0.0
    %1655 = vmatprep.subr.mxu0 0.0
    %1656 = vmatpush1.msra.mxu0 0.0
    %1657 = vmatprep.subr.mxu0 0.0
    %1658 = vmatpush1.msra.mxu0 0.0
    %1659 = vmatprep.subr.mxu0 0.0
    %1660 = vmatpush1.msra.mxu0 0.0
    %1661 = vmatprep.subr.mxu0 0.0
    %1662 = vmatpush1.msra.mxu0 0.0
    %1663 = vmatprep.subr.mxu0 0.0
    %1664 = vmatpush1.msra.mxu0 0.0
    %1665 = vmatprep.subr.mxu0 0.0
    %1666 = vmatpush1.msra.mxu0 0.0
    %1667 = vmatprep.subr.mxu0 0.0
    %1668 = vmatpush1.msra.mxu0 0.0
    %1669 = vmatprep.subr.mxu0 0.0
    %1670 = vmatpush1.msra.mxu0 0.0
    %1671 = vmatprep.subr.mxu0 0.0
    %1672 = vmatpush1.msra.mxu0 0.0
    %1673 = vmatprep.subr.mxu0 0.0
    %1674 = vmatpush1.msra.mxu0 0.0
    %1675 = vmatprep.subr.mxu0 0.0
    %1676 = vmatpush1.msra.mxu0 0.0
    %1677 = vmatprep.subr.mxu0 0.0
    %1678 = vmatpush1.msra.mxu0 0.0
    %1679 = vmatprep.subr.mxu0 0.0
    %1680 = vmatpush1.msra.mxu0 0.0
    %1681 = vmatprep.subr.mxu0 0.0
    %1682 = vmatpush1.msra.mxu0 0.0
    %1683 = vmatprep.subr.mxu0 0.0
    %1684 = vmatpush1.msra.mxu0 0.0
    %1685 = vmatprep.subr.mxu0 0.0
    %1686 = vmatpush1.msra.mxu0 0.0
    %1687 = vmatprep.mubr.f32.mxu0 0.0
    %1688 = vmatmul.mubr.f32.gmra.mrb[0].mxu0 %v1621
    %v1689 = vpop.f32.mrb[0].mxu0
    %v1690 = vadd.f32 0.0, %v1689
    %v1691 = vpop.f32.mrb[0].mxu0
    %1692 = vdwg.mxu0
    %v1693 = vmul.f32 %v1690, 6.0
    %v1694 = vadd.f32 %v1693, -3.0
    %v1695 = vsel %vm81, 3.0, %v1617
    %v1696 = vsel %vm81, 3.0, %v1694
    %v1697 = vadd.f32 %v1696, 1e-06
    %v1698 = vsel %vm81, %v1697, %v1694
    %1699 = vset.pattern.permute.xlu0 1
    %1700 = vperm.xlu0 %1699, %v867
    %v1701 = vpop.permute.xlu0 %1700
    %vm1703 = vcmp.ge.f32.partialorder %v1701, %v1698
    %v1704 = vsel %vm1703, 1, 0
    %v1705 = vsel %vm868, %v1704, 0
    %v1706 = vand.u32 %v1705, 65535
    %v1707 = vshrl.u32 %v1705, 16
    %v1708 = vcvt.s32.f32 %v1706
    %v1709 = vcvt.s32.f32 %v1707
    %1710 = vadd.xlane.f32.xlu0 %v1708
    %v1711 = vpop.xlane.xlu0 %1710
    %1712 = vadd.xlane.f32.xlu0 %v1709
    %v1713 = vpop.xlane.xlu0 %1712
    %v1714 = vcvt.f32.s32 %v1711
    %v1715 = vcvt.f32.s32 %v1713
    %v1716 = vshll.u32 %v1715, 16
    %v1717 = vadd.s32 %v1716, %v1714
    %vm1718 = vcmp.eq.s32.totalorder %v1717, %v77
    %v1719 = vsub.s32 %v1717, 1
    %vm1720 = vcmp.eq.s32.totalorder %v1719, %v77
    %vm1721 = vcmp.eq.s32.totalorder %v1717, 0
    %v1722 = vsel %vm1718, %v1695, 0.0
    %v1723 = vsel %vm868, %v1722, 0.0
    %1724 = vadd.xlane.f32.xlu0 %v1723
    %v1725 = vpop.xlane.xlu0 %1724
    %v1726 = vsel %vm1720, %v1695, 0.0
    %v1727 = vsel %vm868, %v1726, 0.0
    %1728 = vadd.xlane.f32.xlu0 %v1727
    %v1729 = vpop.xlane.xlu0 %1728
    %v1730 = vsel %vm1721, -3.0, %v1729
    %v1731 = vsel %vm1718, %v1696, 0.0
    %v1732 = vsel %vm868, %v1731, 0.0
    %1733 = vadd.xlane.f32.xlu0 %v1732
    %v1734 = vpop.xlane.xlu0 %1733
    %v1735 = vsel %vm1720, %v1696, 0.0
    %v1736 = vsel %vm868, %v1735, 0.0
    %1737 = vadd.xlane.f32.xlu0 %v1736
    %v1738 = vpop.xlane.xlu0 %1737
    %v1739 = vsel %vm1721, -3.0, %v1738
    %v1740 = vsub.f32 %v1725, %v1730
    %v1741 = vsub.f32 %v1734, %v1739
    %v1742 = vrcp.pop %v1740
    %v1743 = vmul.f32 %v1741, %v1742
    %v1744 = vmax.f32 %v1507, 0.0
    %v1745 = vand.u32 2147483647, %v1507
    %v1746 = vsub.f32 0.0, %v1745
    %v1747 = vmul.f32 %v1746, 1.442695
    %v1748 = vpow.pop %v1747
    %v1749 = vadd.f32 %v1748, 1.0
    %v1750 = vlog2.pop %v1749
    %v1751 = vmul.f32 %v1750, 0.6931472
    %v1752 = vadd.f32 %v1744, %v1751
    %v1753 = vadd.f32 %v1752, 0.001
    %1755 = vrot.lane.b32.xlu0 %v1753, 112
    %v1756 = vpop.permute.xlu0 %1755
    %v1758 = vsel %vm1720, %v1756, 0.0
    %v1759 = vsel %vm1117, %v1758, 0.0
    %1760 = vadd.xlane.f32.xlu0 %v1759
    %v1761 = vpop.xlane.xlu0 %1760
    %v1762 = vsel %vm1721, 1.0, %v1761
    %vm1763 = vcmp.eq.s32.totalorder %v1717, 7
    %v1764 = vsel %vm1718, %v1756, 0.0
    %v1765 = vsel %vm1117, %v1764, 0.0
    %1766 = vadd.xlane.f32.xlu0 %v1765
    %v1767 = vpop.xlane.xlu0 %1766
    %v1768 = vsel %vm1763, 1.0, %v1767
    %v1769 = vsub.f32 %v867, %v1739
    %v1770 = vadd.f32 %v1762, %v1768
    %v1771 = vmul.f32 %v1743, 2.0
    %v1772 = vsub.f32 %v1770, %v1771
    %v1773 = vmul.f32 %v1769, %v1772
    %v1774 = vsub.f32 %v1743, %v1762
    %v1775 = vmul.f32 %v1741, %v1774
    %v1776 = vadd.f32 %v1773, %v1775
    %v1777 = vmul.f32 %v1741, %v1762
    %v1778 = vsub.f32 %v1777, %v1773
    %v1779 = vsub.f32 0.0, %v1743
    %v1780 = vmul.f32 %v1779, %v1769
    %v1781 = vmul.f32 %v1778, %v1778
    %v1782 = vmul.f32 %v1776, 4.0
    %v1783 = vmul.f32 %v1782, %v1780
    %v1784 = vsub.f32 %v1781, %v1783
    %v1785 = vmax.f32 %v1784, 0.0
    %v1786 = vmul.f32 %v1780, 2.0
    %v1787 = vsub.f32 0.0, %v1778
    %v1788 = vrsqrt.pop %v1785
    %v1789 = vmul.f32 %v1785, %v1788
    %vm1790 = vcmp.eq.f32.partialorder %v1785, inf
    %v1791 = vsel %vm1790, %v1785, %v1789
    %vm1792 = vcmp.eq.f32.partialorder %v1785, 0.0
    %v1793 = vand.u32 %v1785, 2147483648
    %v1794 = vsel %vm1792, %v1793, %v1791
    %v1795 = vsub.f32 %v1787, %v1794
    %v1796 = vrcp.pop %v1795
    %v1797 = vmul.f32 %v1786, %v1796
    %v1798 = vmul.f32 %v1797, %v1740
    %v1799 = vadd.f32 %v1798, %v1730
    %v1800 = vsub.f32 1.0, %v1797
    %v1801 = vmul.f32 %v1797, %v1800
    %v1802 = vmul.f32 %v1772, %v1801
    %v1803 = vadd.f32 %v1743, %v1802
    %v1804 = vmul.f32 %v1743, %v1743
    %v1805 = vmul.f32 %v1768, %v1797
    %v1806 = vmul.f32 %v1805, %v1797
    %v1807 = vmul.f32 %v1771, %v1801
    %v1808 = vadd.f32 %v1806, %v1807
    %v1809 = vmul.f32 %v1762, %v1800
    %v1810 = vmul.f32 %v1809, %v1800
    %v1811 = vadd.f32 %v1808, %v1810
    %v1812 = vmul.f32 %v1804, %v1811
    %v1813 = vlog2.pop %v1803
    %v1814 = vmul.f32 %v1813, 0.6931472
    %v1815 = vmul.f32 %v1814, 2.0
    %v1816 = vlog2.pop %v1812
    %v1817 = vmul.f32 %v1816, 0.6931472
    %v1818 = vsub.f32 %v1815, %v1817
    %v1819 = vsel %vm865, %v1799, %v239
    %v1820 = vsel %vm865, %v1818, 0.0
    %1822 = vset.pattern.permute.xlu0 1
    %1823 = vperm.xlu0 %1822, %v1819
    %v1824 = vpop.permute.xlu0 %1823
    %v1826 = vsel %vm83, %v1824, %v1185
    %1828 = vrot.lane.b32.xlu0 %v1820, 127
    %v1829 = vpop.permute.xlu0 %1828
    %v1831 = vadd.f32 %v1186, %v1829
    %v1832 = vsub.f32 %v249, %v1831
    %v1833 = vld [vmem:[%s11] sm:$0x1]
    %v1834 = vlaneseq
    %v1835 = vshrl.u32 %v1834, 7
    %v1836 = vsub.s32 0, %v1835
    %v1837 = vrot.slane %v1833, %v1836
    %v1838 = vsub.f32 %v1826, %v1837
    %v1839 = vpack.c.bf16 %v1838, %v1838
    %v1840 = vld [vmem:[%s10] sm:$0x1]
    %v1842 = vsel %vm245, %v1839, 0
    %v1845 = vsel %vm259, %v1840, 0
    %1847 = vmatprep.subr.bf16.mxu0 0
    %1848 = vmatpush1.bf16.msra.mxu0 %v1845
    %1849 = vmatprep.subr.bf16.mxu0 0
    %1850 = vmatpush1.bf16.msra.mxu0 0
    %1851 = vmatprep.subr.bf16.mxu0 0
    %1852 = vmatpush1.bf16.msra.mxu0 0
    %1853 = vmatprep.subr.bf16.mxu0 0
    %1854 = vmatpush1.bf16.msra.mxu0 0
    %1855 = vmatprep.subr.bf16.mxu0 0
    %1856 = vmatpush1.bf16.msra.mxu0 0
    %1857 = vmatprep.subr.bf16.mxu0 0
    %1858 = vmatpush1.bf16.msra.mxu0 0
    %1859 = vmatprep.subr.bf16.mxu0 0
    %1860 = vmatpush1.bf16.msra.mxu0 0
    %1861 = vmatprep.subr.bf16.mxu0 0
    %1862 = vmatpush1.bf16.msra.mxu0 0
    %1863 = vmatprep.subr.bf16.mxu0 0
    %1864 = vmatpush1.bf16.msra.mxu0 0
    %1865 = vmatprep.subr.bf16.mxu0 0
    %1866 = vmatpush1.bf16.msra.mxu0 0
    %1867 = vmatprep.subr.bf16.mxu0 0
    %1868 = vmatpush1.bf16.msra.mxu0 0
    %1869 = vmatprep.subr.bf16.mxu0 0
    %1870 = vmatpush1.bf16.msra.mxu0 0
    %1871 = vmatprep.subr.bf16.mxu0 0
    %1872 = vmatpush1.bf16.msra.mxu0 0
    %1873 = vmatprep.subr.bf16.mxu0 0
    %1874 = vmatpush1.bf16.msra.mxu0 0
    %1875 = vmatprep.subr.bf16.mxu0 0
    %1876 = vmatpush1.bf16.msra.mxu0 0
    %1877 = vmatprep.subr.bf16.mxu0 0
    %1878 = vmatpush1.bf16.msra.mxu0 0
    %1879 = vmatprep.mubr.bf16.mxu0 0
    %1880 = vmatmul.mubr.bf16.gmra.mrb[0].mxu0 %v1842
    %v1881 = vpop.f32.mrb[0].mxu0
    %v1882 = vadd.f32 0.0, %v1881
    %v1883 = vpop.f32.mrb[0].mxu0
    %v1884 = vpop.f32.mrb[0].mxu0
    %v1885 = vpop.f32.mrb[0].mxu0
    %1886 = vdwg.mxu0
    %s1887 = sld [smem:[#allocation5]]
    %v1888 = vstv %s1887
    %v1889 = vsub.f32 %v1832, %v1888
    %s1890 = scalar_lea.vmem %s4, 1
    %v1891 = vld [vmem:[%s1890] sm:$0x1]
    %v1892 = vld [vmem:[%s5 + $0x1] sm:$0x1]
    %v1893 = vlaneseq
    %v1894 = vshrl.u32 %v1893, 7
    %v1895 = vsub.s32 0, %v1894
    %v1896 = vrot.slane %v1892, %v1895
    %v1898 = vsel %vm259, %v1891, 0
    %1900 = vmatprep.subr.bf16.mxu0 0
    %1901 = vmatpush1.bf16.msra.mxu0 %v1898
    %1902 = vmatprep.subr.bf16.mxu0 0
    %1903 = vmatpush1.bf16.msra.mxu0 0
    %1904 = vmatprep.subr.bf16.mxu0 0
    %1905 = vmatpush1.bf16.msra.mxu0 0
    %1906 = vmatprep.subr.bf16.mxu0 0
    %1907 = vmatpush1.bf16.msra.mxu0 0
    %1908 = vmatprep.subr.bf16.mxu0 0
    %1909 = vmatpush1.bf16.msra.mxu0 0
    %1910 = vmatprep.subr.bf16.mxu0 0
    %1911 = vmatpush1.bf16.msra.mxu0 0
    %1912 = vmatprep.subr.bf16.mxu0 0
    %1913 = vmatpush1.bf16.msra.mxu0 0
    %1914 = vmatprep.subr.bf16.mxu0 0
    %1915 = vmatpush1.bf16.msra.mxu0 0
    %1916 = vmatprep.subr.bf16.mxu0 0
    %1917 = vmatpush1.bf16.msra.mxu0 0
    %1918 = vmatprep.subr.bf16.mxu0 0
    %1919 = vmatpush1.bf16.msra.mxu0 0
    %1920 = vmatprep.subr.bf16.mxu0 0
    %1921 = vmatpush1.bf16.msra.mxu0 0
    %1922 = vmatprep.subr.bf16.mxu0 0
    %1923 = vmatpush1.bf16.msra.mxu0 0
    %1924 = vmatprep.subr.bf16.mxu0 0
    %1925 = vmatpush1.bf16.msra.mxu0 0
    %1926 = vmatprep.subr.bf16.mxu0 0
    %1927 = vmatpush1.bf16.msra.mxu0 0
    %1928 = vmatprep.subr.bf16.mxu0 0
    %1929 = vmatpush1.bf16.msra.mxu0 0
    %1930 = vmatprep.subr.bf16.mxu0 0
    %1931 = vmatpush1.bf16.msra.mxu0 0
    %1932 = vmatprep.mubr.bf16.mxu0 0
    %1933 = vmatmul.mubr.bf16.gmra.mrb[0].mxu0 %v257
    %v1934 = vpop.f32.mrb[0].mxu0
    %v1935 = vadd.f32 %v1896, %v1934
    %v1936 = vpop.f32.mrb[0].mxu0
    %v1937 = vpop.f32.mrb[0].mxu0
    %v1938 = vpop.f32.mrb[0].mxu0
    %1939 = vdwg.mxu0
    %v1940 = vmax.f32 %v1935, 0.0
    %v1941 = vpack.c.bf16 %v1940, %v1940
    %s1942 = scalar_lea.vmem [#allocation2], 256
    %v1943 = vld [vmem:[%s1942] sm:$0xf]
    %v1944 = vld [vmem:[%s1942 + $0x4] sm:$0xf]
    %v1945 = vld [vmem:[%s1942 + $0x8] sm:$0xf]
    %v1946 = vld [vmem:[%s1942 + $0xc] sm:$0xf]
    %v1947 = vld [vmem:[%s1942 + $0x10] sm:$0xf]
    %v1948 = vld [vmem:[%s1942 + $0x14] sm:$0xf]
    %v1949 = vld [vmem:[%s1942 + $0x18] sm:$0xf]
    %v1950 = vld [vmem:[%s1942 + $0x1c] sm:$0xf]
    %v1951 = vld [vmem:[%s1942 + $0x20] sm:$0xf]
    %v1952 = vld [vmem:[%s1942 + $0x24] sm:$0xf]
    %v1953 = vld [vmem:[%s1942 + $0x28] sm:$0xf]
    %v1954 = vld [vmem:[%s1942 + $0x2c] sm:$0xf]
    %v1955 = vld [vmem:[%s1942 + $0x30] sm:$0xf]
    %v1956 = vld [vmem:[%s1942 + $0x34] sm:$0xf]
    %v1957 = vld [vmem:[%s1942 + $0x38] sm:$0xf]
    %v1958 = vld [vmem:[%s1942 + $0x3c] sm:$0xf]
    %s1959 = scalar_lea.vmem %s7, 4
    %v1960 = vld [vmem:[%s1959] sm:$0x1]
    %v1961 = vlaneseq
    %v1962 = vshrl.u32 %v1961, 7
    %v1963 = vsub.s32 0, %v1962
    %v1964 = vrot.slane %v1960, %v1963
    %v1981 = vunpack.c.l.b16 %v1943
    %v1982 = vunpack.c.l.b16 %v1944
    %v1983 = vunpack.c.l.b16 %v1945
    %v1984 = vunpack.c.l.b16 %v1946
    %v1985 = vunpack.c.l.b16 %v1947
    %v1986 = vunpack.c.l.b16 %v1948
    %v1987 = vunpack.c.l.b16 %v1949
    %v1988 = vunpack.c.l.b16 %v1950
    %v1989 = vunpack.c.l.b16 %v1951
    %v1990 = vunpack.c.l.b16 %v1952
    %v1991 = vunpack.c.l.b16 %v1953
    %v1992 = vunpack.c.l.b16 %v1954
    %v1993 = vunpack.c.l.b16 %v1955
    %v1994 = vunpack.c.l.b16 %v1956
    %v1995 = vunpack.c.l.b16 %v1957
    %v1996 = vunpack.c.l.b16 %v1958
    %v1997 = vpack.c.b16 %v1982, %v1981
    %v1998 = vpack.c.b16 %v1984, %v1983
    %v1999 = vpack.c.b16 %v1986, %v1985
    %v2000 = vpack.c.b16 %v1988, %v1987
    %v2001 = vpack.c.b16 %v1990, %v1989
    %v2002 = vpack.c.b16 %v1992, %v1991
    %v2003 = vpack.c.b16 %v1994, %v1993
    %v2004 = vpack.c.b16 %v1996, %v1995
    %2013 = vmatprep.subr.bf16.mxu0 0
    %2014 = vmatpush1.bf16.msra.mxu0 %v1997
    %2015 = vmatprep.subr.bf16.mxu0 0
    %2016 = vmatpush1.bf16.msra.mxu0 %v1998
    %2017 = vmatprep.subr.bf16.mxu0 0
    %2018 = vmatpush1.bf16.msra.mxu0 %v1999
    %2019 = vmatprep.subr.bf16.mxu0 0
    %2020 = vmatpush1.bf16.msra.mxu0 %v2000
    %2021 = vmatprep.subr.bf16.mxu0 0
    %2022 = vmatpush1.bf16.msra.mxu0 %v2001
    %2023 = vmatprep.subr.bf16.mxu0 0
    %2024 = vmatpush1.bf16.msra.mxu0 %v2002
    %2025 = vmatprep.subr.bf16.mxu0 0
    %2026 = vmatpush1.bf16.msra.mxu0 %v2003
    %2027 = vmatprep.subr.bf16.mxu0 0
    %2028 = vmatpush1.bf16.msra.mxu0 %v2004
    %2029 = vmatprep.subr.bf16.mxu0 0
    %2030 = vmatpush1.bf16.msra.mxu0 0
    %2031 = vmatprep.subr.bf16.mxu0 0
    %2032 = vmatpush1.bf16.msra.mxu0 0
    %2033 = vmatprep.subr.bf16.mxu0 0
    %2034 = vmatpush1.bf16.msra.mxu0 0
    %2035 = vmatprep.subr.bf16.mxu0 0
    %2036 = vmatpush1.bf16.msra.mxu0 0
    %2037 = vmatprep.subr.bf16.mxu0 0
    %2038 = vmatpush1.bf16.msra.mxu0 0
    %2039 = vmatprep.subr.bf16.mxu0 0
    %2040 = vmatpush1.bf16.msra.mxu0 0
    %2041 = vmatprep.subr.bf16.mxu0 0
    %2042 = vmatpush1.bf16.msra.mxu0 0
    %2043 = vmatprep.subr.bf16.mxu0 0
    %2044 = vmatpush1.bf16.msra.mxu0 0
    %2045 = vmatprep.mubr.bf16.mxu0 0
    %2046 = vmatmul.mubr.bf16.gmra.mrb[0].mxu0 %v1941
    %v2047 = vpop.f32.mrb[0].mxu0
    %v2048 = vadd.f32 %v1964, %v2047
    %v2049 = vpop.f32.mrb[0].mxu0
    %v2050 = vpop.f32.mrb[0].mxu0
    %v2051 = vpop.f32.mrb[0].mxu0
    %2052 = vdwg.mxu0
    %v2053 = vmax.f32 %v2048, 0.0
    %v2054 = vpack.c.bf16 %v2053, %v2053
    %s2055 = scalar_lea.vmem [#allocation2], 320
    %v2056 = vld [vmem:[%s2055] sm:$0xf]
    %v2057 = vld [vmem:[%s2055 + $0x4] sm:$0xf]
    %v2058 = vld [vmem:[%s2055 + $0x8] sm:$0xf]
    %v2059 = vld [vmem:[%s2055 + $0xc] sm:$0xf]
    %v2060 = vld [vmem:[%s2055 + $0x10] sm:$0xf]
    %v2061 = vld [vmem:[%s2055 + $0x14] sm:$0xf]
    %v2062 = vld [vmem:[%s2055 + $0x18] sm:$0xf]
    %v2063 = vld [vmem:[%s2055 + $0x1c] sm:$0xf]
    %v2064 = vld [vmem:[%s2055 + $0x20] sm:$0xf]
    %v2065 = vld [vmem:[%s2055 + $0x24] sm:$0xf]
    %v2066 = vld [vmem:[%s2055 + $0x28] sm:$0xf]
    %v2067 = vld [vmem:[%s2055 + $0x2c] sm:$0xf]
    %v2068 = vld [vmem:[%s2055 + $0x30] sm:$0xf]
    %v2069 = vld [vmem:[%s2055 + $0x34] sm:$0xf]
    %v2070 = vld [vmem:[%s2055 + $0x38] sm:$0xf]
    %v2071 = vld [vmem:[%s2055 + $0x3c] sm:$0xf]
    %v2072 = vld [vmem:[%s1959 + $0x1] sm:$0x1]
    %v2073 = vlaneseq
    %v2074 = vshrl.u32 %v2073, 7
    %v2075 = vsub.s32 0, %v2074
    %v2076 = vrot.slane %v2072, %v2075
    %v2093 = vunpack.c.l.b16 %v2056
    %v2094 = vunpack.c.l.b16 %v2057
    %v2095 = vunpack.c.l.b16 %v2058
    %v2096 = vunpack.c.l.b16 %v2059
    %v2097 = vunpack.c.l.b16 %v2060
    %v2098 = vunpack.c.l.b16 %v2061
    %v2099 = vunpack.c.l.b16 %v2062
    %v2100 = vunpack.c.l.b16 %v2063
    %v2101 = vunpack.c.l.b16 %v2064
    %v2102 = vunpack.c.l.b16 %v2065
    %v2103 = vunpack.c.l.b16 %v2066
    %v2104 = vunpack.c.l.b16 %v2067
    %v2105 = vunpack.c.l.b16 %v2068
    %v2106 = vunpack.c.l.b16 %v2069
    %v2107 = vunpack.c.l.b16 %v2070
    %v2108 = vunpack.c.l.b16 %v2071
    %v2109 = vpack.c.b16 %v2094, %v2093
    %v2110 = vpack.c.b16 %v2096, %v2095
    %v2111 = vpack.c.b16 %v2098, %v2097
    %v2112 = vpack.c.b16 %v2100, %v2099
    %v2113 = vpack.c.b16 %v2102, %v2101
    %v2114 = vpack.c.b16 %v2104, %v2103
    %v2115 = vpack.c.b16 %v2106, %v2105
    %v2116 = vpack.c.b16 %v2108, %v2107
    %2125 = vmatprep.subr.bf16.mxu0 0
    %2126 = vmatpush1.bf16.msra.mxu0 %v2109
    %2127 = vmatprep.subr.bf16.mxu0 0
    %2128 = vmatpush1.bf16.msra.mxu0 %v2110
    %2129 = vmatprep.subr.bf16.mxu0 0
    %2130 = vmatpush1.bf16.msra.mxu0 %v2111
    %2131 = vmatprep.subr.bf16.mxu0 0
    %2132 = vmatpush1.bf16.msra.mxu0 %v2112
    %2133 = vmatprep.subr.bf16.mxu0 0
    %2134 = vmatpush1.bf16.msra.mxu0 %v2113
    %2135 = vmatprep.subr.bf16.mxu0 0
    %2136 = vmatpush1.bf16.msra.mxu0 %v2114
    %2137 = vmatprep.subr.bf16.mxu0 0
    %2138 = vmatpush1.bf16.msra.mxu0 %v2115
    %2139 = vmatprep.subr.bf16.mxu0 0
    %2140 = vmatpush1.bf16.msra.mxu0 %v2116
    %2141 = vmatprep.subr.bf16.mxu0 0
    %2142 = vmatpush1.bf16.msra.mxu0 0
    %2143 = vmatprep.subr.bf16.mxu0 0
    %2144 = vmatpush1.bf16.msra.mxu0 0
    %2145 = vmatprep.subr.bf16.mxu0 0
    %2146 = vmatpush1.bf16.msra.mxu0 0
    %2147 = vmatprep.subr.bf16.mxu0 0
    %2148 = vmatpush1.bf16.msra.mxu0 0
    %2149 = vmatprep.subr.bf16.mxu0 0
    %2150 = vmatpush1.bf16.msra.mxu0 0
    %2151 = vmatprep.subr.bf16.mxu0 0
    %2152 = vmatpush1.bf16.msra.mxu0 0
    %2153 = vmatprep.subr.bf16.mxu0 0
    %2154 = vmatpush1.bf16.msra.mxu0 0
    %2155 = vmatprep.subr.bf16.mxu0 0
    %2156 = vmatpush1.bf16.msra.mxu0 0
    %2157 = vmatprep.mubr.bf16.mxu0 0
    %2158 = vmatmul.mubr.bf16.gmra.mrb[0].mxu0 %v2054
    %v2159 = vpop.f32.mrb[0].mxu0
    %v2160 = vadd.f32 %v2076, %v2159
    %v2161 = vpop.f32.mrb[0].mxu0
    %v2162 = vpop.f32.mrb[0].mxu0
    %v2163 = vpop.f32.mrb[0].mxu0
    %2164 = vdwg.mxu0
    %v2165 = vadd.f32 %v1935, %v2160
    %v2166 = vmax.f32 %v2165, 0.0
    %v2167 = vpack.c.bf16 %v2166, %v2166
    %s2168 = scalar_lea.vmem [#allocation2], 384
    %v2169 = vld [vmem:[%s2168] sm:$0xf]
    %v2170 = vld [vmem:[%s2168 + $0x4] sm:$0xf]
    %v2171 = vld [vmem:[%s2168 + $0x8] sm:$0xf]
    %v2172 = vld [vmem:[%s2168 + $0xc] sm:$0xf]
    %v2173 = vld [vmem:[%s2168 + $0x10] sm:$0xf]
    %v2174 = vld [vmem:[%s2168 + $0x14] sm:$0xf]
    %v2175 = vld [vmem:[%s2168 + $0x18] sm:$0xf]
    %v2176 = vld [vmem:[%s2168 + $0x1c] sm:$0xf]
    %v2177 = vld [vmem:[%s2168 + $0x20] sm:$0xf]
    %v2178 = vld [vmem:[%s2168 + $0x24] sm:$0xf]
    %v2179 = vld [vmem:[%s2168 + $0x28] sm:$0xf]
    %v2180 = vld [vmem:[%s2168 + $0x2c] sm:$0xf]
    %v2181 = vld [vmem:[%s2168 + $0x30] sm:$0xf]
    %v2182 = vld [vmem:[%s2168 + $0x34] sm:$0xf]
    %v2183 = vld [vmem:[%s2168 + $0x38] sm:$0xf]
    %v2184 = vld [vmem:[%s2168 + $0x3c] sm:$0xf]
    %v2185 = vld [vmem:[%s1959 + $0x2] sm:$0x1]
    %v2186 = vlaneseq
    %v2187 = vshrl.u32 %v2186, 7
    %v2188 = vsub.s32 0, %v2187
    %v2189 = vrot.slane %v2185, %v2188
    %v2206 = vunpack.c.l.b16 %v2169
    %v2207 = vunpack.c.l.b16 %v2170
    %v2208 = vunpack.c.l.b16 %v2171
    %v2209 = vunpack.c.l.b16 %v2172
    %v2210 = vunpack.c.l.b16 %v2173
    %v2211 = vunpack.c.l.b16 %v2174
    %v2212 = vunpack.c.l.b16 %v2175
    %v2213 = vunpack.c.l.b16 %v2176
    %v2214 = vunpack.c.l.b16 %v2177
    %v2215 = vunpack.c.l.b16 %v2178
    %v2216 = vunpack.c.l.b16 %v2179
    %v2217 = vunpack.c.l.b16 %v2180
    %v2218 = vunpack.c.l.b16 %v2181
    %v2219 = vunpack.c.l.b16 %v2182
    %v2220 = vunpack.c.l.b16 %v2183
    %v2221 = vunpack.c.l.b16 %v2184
    %v2222 = vpack.c.b16 %v2207, %v2206
    %v2223 = vpack.c.b16 %v2209, %v2208
    %v2224 = vpack.c.b16 %v2211, %v2210
    %v2225 = vpack.c.b16 %v2213, %v2212
    %v2226 = vpack.c.b16 %v2215, %v2214
    %v2227 = vpack.c.b16 %v2217, %v2216
    %v2228 = vpack.c.b16 %v2219, %v2218
    %v2229 = vpack.c.b16 %v2221, %v2220
    %2238 = vmatprep.subr.bf16.mxu0 0
    %2239 = vmatpush1.bf16.msra.mxu0 %v2222
    %2240 = vmatprep.subr.bf16.mxu0 0
    %2241 = vmatpush1.bf16.msra.mxu0 %v2223
    %2242 = vmatprep.subr.bf16.mxu0 0
    %2243 = vmatpush1.bf16.msra.mxu0 %v2224
    %2244 = vmatprep.subr.bf16.mxu0 0
    %2245 = vmatpush1.bf16.msra.mxu0 %v2225
    %2246 = vmatprep.subr.bf16.mxu0 0
    %2247 = vmatpush1.bf16.msra.mxu0 %v2226
    %2248 = vmatprep.subr.bf16.mxu0 0
    %2249 = vmatpush1.bf16.msra.mxu0 %v2227
    %2250 = vmatprep.subr.bf16.mxu0 0
    %2251 = vmatpush1.bf16.msra.mxu0 %v2228
    %2252 = vmatprep.subr.bf16.mxu0 0
    %2253 = vmatpush1.bf16.msra.mxu0 %v2229
    %2254 = vmatprep.subr.bf16.mxu0 0
    %2255 = vmatpush1.bf16.msra.mxu0 0
    %2256 = vmatprep.subr.bf16.mxu0 0
    %2257 = vmatpush1.bf16.msra.mxu0 0
    %2258 = vmatprep.subr.bf16.mxu0 0
    %2259 = vmatpush1.bf16.msra.mxu0 0
    %2260 = vmatprep.subr.bf16.mxu0 0
    %2261 = vmatpush1.bf16.msra.mxu0 0
    %2262 = vmatprep.subr.bf16.mxu0 0
    %2263 = vmatpush1.bf16.msra.mxu0 0
    %2264 = vmatprep.subr.bf16.mxu0 0
    %2265 = vmatpush1.bf16.msra.mxu0 0
    %2266 = vmatprep.subr.bf16.mxu0 0
    %2267 = vmatpush1.bf16.msra.mxu0 0
    %2268 = vmatprep.subr.bf16.mxu0 0
    %2269 = vmatpush1.bf16.msra.mxu0 0
    %2270 = vmatprep.mubr.bf16.mxu0 0
    %2271 = vmatmul.mubr.bf16.gmra.mrb[0].mxu0 %v2167
    %v2272 = vpop.f32.mrb[0].mxu0
    %v2273 = vadd.f32 %v2189, %v2272
    %v2274 = vpop.f32.mrb[0].mxu0
    %v2275 = vpop.f32.mrb[0].mxu0
    %v2276 = vpop.f32.mrb[0].mxu0
    %2277 = vdwg.mxu0
    %v2278 = vmax.f32 %v2273, 0.0
    %v2279 = vpack.c.bf16 %v2278, %v2278
    %s2280 = scalar_lea.vmem [#allocation2], 448
    %v2281 = vld [vmem:[%s2280] sm:$0xf]
    %v2282 = vld [vmem:[%s2280 + $0x4] sm:$0xf]
    %v2283 = vld [vmem:[%s2280 + $0x8] sm:$0xf]
    %v2284 = vld [vmem:[%s2280 + $0xc] sm:$0xf]
    %v2285 = vld [vmem:[%s2280 + $0x10] sm:$0xf]
    %v2286 = vld [vmem:[%s2280 + $0x14] sm:$0xf]
    %v2287 = vld [vmem:[%s2280 + $0x18] sm:$0xf]
    %v2288 = vld [vmem:[%s2280 + $0x1c] sm:$0xf]
    %v2289 = vld [vmem:[%s2280 + $0x20] sm:$0xf]
    %v2290 = vld [vmem:[%s2280 + $0x24] sm:$0xf]
    %v2291 = vld [vmem:[%s2280 + $0x28] sm:$0xf]
    %v2292 = vld [vmem:[%s2280 + $0x2c] sm:$0xf]
    %v2293 = vld [vmem:[%s2280 + $0x30] sm:$0xf]
    %v2294 = vld [vmem:[%s2280 + $0x34] sm:$0xf]
    %v2295 = vld [vmem:[%s2280 + $0x38] sm:$0xf]
    %v2296 = vld [vmem:[%s2280 + $0x3c] sm:$0xf]
    %v2297 = vld [vmem:[%s1959 + $0x3] sm:$0x1]
    %v2298 = vlaneseq
    %v2299 = vshrl.u32 %v2298, 7
    %v2300 = vsub.s32 0, %v2299
    %v2301 = vrot.slane %v2297, %v2300
    %v2318 = vunpack.c.l.b16 %v2281
    %v2319 = vunpack.c.l.b16 %v2282
    %v2320 = vunpack.c.l.b16 %v2283
    %v2321 = vunpack.c.l.b16 %v2284
    %v2322 = vunpack.c.l.b16 %v2285
    %v2323 = vunpack.c.l.b16 %v2286
    %v2324 = vunpack.c.l.b16 %v2287
    %v2325 = vunpack.c.l.b16 %v2288
    %v2326 = vunpack.c.l.b16 %v2289
    %v2327 = vunpack.c.l.b16 %v2290
    %v2328 = vunpack.c.l.b16 %v2291
    %v2329 = vunpack.c.l.b16 %v2292
    %v2330 = vunpack.c.l.b16 %v2293
    %v2331 = vunpack.c.l.b16 %v2294
    %v2332 = vunpack.c.l.b16 %v2295
    %v2333 = vunpack.c.l.b16 %v2296
    %v2334 = vpack.c.b16 %v2319, %v2318
    %v2335 = vpack.c.b16 %v2321, %v2320
    %v2336 = vpack.c.b16 %v2323, %v2322
    %v2337 = vpack.c.b16 %v2325, %v2324
    %v2338 = vpack.c.b16 %v2327, %v2326
    %v2339 = vpack.c.b16 %v2329, %v2328
    %v2340 = vpack.c.b16 %v2331, %v2330
    %v2341 = vpack.c.b16 %v2333, %v2332
    %2350 = vmatprep.subr.bf16.mxu0 0
    %2351 = vmatpush1.bf16.msra.mxu0 %v2334
    %2352 = vmatprep.subr.bf16.mxu0 0
    %2353 = vmatpush1.bf16.msra.mxu0 %v2335
    %2354 = vmatprep.subr.bf16.mxu0 0
    %2355 = vmatpush1.bf16.msra.mxu0 %v2336
    %2356 = vmatprep.subr.bf16.mxu0 0
    %2357 = vmatpush1.bf16.msra.mxu0 %v2337
    %2358 = vmatprep.subr.bf16.mxu0 0
    %2359 = vmatpush1.bf16.msra.mxu0 %v2338
    %2360 = vmatprep.subr.bf16.mxu0 0
    %2361 = vmatpush1.bf16.msra.mxu0 %v2339
    %2362 = vmatprep.subr.bf16.mxu0 0
    %2363 = vmatpush1.bf16.msra.mxu0 %v2340
    %2364 = vmatprep.subr.bf16.mxu0 0
    %2365 = vmatpush1.bf16.msra.mxu0 %v2341
    %2366 = vmatprep.subr.bf16.mxu0 0
    %2367 = vmatpush1.bf16.msra.mxu0 0
    %2368 = vmatprep.subr.bf16.mxu0 0
    %2369 = vmatpush1.bf16.msra.mxu0 0
    %2370 = vmatprep.subr.bf16.mxu0 0
    %2371 = vmatpush1.bf16.msra.mxu0 0
    %2372 = vmatprep.subr.bf16.mxu0 0
    %2373 = vmatpush1.bf16.msra.mxu0 0
    %2374 = vmatprep.subr.bf16.mxu0 0
    %2375 = vmatpush1.bf16.msra.mxu0 0
    %2376 = vmatprep.subr.bf16.mxu0 0
    %2377 = vmatpush1.bf16.msra.mxu0 0
    %2378 = vmatprep.subr.bf16.mxu0 0
    %2379 = vmatpush1.bf16.msra.mxu0 0
    %2380 = vmatprep.subr.bf16.mxu0 0
    %2381 = vmatpush1.bf16.msra.mxu0 0
    %2382 = vmatprep.mubr.bf16.mxu0 0
    %2383 = vmatmul.mubr.bf16.gmra.mrb[0].mxu0 %v2279
    %v2384 = vpop.f32.mrb[0].mxu0
    %v2385 = vadd.f32 %v2301, %v2384
    %v2386 = vpop.f32.mrb[0].mxu0
    %v2387 = vpop.f32.mrb[0].mxu0
    %v2388 = vpop.f32.mrb[0].mxu0
    %2389 = vdwg.mxu0
    %v2390 = vadd.f32 %v2165, %v2385
    %v2391 = vpack.c.bf16 %v2390, %v2390
    %s2392 = scalar_lea.vmem %s8, 128
    %v2393 = vld [vmem:[%s2392] sm:$0xf]
    %v2394 = vld [vmem:[%s2392 + $0x4] sm:$0xf]
    %v2395 = vld [vmem:[%s2392 + $0x8] sm:$0xf]
    %v2396 = vld [vmem:[%s2392 + $0xc] sm:$0xf]
    %v2397 = vld [vmem:[%s2392 + $0x10] sm:$0xf]
    %v2398 = vld [vmem:[%s2392 + $0x14] sm:$0xf]
    %v2399 = vld [vmem:[%s2392 + $0x18] sm:$0xf]
    %v2400 = vld [vmem:[%s2392 + $0x1c] sm:$0xf]
    %v2401 = vld [vmem:[%s2392 + $0x20] sm:$0xf]
    %v2402 = vld [vmem:[%s2392 + $0x24] sm:$0xf]
    %v2403 = vld [vmem:[%s2392 + $0x28] sm:$0xf]
    %v2404 = vld [vmem:[%s2392 + $0x2c] sm:$0xf]
    %v2405 = vld [vmem:[%s2392 + $0x30] sm:$0xf]
    %v2406 = vld [vmem:[%s2392 + $0x34] sm:$0xf]
    %v2407 = vld [vmem:[%s2392 + $0x38] sm:$0xf]
    %v2408 = vld [vmem:[%s2392 + $0x3c] sm:$0xf]
    %s2409 = scalar_lea.vmem %s9, 2
    %v2410 = vld [vmem:[%s2409] sm:$0x1]
    %v2411 = vlaneseq
    %v2412 = vshrl.u32 %v2411, 7
    %v2413 = vsub.s32 0, %v2412
    %v2414 = vrot.slane %v2410, %v2413
    %v2431 = vunpack.c.l.b16 %v2393
    %v2432 = vunpack.c.l.b16 %v2394
    %v2433 = vunpack.c.l.b16 %v2395
    %v2434 = vunpack.c.l.b16 %v2396
    %v2435 = vunpack.c.l.b16 %v2397
    %v2436 = vunpack.c.l.b16 %v2398
    %v2437 = vunpack.c.l.b16 %v2399
    %v2438 = vunpack.c.l.b16 %v2400
    %v2439 = vunpack.c.l.b16 %v2401
    %v2440 = vunpack.c.l.b16 %v2402
    %v2441 = vunpack.c.l.b16 %v2403
    %v2442 = vunpack.c.l.b16 %v2404
    %v2443 = vunpack.c.l.b16 %v2405
    %v2444 = vunpack.c.l.b16 %v2406
    %v2445 = vunpack.c.l.b16 %v2407
    %v2446 = vunpack.c.l.b16 %v2408
    %v2447 = vpack.c.b16 %v2432, %v2431
    %v2448 = vpack.c.b16 %v2434, %v2433
    %v2449 = vpack.c.b16 %v2436, %v2435
    %v2450 = vpack.c.b16 %v2438, %v2437
    %v2451 = vpack.c.b16 %v2440, %v2439
    %v2452 = vpack.c.b16 %v2442, %v2441
    %v2453 = vpack.c.b16 %v2444, %v2443
    %v2454 = vpack.c.b16 %v2446, %v2445
    %2463 = vmatprep.subr.bf16.mxu0 0
    %2464 = vmatpush1.bf16.msra.mxu0 %v2447
    %2465 = vmatprep.subr.bf16.mxu0 0
    %2466 = vmatpush1.bf16.msra.mxu0 %v2448
    %2467 = vmatprep.subr.bf16.mxu0 0
    %2468 = vmatpush1.bf16.msra.mxu0 %v2449
    %2469 = vmatprep.subr.bf16.mxu0 0
    %2470 = vmatpush1.bf16.msra.mxu0 %v2450
    %2471 = vmatprep.subr.bf16.mxu0 0
    %2472 = vmatpush1.bf16.msra.mxu0 %v2451
    %2473 = vmatprep.subr.bf16.mxu0 0
    %2474 = vmatpush1.bf16.msra.mxu0 %v2452
    %2475 = vmatprep.subr.bf16.mxu0 0
    %2476 = vmatpush1.bf16.msra.mxu0 %v2453
    %2477 = vmatprep.subr.bf16.mxu0 0
    %2478 = vmatpush1.bf16.msra.mxu0 %v2454
    %2479 = vmatprep.subr.bf16.mxu0 0
    %2480 = vmatpush1.bf16.msra.mxu0 0
    %2481 = vmatprep.subr.bf16.mxu0 0
    %2482 = vmatpush1.bf16.msra.mxu0 0
    %2483 = vmatprep.subr.bf16.mxu0 0
    %2484 = vmatpush1.bf16.msra.mxu0 0
    %2485 = vmatprep.subr.bf16.mxu0 0
    %2486 = vmatpush1.bf16.msra.mxu0 0
    %2487 = vmatprep.subr.bf16.mxu0 0
    %2488 = vmatpush1.bf16.msra.mxu0 0
    %2489 = vmatprep.subr.bf16.mxu0 0
    %2490 = vmatpush1.bf16.msra.mxu0 0
    %2491 = vmatprep.subr.bf16.mxu0 0
    %2492 = vmatpush1.bf16.msra.mxu0 0
    %2493 = vmatprep.subr.bf16.mxu0 0
    %2494 = vmatpush1.bf16.msra.mxu0 0
    %2495 = vmatprep.mubr.bf16.mxu0 0
    %2496 = vmatmul.mubr.bf16.gmra.mrb[0].mxu0 %v2391
    %v2497 = vpop.f32.mrb[0].mxu0
    %v2498 = vadd.f32 %v2414, %v2497
    %v2499 = vpop.f32.mrb[0].mxu0
    %v2500 = vpop.f32.mrb[0].mxu0
    %v2501 = vpop.f32.mrb[0].mxu0
    %2502 = vdwg.mxu0
    %v2503 = vmul.f32 %v2498, 0.088388346
    %vm2504 = vcmp.ge.f32.partialorder %v1882, -3.0
    %vm2505 = vcmp.le.f32.partialorder %v1882, 3.0
    %vm2506 = vmand %vm2504, %vm2505
    %v2507 = vmax.f32 %v1882, -3.0
    %v2508 = vmin.f32 %v2507, 3.0
    %v2509 = vsel %vm868, %v2503, -inf
    %2510 = vmax.xlane.f32.xlu0 %v2509
    %v2511 = vpop.xlane.xlu0 %2510
    %v2512 = vsub.f32 %v2503, %v2511
    %v2513 = vmul.f32 %v2512, 1.442695
    %v2514 = vpow.pop %v2513
    %v2515 = vsel %vm868, %v2514, 0.0
    %2516 = vadd.xlane.f32.xlu0 %v2515
    %v2517 = vpop.xlane.xlu0 %2516
    %v2518 = vrcp.pop %v2517
    %v2519 = vmul.f32 %v2514, %v2518
    %v2520 = vmul.f32 %v2519, 0.992
    %v2521 = vadd.f32 %v2520, 0.001
    %v2522 = vsel %vm882, %v2503, -inf
    %2523 = vmax.xlane.f32.xlu0 %v2522
    %v2524 = vpop.xlane.xlu0 %2523
    %v2525 = vsub.f32 %v2503, %v2524
    %v2526 = vmul.f32 %v2525, 1.442695
    %v2527 = vpow.pop %v2526
    %2529 = vrot.lane.b32.xlu0 %v2527, 120
    %v2530 = vpop.permute.xlu0 %2529
    %v2532 = vsel %vm868, %v2530, 0.0
    %2533 = vadd.xlane.f32.xlu0 %v2532
    %v2534 = vpop.xlane.xlu0 %2533
    %v2535 = vrcp.pop %v2534
    %v2536 = vmul.f32 %v2527, %v2535
    %v2537 = vmul.f32 %v2536, 0.992
    %v2538 = vadd.f32 %v2537, 0.001
    %v2540 = vsel %vm868, %v2521, 0
    %2542 = vmatprep.subr.mxu0 0.0
    %2543 = vmatpush1.msra.mxu0 %v80
    %2544 = vmatprep.subr.mxu0 0.0
    %2545 = vmatpush1.msra.mxu0 0.0
    %2546 = vmatprep.subr.mxu0 0.0
    %2547 = vmatpush1.msra.mxu0 0.0
    %2548 = vmatprep.subr.mxu0 0.0
    %2549 = vmatpush1.msra.mxu0 0.0
    %2550 = vmatprep.subr.mxu0 0.0
    %2551 = vmatpush1.msra.mxu0 0.0
    %2552 = vmatprep.subr.mxu0 0.0
    %2553 = vmatpush1.msra.mxu0 0.0
    %2554 = vmatprep.subr.mxu0 0.0
    %2555 = vmatpush1.msra.mxu0 0.0
    %2556 = vmatprep.subr.mxu0 0.0
    %2557 = vmatpush1.msra.mxu0 0.0
    %2558 = vmatprep.subr.mxu0 0.0
    %2559 = vmatpush1.msra.mxu0 0.0
    %2560 = vmatprep.subr.mxu0 0.0
    %2561 = vmatpush1.msra.mxu0 0.0
    %2562 = vmatprep.subr.mxu0 0.0
    %2563 = vmatpush1.msra.mxu0 0.0
    %2564 = vmatprep.subr.mxu0 0.0
    %2565 = vmatpush1.msra.mxu0 0.0
    %2566 = vmatprep.subr.mxu0 0.0
    %2567 = vmatpush1.msra.mxu0 0.0
    %2568 = vmatprep.subr.mxu0 0.0
    %2569 = vmatpush1.msra.mxu0 0.0
    %2570 = vmatprep.subr.mxu0 0.0
    %2571 = vmatpush1.msra.mxu0 0.0
    %2572 = vmatprep.subr.mxu0 0.0
    %2573 = vmatpush1.msra.mxu0 0.0
    %2574 = vmatprep.subr.mxu0 0.0
    %2575 = vmatpush1.msra.mxu0 0.0
    %2576 = vmatprep.subr.mxu0 0.0
    %2577 = vmatpush1.msra.mxu0 0.0
    %2578 = vmatprep.subr.mxu0 0.0
    %2579 = vmatpush1.msra.mxu0 0.0
    %2580 = vmatprep.subr.mxu0 0.0
    %2581 = vmatpush1.msra.mxu0 0.0
    %2582 = vmatprep.subr.mxu0 0.0
    %2583 = vmatpush1.msra.mxu0 0.0
    %2584 = vmatprep.subr.mxu0 0.0
    %2585 = vmatpush1.msra.mxu0 0.0
    %2586 = vmatprep.subr.mxu0 0.0
    %2587 = vmatpush1.msra.mxu0 0.0
    %2588 = vmatprep.subr.mxu0 0.0
    %2589 = vmatpush1.msra.mxu0 0.0
    %2590 = vmatprep.subr.mxu0 0.0
    %2591 = vmatpush1.msra.mxu0 0.0
    %2592 = vmatprep.subr.mxu0 0.0
    %2593 = vmatpush1.msra.mxu0 0.0
    %2594 = vmatprep.subr.mxu0 0.0
    %2595 = vmatpush1.msra.mxu0 0.0
    %2596 = vmatprep.subr.mxu0 0.0
    %2597 = vmatpush1.msra.mxu0 0.0
    %2598 = vmatprep.subr.mxu0 0.0
    %2599 = vmatpush1.msra.mxu0 0.0
    %2600 = vmatprep.subr.mxu0 0.0
    %2601 = vmatpush1.msra.mxu0 0.0
    %2602 = vmatprep.subr.mxu0 0.0
    %2603 = vmatpush1.msra.mxu0 0.0
    %2604 = vmatprep.subr.mxu0 0.0
    %2605 = vmatpush1.msra.mxu0 0.0
    %2606 = vmatprep.mubr.f32.mxu0 0.0
    %2607 = vmatmul.mubr.f32.gmra.mrb[0].mxu0 %v2540
    %v2608 = vpop.f32.mrb[0].mxu0
    %v2609 = vadd.f32 0.0, %v2608
    %v2610 = vpop.f32.mrb[0].mxu0
    %2611 = vdwg.mxu0
    %v2612 = vmul.f32 %v2609, 6.0
    %v2613 = vadd.f32 %v2612, -3.0
    %2615 = vrot.lane.b32.xlu0 %v2538, 120
    %v2616 = vpop.permute.xlu0 %2615
    %v2617 = vsel %vm868, %v2616, 0
    %2619 = vmatprep.subr.mxu0 0.0
    %2620 = vmatpush1.msra.mxu0 %v80
    %2621 = vmatprep.subr.mxu0 0.0
    %2622 = vmatpush1.msra.mxu0 0.0
    %2623 = vmatprep.subr.mxu0 0.0
    %2624 = vmatpush1.msra.mxu0 0.0
    %2625 = vmatprep.subr.mxu0 0.0
    %2626 = vmatpush1.msra.mxu0 0.0
    %2627 = vmatprep.subr.mxu0 0.0
    %2628 = vmatpush1.msra.mxu0 0.0
    %2629 = vmatprep.subr.mxu0 0.0
    %2630 = vmatpush1.msra.mxu0 0.0
    %2631 = vmatprep.subr.mxu0 0.0
    %2632 = vmatpush1.msra.mxu0 0.0
    %2633 = vmatprep.subr.mxu0 0.0
    %2634 = vmatpush1.msra.mxu0 0.0
    %2635 = vmatprep.subr.mxu0 0.0
    %2636 = vmatpush1.msra.mxu0 0.0
    %2637 = vmatprep.subr.mxu0 0.0
    %2638 = vmatpush1.msra.mxu0 0.0
    %2639 = vmatprep.subr.mxu0 0.0
    %2640 = vmatpush1.msra.mxu0 0.0
    %2641 = vmatprep.subr.mxu0 0.0
    %2642 = vmatpush1.msra.mxu0 0.0
    %2643 = vmatprep.subr.mxu0 0.0
    %2644 = vmatpush1.msra.mxu0 0.0
    %2645 = vmatprep.subr.mxu0 0.0
    %2646 = vmatpush1.msra.mxu0 0.0
    %2647 = vmatprep.subr.mxu0 0.0
    %2648 = vmatpush1.msra.mxu0 0.0
    %2649 = vmatprep.subr.mxu0 0.0
    %2650 = vmatpush1.msra.mxu0 0.0
    %2651 = vmatprep.subr.mxu0 0.0
    %2652 = vmatpush1.msra.mxu0 0.0
    %2653 = vmatprep.subr.mxu0 0.0
    %2654 = vmatpush1.msra.mxu0 0.0
    %2655 = vmatprep.subr.mxu0 0.0
    %2656 = vmatpush1.msra.mxu0 0.0
    %2657 = vmatprep.subr.mxu0 0.0
    %2658 = vmatpush1.msra.mxu0 0.0
    %2659 = vmatprep.subr.mxu0 0.0
    %2660 = vmatpush1.msra.mxu0 0.0
    %2661 = vmatprep.subr.mxu0 0.0
    %2662 = vmatpush1.msra.mxu0 0.0
    %2663 = vmatprep.subr.mxu0 0.0
    %2664 = vmatpush1.msra.mxu0 0.0
    %2665 = vmatprep.subr.mxu0 0.0
    %2666 = vmatpush1.msra.mxu0 0.0
    %2667 = vmatprep.subr.mxu0 0.0
    %2668 = vmatpush1.msra.mxu0 0.0
    %2669 = vmatprep.subr.mxu0 0.0
    %2670 = vmatpush1.msra.mxu0 0.0
    %2671 = vmatprep.subr.mxu0 0.0
    %2672 = vmatpush1.msra.mxu0 0.0
    %2673 = vmatprep.subr.mxu0 0.0
    %2674 = vmatpush1.msra.mxu0 0.0
    %2675 = vmatprep.subr.mxu0 0.0
    %2676 = vmatpush1.msra.mxu0 0.0
    %2677 = vmatprep.subr.mxu0 0.0
    %2678 = vmatpush1.msra.mxu0 0.0
    %2679 = vmatprep.subr.mxu0 0.0
    %2680 = vmatpush1.msra.mxu0 0.0
    %2681 = vmatprep.subr.mxu0 0.0
    %2682 = vmatpush1.msra.mxu0 0.0
    %2683 = vmatprep.mubr.f32.mxu0 0.0
    %2684 = vmatmul.mubr.f32.gmra.mrb[0].mxu0 %v2617
    %v2685 = vpop.f32.mrb[0].mxu0
    %v2686 = vadd.f32 0.0, %v2685
    %v2687 = vpop.f32.mrb[0].mxu0
    %2688 = vdwg.mxu0
    %v2689 = vmul.f32 %v2686, 6.0
    %v2690 = vadd.f32 %v2689, -3.0
    %v2691 = vsel %vm81, 3.0, %v2613
    %v2692 = vsel %vm81, 3.0, %v2690
    %v2693 = vadd.f32 %v2692, 1e-06
    %v2694 = vsel %vm81, %v2693, %v2690
    %2696 = vset.pattern.permute.xlu0 0
    %2697 = vperm.xlu0 %2696, %v2508
    %v2698 = vpop.permute.xlu0 %2697
    %vm2700 = vcmp.ge.f32.partialorder %v2698, %v2694
    %v2701 = vsel %vm2700, 1, 0
    %v2702 = vsel %vm868, %v2701, 0
    %v2703 = vand.u32 %v2702, 65535
    %v2704 = vshrl.u32 %v2702, 16
    %v2705 = vcvt.s32.f32 %v2703
    %v2706 = vcvt.s32.f32 %v2704
    %2707 = vadd.xlane.f32.xlu0 %v2705
    %v2708 = vpop.xlane.xlu0 %2707
    %2709 = vadd.xlane.f32.xlu0 %v2706
    %v2710 = vpop.xlane.xlu0 %2709
    %v2711 = vcvt.f32.s32 %v2708
    %v2712 = vcvt.f32.s32 %v2710
    %v2713 = vshll.u32 %v2712, 16
    %v2714 = vadd.s32 %v2713, %v2711
    %vm2715 = vcmp.eq.s32.totalorder %v2714, %v77
    %v2716 = vsub.s32 %v2714, 1
    %vm2717 = vcmp.eq.s32.totalorder %v2716, %v77
    %vm2718 = vcmp.eq.s32.totalorder %v2714, 0
    %v2719 = vsel %vm2715, %v2691, 0.0
    %v2720 = vsel %vm868, %v2719, 0.0
    %2721 = vadd.xlane.f32.xlu0 %v2720
    %v2722 = vpop.xlane.xlu0 %2721
    %v2723 = vsel %vm2717, %v2691, 0.0
    %v2724 = vsel %vm868, %v2723, 0.0
    %2725 = vadd.xlane.f32.xlu0 %v2724
    %v2726 = vpop.xlane.xlu0 %2725
    %v2727 = vsel %vm2718, -3.0, %v2726
    %v2728 = vsel %vm2715, %v2692, 0.0
    %v2729 = vsel %vm868, %v2728, 0.0
    %2730 = vadd.xlane.f32.xlu0 %v2729
    %v2731 = vpop.xlane.xlu0 %2730
    %v2732 = vsel %vm2717, %v2692, 0.0
    %v2733 = vsel %vm868, %v2732, 0.0
    %2734 = vadd.xlane.f32.xlu0 %v2733
    %v2735 = vpop.xlane.xlu0 %2734
    %v2736 = vsel %vm2718, -3.0, %v2735
    %v2737 = vsub.f32 %v2722, %v2727
    %v2738 = vsub.f32 %v2731, %v2736
    %v2739 = vrcp.pop %v2737
    %v2740 = vmul.f32 %v2738, %v2739
    %v2741 = vmax.f32 %v2498, 0.0
    %v2742 = vand.u32 2147483647, %v2498
    %v2743 = vsub.f32 0.0, %v2742
    %v2744 = vmul.f32 %v2743, 1.442695
    %v2745 = vpow.pop %v2744
    %v2746 = vadd.f32 %v2745, 1.0
    %v2747 = vlog2.pop %v2746
    %v2748 = vmul.f32 %v2747, 0.6931472
    %v2749 = vadd.f32 %v2741, %v2748
    %v2750 = vadd.f32 %v2749, 0.001
    %2752 = vrot.lane.b32.xlu0 %v2750, 112
    %v2753 = vpop.permute.xlu0 %2752
    %v2755 = vsel %vm2717, %v2753, 0.0
    %v2756 = vsel %vm1117, %v2755, 0.0
    %2757 = vadd.xlane.f32.xlu0 %v2756
    %v2758 = vpop.xlane.xlu0 %2757
    %v2759 = vsel %vm2718, 1.0, %v2758
    %vm2760 = vcmp.eq.s32.totalorder %v2714, 7
    %v2761 = vsel %vm2715, %v2753, 0.0
    %v2762 = vsel %vm1117, %v2761, 0.0
    %2763 = vadd.xlane.f32.xlu0 %v2762
    %v2764 = vpop.xlane.xlu0 %2763
    %v2765 = vsel %vm2760, 1.0, %v2764
    %v2766 = vsub.f32 %v2508, %v2736
    %v2767 = vadd.f32 %v2759, %v2765
    %v2768 = vmul.f32 %v2740, 2.0
    %v2769 = vsub.f32 %v2767, %v2768
    %v2770 = vmul.f32 %v2766, %v2769
    %v2771 = vsub.f32 %v2740, %v2759
    %v2772 = vmul.f32 %v2738, %v2771
    %v2773 = vadd.f32 %v2770, %v2772
    %v2774 = vmul.f32 %v2738, %v2759
    %v2775 = vsub.f32 %v2774, %v2770
    %v2776 = vsub.f32 0.0, %v2740
    %v2777 = vmul.f32 %v2776, %v2766
    %v2778 = vmul.f32 %v2775, %v2775
    %v2779 = vmul.f32 %v2773, 4.0
    %v2780 = vmul.f32 %v2779, %v2777
    %v2781 = vsub.f32 %v2778, %v2780
    %v2782 = vmax.f32 %v2781, 0.0
    %v2783 = vmul.f32 %v2777, 2.0
    %v2784 = vsub.f32 0.0, %v2775
    %v2785 = vrsqrt.pop %v2782
    %v2786 = vmul.f32 %v2782, %v2785
    %vm2787 = vcmp.eq.f32.partialorder %v2782, inf
    %v2788 = vsel %vm2787, %v2782, %v2786
    %vm2789 = vcmp.eq.f32.partialorder %v2782, 0.0
    %v2790 = vand.u32 %v2782, 2147483648
    %v2791 = vsel %vm2789, %v2790, %v2788
    %v2792 = vsub.f32 %v2784, %v2791
    %v2793 = vrcp.pop %v2792
    %v2794 = vmul.f32 %v2783, %v2793
    %v2795 = vmul.f32 %v2794, %v2737
    %v2796 = vadd.f32 %v2795, %v2727
    %v2797 = vsub.f32 1.0, %v2794
    %v2798 = vmul.f32 %v2794, %v2797
    %v2799 = vmul.f32 %v2769, %v2798
    %v2800 = vadd.f32 %v2740, %v2799
    %v2801 = vmul.f32 %v2740, %v2740
    %v2802 = vmul.f32 %v2765, %v2794
    %v2803 = vmul.f32 %v2802, %v2794
    %v2804 = vmul.f32 %v2768, %v2798
    %v2805 = vadd.f32 %v2803, %v2804
    %v2806 = vmul.f32 %v2759, %v2797
    %v2807 = vmul.f32 %v2806, %v2797
    %v2808 = vadd.f32 %v2805, %v2807
    %v2809 = vmul.f32 %v2801, %v2808
    %v2810 = vlog2.pop %v2800
    %v2811 = vmul.f32 %v2810, 0.6931472
    %v2812 = vmul.f32 %v2811, 2.0
    %v2813 = vlog2.pop %v2809
    %v2814 = vmul.f32 %v2813, 0.6931472
    %v2815 = vsub.f32 %v2812, %v2814
    %v2816 = vsel %vm2506, %v2796, %v1882
    %v2817 = vsel %vm2506, %v2815, 0.0
    %2819 = vset.pattern.permute.xlu0 0
    %2820 = vperm.xlu0 %2819, %v2816
    %v2821 = vpop.permute.xlu0 %2820
    %v2823 = vsel %vm82, %v2821, 0.0
    %v2824 = vadd.f32 %v2817, 0.0
    %v2825 = vpack.c.bf16 %v2823, %v2823
    %v2827 = vsel %vm245, %v2825, 0
    %2829 = vmatprep.subr.bf16.mxu0 0
    %2830 = vmatpush1.bf16.msra.mxu0 %v1898
    %2831 = vmatprep.subr.bf16.mxu0 0
    %2832 = vmatpush1.bf16.msra.mxu0 0
    %2833 = vmatprep.subr.bf16.mxu0 0
    %2834 = vmatpush1.bf16.msra.mxu0 0
    %2835 = vmatprep.subr.bf16.mxu0 0
    %2836 = vmatpush1.bf16.msra.mxu0 0
    %2837 = vmatprep.subr.bf16.mxu0 0
    %2838 = vmatpush1.bf16.msra.mxu0 0
    %2839 = vmatprep.subr.bf16.mxu0 0
    %2840 = vmatpush1.bf16.msra.mxu0 0
    %2841 = vmatprep.subr.bf16.mxu0 0
    %2842 = vmatpush1.bf16.msra.mxu0 0
    %2843 = vmatprep.subr.bf16.mxu0 0
    %2844 = vmatpush1.bf16.msra.mxu0 0
    %2845 = vmatprep.subr.bf16.mxu0 0
    %2846 = vmatpush1.bf16.msra.mxu0 0
    %2847 = vmatprep.subr.bf16.mxu0 0
    %2848 = vmatpush1.bf16.msra.mxu0 0
    %2849 = vmatprep.subr.bf16.mxu0 0
    %2850 = vmatpush1.bf16.msra.mxu0 0
    %2851 = vmatprep.subr.bf16.mxu0 0
    %2852 = vmatpush1.bf16.msra.mxu0 0
    %2853 = vmatprep.subr.bf16.mxu0 0
    %2854 = vmatpush1.bf16.msra.mxu0 0
    %2855 = vmatprep.subr.bf16.mxu0 0
    %2856 = vmatpush1.bf16.msra.mxu0 0
    %2857 = vmatprep.subr.bf16.mxu0 0
    %2858 = vmatpush1.bf16.msra.mxu0 0
    %2859 = vmatprep.subr.bf16.mxu0 0
    %2860 = vmatpush1.bf16.msra.mxu0 0
    %2861 = vmatprep.mubr.bf16.mxu0 0
    %2862 = vmatmul.mubr.bf16.gmra.mrb[0].mxu0 %v2827
    %v2863 = vpop.f32.mrb[0].mxu0
    %v2864 = vadd.f32 %v1896, %v2863
    %v2865 = vpop.f32.mrb[0].mxu0
    %v2866 = vpop.f32.mrb[0].mxu0
    %v2867 = vpop.f32.mrb[0].mxu0
    %2868 = vdwg.mxu0
    %v2869 = vmax.f32 %v2864, 0.0
    %v2870 = vpack.c.bf16 %v2869, %v2869
    %2871 = vmatprep.subr.bf16.mxu0 0
    %2872 = vmatpush1.bf16.msra.mxu0 %v1997
    %2873 = vmatprep.subr.bf16.mxu0 0
    %2874 = vmatpush1.bf16.msra.mxu0 %v1998
    %2875 = vmatprep.subr.bf16.mxu0 0
    %2876 = vmatpush1.bf16.msra.mxu0 %v1999
    %2877 = vmatprep.subr.bf16.mxu0 0
    %2878 = vmatpush1.bf16.msra.mxu0 %v2000
    %2879 = vmatprep.subr.bf16.mxu0 0
    %2880 = vmatpush1.bf16.msra.mxu0 %v2001
    %2881 = vmatprep.subr.bf16.mxu0 0
    %2882 = vmatpush1.bf16.msra.mxu0 %v2002
    %2883 = vmatprep.subr.bf16.mxu0 0
    %2884 = vmatpush1.bf16.msra.mxu0 %v2003
    %2885 = vmatprep.subr.bf16.mxu0 0
    %2886 = vmatpush1.bf16.msra.mxu0 %v2004
    %2887 = vmatprep.subr.bf16.mxu0 0
    %2888 = vmatpush1.bf16.msra.mxu0 0
    %2889 = vmatprep.subr.bf16.mxu0 0
    %2890 = vmatpush1.bf16.msra.mxu0 0
    %2891 = vmatprep.subr.bf16.mxu0 0
    %2892 = vmatpush1.bf16.msra.mxu0 0
    %2893 = vmatprep.subr.bf16.mxu0 0
    %2894 = vmatpush1.bf16.msra.mxu0 0
    %2895 = vmatprep.subr.bf16.mxu0 0
    %2896 = vmatpush1.bf16.msra.mxu0 0
    %2897 = vmatprep.subr.bf16.mxu0 0
    %2898 = vmatpush1.bf16.msra.mxu0 0
    %2899 = vmatprep.subr.bf16.mxu0 0
    %2900 = vmatpush1.bf16.msra.mxu0 0
    %2901 = vmatprep.subr.bf16.mxu0 0
    %2902 = vmatpush1.bf16.msra.mxu0 0
    %2903 = vmatprep.mubr.bf16.mxu0 0
    %2904 = vmatmul.mubr.bf16.gmra.mrb[0].mxu0 %v2870
    %v2905 = vpop.f32.mrb[0].mxu0
    %v2906 = vadd.f32 %v1964, %v2905
    %v2907 = vpop.f32.mrb[0].mxu0
    %v2908 = vpop.f32.mrb[0].mxu0
    %v2909 = vpop.f32.mrb[0].mxu0
    %2910 = vdwg.mxu0
    %v2911 = vmax.f32 %v2906, 0.0
    %v2912 = vpack.c.bf16 %v2911, %v2911
    %2913 = vmatprep.subr.bf16.mxu0 0
    %2914 = vmatpush1.bf16.msra.mxu0 %v2109
    %2915 = vmatprep.subr.bf16.mxu0 0
    %2916 = vmatpush1.bf16.msra.mxu0 %v2110
    %2917 = vmatprep.subr.bf16.mxu0 0
    %2918 = vmatpush1.bf16.msra.mxu0 %v2111
    %2919 = vmatprep.subr.bf16.mxu0 0
    %2920 = vmatpush1.bf16.msra.mxu0 %v2112
    %2921 = vmatprep.subr.bf16.mxu0 0
    %2922 = vmatpush1.bf16.msra.mxu0 %v2113
    %2923 = vmatprep.subr.bf16.mxu0 0
    %2924 = vmatpush1.bf16.msra.mxu0 %v2114
    %2925 = vmatprep.subr.bf16.mxu0 0
    %2926 = vmatpush1.bf16.msra.mxu0 %v2115
    %2927 = vmatprep.subr.bf16.mxu0 0
    %2928 = vmatpush1.bf16.msra.mxu0 %v2116
    %2929 = vmatprep.subr.bf16.mxu0 0
    %2930 = vmatpush1.bf16.msra.mxu0 0
    %2931 = vmatprep.subr.bf16.mxu0 0
    %2932 = vmatpush1.bf16.msra.mxu0 0
    %2933 = vmatprep.subr.bf16.mxu0 0
    %2934 = vmatpush1.bf16.msra.mxu0 0
    %2935 = vmatprep.subr.bf16.mxu0 0
    %2936 = vmatpush1.bf16.msra.mxu0 0
    %2937 = vmatprep.subr.bf16.mxu0 0
    %2938 = vmatpush1.bf16.msra.mxu0 0
    %2939 = vmatprep.subr.bf16.mxu0 0
    %2940 = vmatpush1.bf16.msra.mxu0 0
    %2941 = vmatprep.subr.bf16.mxu0 0
    %2942 = vmatpush1.bf16.msra.mxu0 0
    %2943 = vmatprep.subr.bf16.mxu0 0
    %2944 = vmatpush1.bf16.msra.mxu0 0
    %2945 = vmatprep.mubr.bf16.mxu0 0
    %2946 = vmatmul.mubr.bf16.gmra.mrb[0].mxu0 %v2912
    %v2947 = vpop.f32.mrb[0].mxu0
    %v2948 = vadd.f32 %v2076, %v2947
    %v2949 = vpop.f32.mrb[0].mxu0
    %v2950 = vpop.f32.mrb[0].mxu0
    %v2951 = vpop.f32.mrb[0].mxu0
    %2952 = vdwg.mxu0
    %v2953 = vadd.f32 %v2864, %v2948
    %v2954 = vmax.f32 %v2953, 0.0
    %v2955 = vpack.c.bf16 %v2954, %v2954
    %2956 = vmatprep.subr.bf16.mxu0 0
    %2957 = vmatpush1.bf16.msra.mxu0 %v2222
    %2958 = vmatprep.subr.bf16.mxu0 0
    %2959 = vmatpush1.bf16.msra.mxu0 %v2223
    %2960 = vmatprep.subr.bf16.mxu0 0
    %2961 = vmatpush1.bf16.msra.mxu0 %v2224
    %2962 = vmatprep.subr.bf16.mxu0 0
    %2963 = vmatpush1.bf16.msra.mxu0 %v2225
    %2964 = vmatprep.subr.bf16.mxu0 0
    %2965 = vmatpush1.bf16.msra.mxu0 %v2226
    %2966 = vmatprep.subr.bf16.mxu0 0
    %2967 = vmatpush1.bf16.msra.mxu0 %v2227
    %2968 = vmatprep.subr.bf16.mxu0 0
    %2969 = vmatpush1.bf16.msra.mxu0 %v2228
    %2970 = vmatprep.subr.bf16.mxu0 0
    %2971 = vmatpush1.bf16.msra.mxu0 %v2229
    %2972 = vmatprep.subr.bf16.mxu0 0
    %2973 = vmatpush1.bf16.msra.mxu0 0
    %2974 = vmatprep.subr.bf16.mxu0 0
    %2975 = vmatpush1.bf16.msra.mxu0 0
    %2976 = vmatprep.subr.bf16.mxu0 0
    %2977 = vmatpush1.bf16.msra.mxu0 0
    %2978 = vmatprep.subr.bf16.mxu0 0
    %2979 = vmatpush1.bf16.msra.mxu0 0
    %2980 = vmatprep.subr.bf16.mxu0 0
    %2981 = vmatpush1.bf16.msra.mxu0 0
    %2982 = vmatprep.subr.bf16.mxu0 0
    %2983 = vmatpush1.bf16.msra.mxu0 0
    %2984 = vmatprep.subr.bf16.mxu0 0
    %2985 = vmatpush1.bf16.msra.mxu0 0
    %2986 = vmatprep.subr.bf16.mxu0 0
    %2987 = vmatpush1.bf16.msra.mxu0 0
    %2988 = vmatprep.mubr.bf16.mxu0 0
    %2989 = vmatmul.mubr.bf16.gmra.mrb[0].mxu0 %v2955
    %v2990 = vpop.f32.mrb[0].mxu0
    %v2991 = vadd.f32 %v2189, %v2990
    %v2992 = vpop.f32.mrb[0].mxu0
    %v2993 = vpop.f32.mrb[0].mxu0
    %v2994 = vpop.f32.mrb[0].mxu0
    %2995 = vdwg.mxu0
    %v2996 = vmax.f32 %v2991, 0.0
    %v2997 = vpack.c.bf16 %v2996, %v2996
    %2998 = vmatprep.subr.bf16.mxu0 0
    %2999 = vmatpush1.bf16.msra.mxu0 %v2334
    %3000 = vmatprep.subr.bf16.mxu0 0
    %3001 = vmatpush1.bf16.msra.mxu0 %v2335
    %3002 = vmatprep.subr.bf16.mxu0 0
    %3003 = vmatpush1.bf16.msra.mxu0 %v2336
    %3004 = vmatprep.subr.bf16.mxu0 0
    %3005 = vmatpush1.bf16.msra.mxu0 %v2337
    %3006 = vmatprep.subr.bf16.mxu0 0
    %3007 = vmatpush1.bf16.msra.mxu0 %v2338
    %3008 = vmatprep.subr.bf16.mxu0 0
    %3009 = vmatpush1.bf16.msra.mxu0 %v2339
    %3010 = vmatprep.subr.bf16.mxu0 0
    %3011 = vmatpush1.bf16.msra.mxu0 %v2340
    %3012 = vmatprep.subr.bf16.mxu0 0
    %3013 = vmatpush1.bf16.msra.mxu0 %v2341
    %3014 = vmatprep.subr.bf16.mxu0 0
    %3015 = vmatpush1.bf16.msra.mxu0 0
    %3016 = vmatprep.subr.bf16.mxu0 0
    %3017 = vmatpush1.bf16.msra.mxu0 0
    %3018 = vmatprep.subr.bf16.mxu0 0
    %3019 = vmatpush1.bf16.msra.mxu0 0
    %3020 = vmatprep.subr.bf16.mxu0 0
    %3021 = vmatpush1.bf16.msra.mxu0 0
    %3022 = vmatprep.subr.bf16.mxu0 0
    %3023 = vmatpush1.bf16.msra.mxu0 0
    %3024 = vmatprep.subr.bf16.mxu0 0
    %3025 = vmatpush1.bf16.msra.mxu0 0
    %3026 = vmatprep.subr.bf16.mxu0 0
    %3027 = vmatpush1.bf16.msra.mxu0 0
    %3028 = vmatprep.subr.bf16.mxu0 0
    %3029 = vmatpush1.bf16.msra.mxu0 0
    %3030 = vmatprep.mubr.bf16.mxu0 0
    %3031 = vmatmul.mubr.bf16.gmra.mrb[0].mxu0 %v2997
    %v3032 = vpop.f32.mrb[0].mxu0
    %v3033 = vadd.f32 %v2301, %v3032
    %v3034 = vpop.f32.mrb[0].mxu0
    %v3035 = vpop.f32.mrb[0].mxu0
    %v3036 = vpop.f32.mrb[0].mxu0
    %3037 = vdwg.mxu0
    %v3038 = vadd.f32 %v2953, %v3033
    %v3039 = vpack.c.bf16 %v3038, %v3038
    %s3040 = scalar_lea.vmem %s8, 192
    %v3041 = vld [vmem:[%s3040] sm:$0xf]
    %v3042 = vld [vmem:[%s3040 + $0x4] sm:$0xf]
    %v3043 = vld [vmem:[%s3040 + $0x8] sm:$0xf]
    %v3044 = vld [vmem:[%s3040 + $0xc] sm:$0xf]
    %v3045 = vld [vmem:[%s3040 + $0x10] sm:$0xf]
    %v3046 = vld [vmem:[%s3040 + $0x14] sm:$0xf]
    %v3047 = vld [vmem:[%s3040 + $0x18] sm:$0xf]
    %v3048 = vld [vmem:[%s3040 + $0x1c] sm:$0xf]
    %v3049 = vld [vmem:[%s3040 + $0x20] sm:$0xf]
    %v3050 = vld [vmem:[%s3040 + $0x24] sm:$0xf]
    %v3051 = vld [vmem:[%s3040 + $0x28] sm:$0xf]
    %v3052 = vld [vmem:[%s3040 + $0x2c] sm:$0xf]
    %v3053 = vld [vmem:[%s3040 + $0x30] sm:$0xf]
    %v3054 = vld [vmem:[%s3040 + $0x34] sm:$0xf]
    %v3055 = vld [vmem:[%s3040 + $0x38] sm:$0xf]
    %v3056 = vld [vmem:[%s3040 + $0x3c] sm:$0xf]
    %v3057 = vld [vmem:[%s2409 + $0x1] sm:$0x1]
    %v3058 = vlaneseq
    %v3059 = vshrl.u32 %v3058, 7
    %v3060 = vsub.s32 0, %v3059
    %v3061 = vrot.slane %v3057, %v3060
    %v3078 = vunpack.c.l.b16 %v3041
    %v3079 = vunpack.c.l.b16 %v3042
    %v3080 = vunpack.c.l.b16 %v3043
    %v3081 = vunpack.c.l.b16 %v3044
    %v3082 = vunpack.c.l.b16 %v3045
    %v3083 = vunpack.c.l.b16 %v3046
    %v3084 = vunpack.c.l.b16 %v3047
    %v3085 = vunpack.c.l.b16 %v3048
    %v3086 = vunpack.c.l.b16 %v3049
    %v3087 = vunpack.c.l.b16 %v3050
    %v3088 = vunpack.c.l.b16 %v3051
    %v3089 = vunpack.c.l.b16 %v3052
    %v3090 = vunpack.c.l.b16 %v3053
    %v3091 = vunpack.c.l.b16 %v3054
    %v3092 = vunpack.c.l.b16 %v3055
    %v3093 = vunpack.c.l.b16 %v3056
    %v3094 = vpack.c.b16 %v3079, %v3078
    %v3095 = vpack.c.b16 %v3081, %v3080
    %v3096 = vpack.c.b16 %v3083, %v3082
    %v3097 = vpack.c.b16 %v3085, %v3084
    %v3098 = vpack.c.b16 %v3087, %v3086
    %v3099 = vpack.c.b16 %v3089, %v3088
    %v3100 = vpack.c.b16 %v3091, %v3090
    %v3101 = vpack.c.b16 %v3093, %v3092
    %3110 = vmatprep.subr.bf16.mxu0 0
    %3111 = vmatpush1.bf16.msra.mxu0 %v3094
    %3112 = vmatprep.subr.bf16.mxu0 0
    %3113 = vmatpush1.bf16.msra.mxu0 %v3095
    %3114 = vmatprep.subr.bf16.mxu0 0
    %3115 = vmatpush1.bf16.msra.mxu0 %v3096
    %3116 = vmatprep.subr.bf16.mxu0 0
    %3117 = vmatpush1.bf16.msra.mxu0 %v3097
    %3118 = vmatprep.subr.bf16.mxu0 0
    %3119 = vmatpush1.bf16.msra.mxu0 %v3098
    %3120 = vmatprep.subr.bf16.mxu0 0
    %3121 = vmatpush1.bf16.msra.mxu0 %v3099
    %3122 = vmatprep.subr.bf16.mxu0 0
    %3123 = vmatpush1.bf16.msra.mxu0 %v3100
    %3124 = vmatprep.subr.bf16.mxu0 0
    %3125 = vmatpush1.bf16.msra.mxu0 %v3101
    %3126 = vmatprep.subr.bf16.mxu0 0
    %3127 = vmatpush1.bf16.msra.mxu0 0
    %3128 = vmatprep.subr.bf16.mxu0 0
    %3129 = vmatpush1.bf16.msra.mxu0 0
    %3130 = vmatprep.subr.bf16.mxu0 0
    %3131 = vmatpush1.bf16.msra.mxu0 0
    %3132 = vmatprep.subr.bf16.mxu0 0
    %3133 = vmatpush1.bf16.msra.mxu0 0
    %3134 = vmatprep.subr.bf16.mxu0 0
    %3135 = vmatpush1.bf16.msra.mxu0 0
    %3136 = vmatprep.subr.bf16.mxu0 0
    %3137 = vmatpush1.bf16.msra.mxu0 0
    %3138 = vmatprep.subr.bf16.mxu0 0
    %3139 = vmatpush1.bf16.msra.mxu0 0
    %3140 = vmatprep.subr.bf16.mxu0 0
    %3141 = vmatpush1.bf16.msra.mxu0 0
    %3142 = vmatprep.mubr.bf16.mxu0 0
    %3143 = vmatmul.mubr.bf16.gmra.mrb[0].mxu0 %v3039
    %v3144 = vpop.f32.mrb[0].mxu0
    %v3145 = vadd.f32 %v3061, %v3144
    %v3146 = vpop.f32.mrb[0].mxu0
    %v3147 = vpop.f32.mrb[0].mxu0
    %v3148 = vpop.f32.mrb[0].mxu0
    %3149 = vdwg.mxu0
    %v3150 = vmul.f32 %v3145, 0.088388346
    %v3151 = vsel %vm868, %v3150, -inf
    %3152 = vmax.xlane.f32.xlu0 %v3151
    %v3153 = vpop.xlane.xlu0 %3152
    %v3154 = vsub.f32 %v3150, %v3153
    %v3155 = vmul.f32 %v3154, 1.442695
    %v3156 = vpow.pop %v3155
    %v3157 = vsel %vm868, %v3156, 0.0
    %3158 = vadd.xlane.f32.xlu0 %v3157
    %v3159 = vpop.xlane.xlu0 %3158
    %v3160 = vrcp.pop %v3159
    %v3161 = vmul.f32 %v3156, %v3160
    %v3162 = vmul.f32 %v3161, 0.992
    %v3163 = vadd.f32 %v3162, 0.001
    %v3164 = vsel %vm882, %v3150, -inf
    %3165 = vmax.xlane.f32.xlu0 %v3164
    %v3166 = vpop.xlane.xlu0 %3165
    %v3167 = vsub.f32 %v3150, %v3166
    %v3168 = vmul.f32 %v3167, 1.442695
    %v3169 = vpow.pop %v3168
    %3171 = vrot.lane.b32.xlu0 %v3169, 120
    %v3172 = vpop.permute.xlu0 %3171
    %v3174 = vsel %vm868, %v3172, 0.0
    %3175 = vadd.xlane.f32.xlu0 %v3174
    %v3176 = vpop.xlane.xlu0 %3175
    %v3177 = vrcp.pop %v3176
    %v3178 = vmul.f32 %v3169, %v3177
    %v3179 = vmul.f32 %v3178, 0.992
    %v3180 = vadd.f32 %v3179, 0.001
    %v3182 = vsel %vm868, %v3163, 0
    %3184 = vmatprep.subr.mxu0 0.0
    %3185 = vmatpush1.msra.mxu0 %v80
    %3186 = vmatprep.subr.mxu0 0.0
    %3187 = vmatpush1.msra.mxu0 0.0
    %3188 = vmatprep.subr.mxu0 0.0
    %3189 = vmatpush1.msra.mxu0 0.0
    %3190 = vmatprep.subr.mxu0 0.0
    %3191 = vmatpush1.msra.mxu0 0.0
    %3192 = vmatprep.subr.mxu0 0.0
    %3193 = vmatpush1.msra.mxu0 0.0
    %3194 = vmatprep.subr.mxu0 0.0
    %3195 = vmatpush1.msra.mxu0 0.0
    %3196 = vmatprep.subr.mxu0 0.0
    %3197 = vmatpush1.msra.mxu0 0.0
    %3198 = vmatprep.subr.mxu0 0.0
    %3199 = vmatpush1.msra.mxu0 0.0
    %3200 = vmatprep.subr.mxu0 0.0
    %3201 = vmatpush1.msra.mxu0 0.0
    %3202 = vmatprep.subr.mxu0 0.0
    %3203 = vmatpush1.msra.mxu0 0.0
    %3204 = vmatprep.subr.mxu0 0.0
    %3205 = vmatpush1.msra.mxu0 0.0
    %3206 = vmatprep.subr.mxu0 0.0
    %3207 = vmatpush1.msra.mxu0 0.0
    %3208 = vmatprep.subr.mxu0 0.0
    %3209 = vmatpush1.msra.mxu0 0.0
    %3210 = vmatprep.subr.mxu0 0.0
    %3211 = vmatpush1.msra.mxu0 0.0
    %3212 = vmatprep.subr.mxu0 0.0
    %3213 = vmatpush1.msra.mxu0 0.0
    %3214 = vmatprep.subr.mxu0 0.0
    %3215 = vmatpush1.msra.mxu0 0.0
    %3216 = vmatprep.subr.mxu0 0.0
    %3217 = vmatpush1.msra.mxu0 0.0
    %3218 = vmatprep.subr.mxu0 0.0
    %3219 = vmatpush1.msra.mxu0 0.0
    %3220 = vmatprep.subr.mxu0 0.0
    %3221 = vmatpush1.msra.mxu0 0.0
    %3222 = vmatprep.subr.mxu0 0.0
    %3223 = vmatpush1.msra.mxu0 0.0
    %3224 = vmatprep.subr.mxu0 0.0
    %3225 = vmatpush1.msra.mxu0 0.0
    %3226 = vmatprep.subr.mxu0 0.0
    %3227 = vmatpush1.msra.mxu0 0.0
    %3228 = vmatprep.subr.mxu0 0.0
    %3229 = vmatpush1.msra.mxu0 0.0
    %3230 = vmatprep.subr.mxu0 0.0
    %3231 = vmatpush1.msra.mxu0 0.0
    %3232 = vmatprep.subr.mxu0 0.0
    %3233 = vmatpush1.msra.mxu0 0.0
    %3234 = vmatprep.subr.mxu0 0.0
    %3235 = vmatpush1.msra.mxu0 0.0
    %3236 = vmatprep.subr.mxu0 0.0
    %3237 = vmatpush1.msra.mxu0 0.0
    %3238 = vmatprep.subr.mxu0 0.0
    %3239 = vmatpush1.msra.mxu0 0.0
    %3240 = vmatprep.subr.mxu0 0.0
    %3241 = vmatpush1.msra.mxu0 0.0
    %3242 = vmatprep.subr.mxu0 0.0
    %3243 = vmatpush1.msra.mxu0 0.0
    %3244 = vmatprep.subr.mxu0 0.0
    %3245 = vmatpush1.msra.mxu0 0.0
    %3246 = vmatprep.subr.mxu0 0.0
    %3247 = vmatpush1.msra.mxu0 0.0
    %3248 = vmatprep.mubr.f32.mxu0 0.0
    %3249 = vmatmul.mubr.f32.gmra.mrb[0].mxu0 %v3182
    %v3250 = vpop.f32.mrb[0].mxu0
    %v3251 = vadd.f32 0.0, %v3250
    %v3252 = vpop.f32.mrb[0].mxu0
    %3253 = vdwg.mxu0
    %v3254 = vmul.f32 %v3251, 6.0
    %v3255 = vadd.f32 %v3254, -3.0
    %3257 = vrot.lane.b32.xlu0 %v3180, 120
    %v3258 = vpop.permute.xlu0 %3257
    %v3259 = vsel %vm868, %v3258, 0
    %3261 = vmatprep.subr.mxu0 0.0
    %3262 = vmatpush1.msra.mxu0 %v80
    %3263 = vmatprep.subr.mxu0 0.0
    %3264 = vmatpush1.msra.mxu0 0.0
    %3265 = vmatprep.subr.mxu0 0.0
    %3266 = vmatpush1.msra.mxu0 0.0
    %3267 = vmatprep.subr.mxu0 0.0
    %3268 = vmatpush1.msra.mxu0 0.0
    %3269 = vmatprep.subr.mxu0 0.0
    %3270 = vmatpush1.msra.mxu0 0.0
    %3271 = vmatprep.subr.mxu0 0.0
    %3272 = vmatpush1.msra.mxu0 0.0
    %3273 = vmatprep.subr.mxu0 0.0
    %3274 = vmatpush1.msra.mxu0 0.0
    %3275 = vmatprep.subr.mxu0 0.0
    %3276 = vmatpush1.msra.mxu0 0.0
    %3277 = vmatprep.subr.mxu0 0.0
    %3278 = vmatpush1.msra.mxu0 0.0
    %3279 = vmatprep.subr.mxu0 0.0
    %3280 = vmatpush1.msra.mxu0 0.0
    %3281 = vmatprep.subr.mxu0 0.0
    %3282 = vmatpush1.msra.mxu0 0.0
    %3283 = vmatprep.subr.mxu0 0.0
    %3284 = vmatpush1.msra.mxu0 0.0
    %3285 = vmatprep.subr.mxu0 0.0
    %3286 = vmatpush1.msra.mxu0 0.0
    %3287 = vmatprep.subr.mxu0 0.0
    %3288 = vmatpush1.msra.mxu0 0.0
    %3289 = vmatprep.subr.mxu0 0.0
    %3290 = vmatpush1.msra.mxu0 0.0
    %3291 = vmatprep.subr.mxu0 0.0
    %3292 = vmatpush1.msra.mxu0 0.0
    %3293 = vmatprep.subr.mxu0 0.0
    %3294 = vmatpush1.msra.mxu0 0.0
    %3295 = vmatprep.subr.mxu0 0.0
    %3296 = vmatpush1.msra.mxu0 0.0
    %3297 = vmatprep.subr.mxu0 0.0
    %3298 = vmatpush1.msra.mxu0 0.0
    %3299 = vmatprep.subr.mxu0 0.0
    %3300 = vmatpush1.msra.mxu0 0.0
    %3301 = vmatprep.subr.mxu0 0.0
    %3302 = vmatpush1.msra.mxu0 0.0
    %3303 = vmatprep.subr.mxu0 0.0
    %3304 = vmatpush1.msra.mxu0 0.0
    %3305 = vmatprep.subr.mxu0 0.0
    %3306 = vmatpush1.msra.mxu0 0.0
    %3307 = vmatprep.subr.mxu0 0.0
    %3308 = vmatpush1.msra.mxu0 0.0
    %3309 = vmatprep.subr.mxu0 0.0
    %3310 = vmatpush1.msra.mxu0 0.0
    %3311 = vmatprep.subr.mxu0 0.0
    %3312 = vmatpush1.msra.mxu0 0.0
    %3313 = vmatprep.subr.mxu0 0.0
    %3314 = vmatpush1.msra.mxu0 0.0
    %3315 = vmatprep.subr.mxu0 0.0
    %3316 = vmatpush1.msra.mxu0 0.0
    %3317 = vmatprep.subr.mxu0 0.0
    %3318 = vmatpush1.msra.mxu0 0.0
    %3319 = vmatprep.subr.mxu0 0.0
    %3320 = vmatpush1.msra.mxu0 0.0
    %3321 = vmatprep.subr.mxu0 0.0
    %3322 = vmatpush1.msra.mxu0 0.0
    %3323 = vmatprep.subr.mxu0 0.0
    %3324 = vmatpush1.msra.mxu0 0.0
    %3325 = vmatprep.mubr.f32.mxu0 0.0
    %3326 = vmatmul.mubr.f32.gmra.mrb[0].mxu0 %v3259
    %v3327 = vpop.f32.mrb[0].mxu0
    %v3328 = vadd.f32 0.0, %v3327
    %v3329 = vpop.f32.mrb[0].mxu0
    %3330 = vdwg.mxu0
    %v3331 = vmul.f32 %v3328, 6.0
    %v3332 = vadd.f32 %v3331, -3.0
    %v3333 = vsel %vm81, 3.0, %v3255
    %v3334 = vsel %vm81, 3.0, %v3332
    %v3335 = vadd.f32 %v3334, 1e-06
    %v3336 = vsel %vm81, %v3335, %v3332
    %3337 = vset.pattern.permute.xlu0 1
    %3338 = vperm.xlu0 %3337, %v2508
    %v3339 = vpop.permute.xlu0 %3338
    %vm3341 = vcmp.ge.f32.partialorder %v3339, %v3336
    %v3342 = vsel %vm3341, 1, 0
    %v3343 = vsel %vm868, %v3342, 0
    %v3344 = vand.u32 %v3343, 65535
    %v3345 = vshrl.u32 %v3343, 16
    %v3346 = vcvt.s32.f32 %v3344
    %v3347 = vcvt.s32.f32 %v3345
    %3348 = vadd.xlane.f32.xlu0 %v3346
    %v3349 = vpop.xlane.xlu0 %3348
    %3350 = vadd.xlane.f32.xlu0 %v3347
    %v3351 = vpop.xlane.xlu0 %3350
    %v3352 = vcvt.f32.s32 %v3349
    %v3353 = vcvt.f32.s32 %v3351
    %v3354 = vshll.u32 %v3353, 16
    %v3355 = vadd.s32 %v3354, %v3352
    %vm3356 = vcmp.eq.s32.totalorder %v3355, %v77
    %v3357 = vsub.s32 %v3355, 1
    %vm3358 = vcmp.eq.s32.totalorder %v3357, %v77
    %vm3359 = vcmp.eq.s32.totalorder %v3355, 0
    %v3360 = vsel %vm3356, %v3333, 0.0
    %v3361 = vsel %vm868, %v3360, 0.0
    %3362 = vadd.xlane.f32.xlu0 %v3361
    %v3363 = vpop.xlane.xlu0 %3362
    %v3364 = vsel %vm3358, %v3333, 0.0
    %v3365 = vsel %vm868, %v3364, 0.0
    %3366 = vadd.xlane.f32.xlu0 %v3365
    %v3367 = vpop.xlane.xlu0 %3366
    %v3368 = vsel %vm3359, -3.0, %v3367
    %v3369 = vsel %vm3356, %v3334, 0.0
    %v3370 = vsel %vm868, %v3369, 0.0
    %3371 = vadd.xlane.f32.xlu0 %v3370
    %v3372 = vpop.xlane.xlu0 %3371
    %v3373 = vsel %vm3358, %v3334, 0.0
    %v3374 = vsel %vm868, %v3373, 0.0
    %3375 = vadd.xlane.f32.xlu0 %v3374
    %v3376 = vpop.xlane.xlu0 %3375
    %v3377 = vsel %vm3359, -3.0, %v3376
    %v3378 = vsub.f32 %v3363, %v3368
    %v3379 = vsub.f32 %v3372, %v3377
    %v3380 = vrcp.pop %v3378
    %v3381 = vmul.f32 %v3379, %v3380
    %v3382 = vmax.f32 %v3145, 0.0
    %v3383 = vand.u32 2147483647, %v3145
    %v3384 = vsub.f32 0.0, %v3383
    %v3385 = vmul.f32 %v3384, 1.442695
    %v3386 = vpow.pop %v3385
    %v3387 = vadd.f32 %v3386, 1.0
    %v3388 = vlog2.pop %v3387
    %v3389 = vmul.f32 %v3388, 0.6931472
    %v3390 = vadd.f32 %v3382, %v3389
    %v3391 = vadd.f32 %v3390, 0.001
    %3393 = vrot.lane.b32.xlu0 %v3391, 112
    %v3394 = vpop.permute.xlu0 %3393
    %v3396 = vsel %vm3358, %v3394, 0.0
    %v3397 = vsel %vm1117, %v3396, 0.0
    %3398 = vadd.xlane.f32.xlu0 %v3397
    %v3399 = vpop.xlane.xlu0 %3398
    %v3400 = vsel %vm3359, 1.0, %v3399
    %vm3401 = vcmp.eq.s32.totalorder %v3355, 7
    %v3402 = vsel %vm3356, %v3394, 0.0
    %v3403 = vsel %vm1117, %v3402, 0.0
    %3404 = vadd.xlane.f32.xlu0 %v3403
    %v3405 = vpop.xlane.xlu0 %3404
    %v3406 = vsel %vm3401, 1.0, %v3405
    %v3407 = vsub.f32 %v2508, %v3377
    %v3408 = vadd.f32 %v3400, %v3406
    %v3409 = vmul.f32 %v3381, 2.0
    %v3410 = vsub.f32 %v3408, %v3409
    %v3411 = vmul.f32 %v3407, %v3410
    %v3412 = vsub.f32 %v3381, %v3400
    %v3413 = vmul.f32 %v3379, %v3412
    %v3414 = vadd.f32 %v3411, %v3413
    %v3415 = vmul.f32 %v3379, %v3400
    %v3416 = vsub.f32 %v3415, %v3411
    %v3417 = vsub.f32 0.0, %v3381
    %v3418 = vmul.f32 %v3417, %v3407
    %v3419 = vmul.f32 %v3416, %v3416
    %v3420 = vmul.f32 %v3414, 4.0
    %v3421 = vmul.f32 %v3420, %v3418
    %v3422 = vsub.f32 %v3419, %v3421
    %v3423 = vmax.f32 %v3422, 0.0
    %v3424 = vmul.f32 %v3418, 2.0
    %v3425 = vsub.f32 0.0, %v3416
    %v3426 = vrsqrt.pop %v3423
    %v3427 = vmul.f32 %v3423, %v3426
    %vm3428 = vcmp.eq.f32.partialorder %v3423, inf
    %v3429 = vsel %vm3428, %v3423, %v3427
    %vm3430 = vcmp.eq.f32.partialorder %v3423, 0.0
    %v3431 = vand.u32 %v3423, 2147483648
    %v3432 = vsel %vm3430, %v3431, %v3429
    %v3433 = vsub.f32 %v3425, %v3432
    %v3434 = vrcp.pop %v3433
    %v3435 = vmul.f32 %v3424, %v3434
    %v3436 = vmul.f32 %v3435, %v3378
    %v3437 = vadd.f32 %v3436, %v3368
    %v3438 = vsub.f32 1.0, %v3435
    %v3439 = vmul.f32 %v3435, %v3438
    %v3440 = vmul.f32 %v3410, %v3439
    %v3441 = vadd.f32 %v3381, %v3440
    %v3442 = vmul.f32 %v3381, %v3381
    %v3443 = vmul.f32 %v3406, %v3435
    %v3444 = vmul.f32 %v3443, %v3435
    %v3445 = vmul.f32 %v3409, %v3439
    %v3446 = vadd.f32 %v3444, %v3445
    %v3447 = vmul.f32 %v3400, %v3438
    %v3448 = vmul.f32 %v3447, %v3438
    %v3449 = vadd.f32 %v3446, %v3448
    %v3450 = vmul.f32 %v3442, %v3449
    %v3451 = vlog2.pop %v3441
    %v3452 = vmul.f32 %v3451, 0.6931472
    %v3453 = vmul.f32 %v3452, 2.0
    %v3454 = vlog2.pop %v3450
    %v3455 = vmul.f32 %v3454, 0.6931472
    %v3456 = vsub.f32 %v3453, %v3455
    %v3457 = vsel %vm2506, %v3437, %v1882
    %v3458 = vsel %vm2506, %v3456, 0.0
    %3460 = vset.pattern.permute.xlu0 1
    %3461 = vperm.xlu0 %3460, %v3457
    %v3462 = vpop.permute.xlu0 %3461
    %v3464 = vsel %vm83, %v3462, %v2823
    %3466 = vrot.lane.b32.xlu0 %v3458, 127
    %v3467 = vpop.permute.xlu0 %3466
    %v3469 = vadd.f32 %v2824, %v3467
    %v3470 = vsub.f32 %v1889, %v3469
    %v3471 = vld [vmem:[%s11 + $0x1] sm:$0x1]
    %v3472 = vlaneseq
    %v3473 = vshrl.u32 %v3472, 7
    %v3474 = vsub.s32 0, %v3473
    %v3475 = vrot.slane %v3471, %v3474
    %v3476 = vsub.f32 %v3464, %v3475
    %v3477 = vpack.c.bf16 %v3476, %v3476
    %s3478 = scalar_lea.vmem %s10, 1
    %v3479 = vld [vmem:[%s3478] sm:$0x1]
    %v3481 = vsel %vm245, %v3477, 0
    %v3484 = vsel %vm259, %v3479, 0
    %3486 = vmatprep.subr.bf16.mxu0 0
    %3487 = vmatpush1.bf16.msra.mxu0 %v3484
    %3488 = vmatprep.subr.bf16.mxu0 0
    %3489 = vmatpush1.bf16.msra.mxu0 0
    %3490 = vmatprep.subr.bf16.mxu0 0
    %3491 = vmatpush1.bf16.msra.mxu0 0
    %3492 = vmatprep.subr.bf16.mxu0 0
    %3493 = vmatpush1.bf16.msra.mxu0 0
    %3494 = vmatprep.subr.bf16.mxu0 0
    %3495 = vmatpush1.bf16.msra.mxu0 0
    %3496 = vmatprep.subr.bf16.mxu0 0
    %3497 = vmatpush1.bf16.msra.mxu0 0
    %3498 = vmatprep.subr.bf16.mxu0 0
    %3499 = vmatpush1.bf16.msra.mxu0 0
    %3500 = vmatprep.subr.bf16.mxu0 0
    %3501 = vmatpush1.bf16.msra.mxu0 0
    %3502 = vmatprep.subr.bf16.mxu0 0
    %3503 = vmatpush1.bf16.msra.mxu0 0
    %3504 = vmatprep.subr.bf16.mxu0 0
    %3505 = vmatpush1.bf16.msra.mxu0 0
    %3506 = vmatprep.subr.bf16.mxu0 0
    %3507 = vmatpush1.bf16.msra.mxu0 0
    %3508 = vmatprep.subr.bf16.mxu0 0
    %3509 = vmatpush1.bf16.msra.mxu0 0
    %3510 = vmatprep.subr.bf16.mxu0 0
    %3511 = vmatpush1.bf16.msra.mxu0 0
    %3512 = vmatprep.subr.bf16.mxu0 0
    %3513 = vmatpush1.bf16.msra.mxu0 0
    %3514 = vmatprep.subr.bf16.mxu0 0
    %3515 = vmatpush1.bf16.msra.mxu0 0
    %3516 = vmatprep.subr.bf16.mxu0 0
    %3517 = vmatpush1.bf16.msra.mxu0 0
    %3518 = vmatprep.mubr.bf16.mxu0 0
    %3519 = vmatmul.mubr.bf16.gmra.mrb[0].mxu0 %v3481
    %v3520 = vpop.f32.mrb[0].mxu0
    %v3521 = vadd.f32 0.0, %v3520
    %v3522 = vpop.f32.mrb[0].mxu0
    %v3523 = vpop.f32.mrb[0].mxu0
    %v3524 = vpop.f32.mrb[0].mxu0
    %3525 = vdwg.mxu0
    %s3526 = sld [smem:[#allocation5 + $0x1]]
    %v3527 = vstv %s3526
    %v3528 = vsub.f32 %v3470, %v3527
    %3529 = vst.msk [vmem:[%s13] sm:$0xff] %vm245, %v3521
    %vm3530 = vcmask 7168
    %3531 = vst.msk [vmem:[%s14] sm:$0xff] %vm3530, %v3528
    // Predicated region
    $region62: #{tpu_custom_call.1} parent=1 // pred_check
      _
    $region63: #{tpu_custom_call.1} parent=1 // pred_check_branch
      %3533 = sbr.rel (0) target = $region65
    $region64: #{tpu_custom_call.1} parent=1 // pred_region
      _
    $region65: #{tpu_custom_call.1} parent=1 // pred_fallthru
      _
    // Predicated region
    $region66: #{tpu_custom_call.1} parent=1 // pred_check
      _
    $region67: #{tpu_custom_call.1} parent=1 // pred_check_branch
      %3535 = sbr.rel (0) target = $region69
    $region68: #{tpu_custom_call.1} parent=1 // pred_region
      _
    $region69: #{tpu_custom_call.1} parent=1 // pred_fallthru
      _
    // Predicated region
    $region70: #{tpu_custom_call.1} parent=1 // pred_check
      _
    $region71: #{tpu_custom_call.1} parent=1 // pred_check_branch
      %3537 = sbr.rel (0) target = $region73
    $region72: #{tpu_custom_call.1} parent=1 // pred_region
      _
    $region73: #{tpu_custom_call.1} parent=1 // pred_fallthru
      _
    // Predicated region
    $region74: #{tpu_custom_call.1} parent=1 // pred_check
      _
    $region75: #{tpu_custom_call.1} parent=1 // pred_check_branch
      %3539 = sbr.rel (0) target = $region77
    $region76: #{tpu_custom_call.1} parent=1 // pred_region
      _
    $region77: #{tpu_custom_call.1} parent=1 // pred_fallthru
      _
    %3540 = vsyncpa [#allocation3], 1
    %3541 = vsyncpa [#allocation4], 1

</llo_original>
